<compile_context>
chip_gen: v6e
topology: v6e:2x2x1
jax: 0.10.0
libtpu: 0.0.40
codegen_flags: <defaults>
</compile_context>

<pallas_src>
import functools

import jax
import jax.numpy as jnp
from jax.experimental import pallas as pl
from jax.experimental.pallas import tpu as pltpu


# ----------------------------------------------------------------------------
# Fused kernel: operates on one image per grid step, everything in VMEM.
# Activations are (rows, W*C) slabs (lane-dense).
# ----------------------------------------------------------------------------
def _structure_enhance_kernel(
    low_ref, high_ref,                 # per-image activations
    sH_ref, sh_ref, sHc_ref,           # row-shift matrices (zero-padded H shifts)
    hp_low_ref, hp_high_ref,           # high-pass banded weights
    rh_ref, rwc_ref,                   # separable bilinear matrices
    conv0_ref, resfus_ref, bn_ref,     # conv banded weights + BN scale/shift rows
    out_ref):

    def rows(x, s_ref):
        # x: (n, width) -> (n, ntaps*width); tap j holds x[row + j - ph]
        # (zero outside), realised as tiny (n,n) shift matmuls -> no unaligned
        # sublane slicing.  Lane-concat builds the im2row slab for ONE matmul.
        ntaps = s_ref.shape[0]
        return jnp.concatenate(
            [jnp.dot(s_ref[j], x, preferred_element_type=jnp.float32)
             for j in range(ntaps)], axis=1)

    def bn(x, idx):
        # folded eval-mode BN: per-(x,c) scale/shift rows, broadcast over rows
        return (x * bn_ref[2 * idx:2 * idx + 1, :]
                + bn_ref[2 * idx + 1:2 * idx + 2, :])

    low = low_ref[0]                   # (H, W*Cin)   lane-dense slab
    high = high_ref[0]                 # (h, w*Cin)

    # --- depthwise high-pass (x - avg_blur) as one banded matmul each -------
    low_hp = jnp.dot(rows(low, sH_ref), hp_low_ref[...],
                     preferred_element_type=jnp.float32)       # (H, W*Cin)
    high_hp = jnp.dot(rows(high, sh_ref), hp_high_ref[...],
                      preferred_element_type=jnp.float32)      # (h, w*Cin)

    # --- separable bilinear upsample (align_corners=True) -------------------
    rh = rh_ref[...]                   # (H, h)
    rwc = rwc_ref[...]                 # (w*Cin, W*Cin)
    up_orig = jnp.dot(jnp.dot(rh, high, preferred_element_type=jnp.float32),
                      rwc, preferred_element_type=jnp.float32)  # (H, W*Cin)
    up_hp = jnp.dot(jnp.dot(rh, high_hp, preferred_element_type=jnp.float32),
                    rwc, preferred_element_type=jnp.float32)    # (H, W*Cin)

    # --- conv_bn_relu over channel-concat([low_hp, up_hp]): single matmul ---
    xr0 = jnp.concatenate([rows(low_hp, sHc_ref), rows(up_hp, sHc_ref)], axis=1)
    mix = jnp.dot(xr0, conv0_ref[...], preferred_element_type=jnp.float32)
    mix = jnp.maximum(bn(mix, 0), 0.0)                          # (H, W*Cout)

    # --- ResBlock: relu(bn2(conv2(relu(bn1(conv1(x))))) + x) ----------------
    t = jnp.dot(rows(mix, sHc_ref), resfus_ref[0],
                preferred_element_type=jnp.float32)
    t = jnp.maximum(bn(t, 1), 0.0)
    t = jnp.dot(rows(t, sHc_ref), resfus_ref[1],
                preferred_element_type=jnp.float32)
    mix = jnp.maximum(bn(t, 2) + mix, 0.0)

    # --- + up_original_high_feat, then bn_relu ------------------------------
    mix = jnp.maximum(bn(mix + up_orig, 3), 0.0)

    # --- fusion conv + bn + relu --------------------------------------------
    t = jnp.dot(rows(mix, sHc_ref), resfus_ref[2],
                preferred_element_type=jnp.float32)
    out_ref[...] = jnp.maximum(bn(t, 4), 0.0)[None]


# ----------------------------------------------------------------------------
# Constant-operand construction (runs once in the wrapper, outside the kernel).
# ----------------------------------------------------------------------------
def _interp_matrix(out_size, in_size):
    """Row-interpolation matrix for bilinear resize with align_corners=True."""
    if out_size == 1:
        src = jnp.zeros((out_size,), jnp.float32)
    else:
        src = jnp.arange(out_size, dtype=jnp.float32) * (in_size - 1) / (out_size - 1)
    i0 = jnp.clip(jnp.floor(src).astype(jnp.int32), 0, in_size - 1)
    i1 = jnp.clip(i0 + 1, 0, in_size - 1)
    frac = src - i0.astype(jnp.float32)
    m = jnp.zeros((out_size, in_size), jnp.float32)
    r = jnp.arange(out_size)
    m = m.at[r, i0].add(1.0 - frac)
    m = m.at[r, i1].add(frac)
    return m


def _make_band(wt, width):
    """Dense conv weight (Cout, Cin, kh, kw) -> banded matmul weight of shape
    (kh * width * Cin, width * Cout) for a 'same' zero-padded conv applied to a
    (rows, width*Cin) slab (zero-padding along W is encoded in the band)."""
    cout, cin, kh, kw = wt.shape
    pw = (kw - 1) // 2
    blocks = []
    for jy in range(kh):
        b = jnp.zeros((width, cin, width, cout), jnp.float32)
        for jx in range(kw):
            s = jnp.eye(width, k=-(jx - pw), dtype=jnp.float32)   # [x_in, x_out]
            wk = jnp.transpose(wt[:, :, jy, jx])                  # (Cin, Cout)
            b = b + s[:, None, :, None] * wk[None, :, None, :]
        blocks.append(b.reshape(width * cin, width * cout))
    return jnp.concatenate(blocks, axis=0)


def _shift_matrices(n, ntaps):
    """Stack of (n,n) matrices; (S[j] @ x)[row] = x[row + j - ph], 0 outside."""
    ph = (ntaps - 1) // 2
    return jnp.stack([jnp.eye(n, k=(j - ph), dtype=jnp.float32)
                      for j in range(ntaps)], axis=0)


def _highpass_dense_weight(hp_taps):
    """Depthwise blur taps (C, kh, kw) -> dense (C, C, kh, kw) weight of the
    high-pass filter x - blur (identity at the centre tap minus the blur)."""
    c, kh, kw = hp_taps.shape
    eye = jnp.eye(c, dtype=jnp.float32)
    center = jnp.zeros((kh, kw), jnp.float32).at[(kh - 1) // 2, (kw - 1) // 2].set(1.0)
    return eye[:, :, None, None] * (center[None, None] - hp_taps[None, :, :, :])


# ----------------------------------------------------------------------------
# Parameter initialization (deterministic, synthetic).
# ----------------------------------------------------------------------------
def _bn_params(key, c, eps=1e-5):
    k1, k2, k3, k4 = jax.random.split(key, 4)
    gamma = 1.0 + 0.1 * jax.random.normal(k1, (c,), jnp.float32)
    beta = 0.1 * jax.random.normal(k2, (c,), jnp.float32)
    mean = 0.1 * jax.random.normal(k3, (c,), jnp.float32)
    var = 1.0 + 0.1 * jnp.abs(jax.random.normal(k4, (c,), jnp.float32))
    scale = gamma / jnp.sqrt(var + eps)
    shift = beta - mean * scale
    return scale, shift


def _conv_weight(key, cout, cin):
    fan_in = cin * 9
    return jax.random.normal(key, (cout, cin, 3, 3), jnp.float32) / jnp.sqrt(fan_in)


def init_params(key, in_channels, out_channels, kernel_size=(3, 3)):
    kh, kw = kernel_size
    keys = jax.random.split(key, 8)
    p = {}
    # HighPassFilter: ones / sum -> uniform taps, one (kh,kw) kernel per channel
    p["hp_weight"] = jnp.full((in_channels, kh, kw), 1.0 / (kh * kw), jnp.float32)
    # conv_bn_relu
    p["conv0_w"] = _conv_weight(keys[0], out_channels, 2 * in_channels)
    p["bn0_scale"], p["bn0_shift"] = _bn_params(keys[1], out_channels)
    # ResBlock
    p["res_conv1_w"] = _conv_weight(keys[2], out_channels, out_channels)
    p["res_bn1_scale"], p["res_bn1_shift"] = _bn_params(keys[3], out_channels)
    p["res_conv2_w"] = _conv_weight(keys[4], out_channels, out_channels)
    p["res_bn2_scale"], p["res_bn2_shift"] = _bn_params(keys[5], out_channels)
    # bn_relu
    p["bn3_scale"], p["bn3_shift"] = _bn_params(keys[6], out_channels)
    # fusion
    p["fusion_w"] = _conv_weight(keys[7], out_channels, out_channels)
    kf = jax.random.fold_in(key, 123)
    p["fusion_bn_scale"], p["fusion_bn_shift"] = _bn_params(kf, out_channels)
    return p


# ----------------------------------------------------------------------------
# StructureEnhance forward (NCHW in / NCHW out, like the PyTorch module).
# ----------------------------------------------------------------------------
def structure_enhance(params, low_feat_nchw, high_feat_nchw, kernel_size=(3, 3)):
    B, Cin, H, W = low_feat_nchw.shape
    Bh, Cin2, h, w = high_feat_nchw.shape
    assert Bh == B and Cin2 == Cin
    kh, kw = kernel_size
    assert kh % 2 == 1 and kw % 2 == 1, "odd high-pass kernel sizes only"
    Cout = params["conv0_w"].shape[0]
    # residual add with up_original_high_feat requires Cin == Cout (as in the
    # PyTorch module's usage).
    assert Cin == Cout

    # NCHW -> lane-dense (B, rows=H, lanes=W*C) slabs
    low = jnp.transpose(low_feat_nchw, (0, 2, 3, 1)).reshape(B, H, W * Cin)
    high = jnp.transpose(high_feat_nchw, (0, 2, 3, 1)).reshape(B, h, w * Cin)

    # ---- constant operands (small; fetched into VMEM once) -----------------
    w_hp = _highpass_dense_weight(params["hp_weight"])          # (Cin,Cin,kh,kw)
    hp_band_low = _make_band(w_hp, W)                           # (kh*W*Cin, W*Cin)
    hp_band_high = _make_band(w_hp, w)                          # (kh*w*Cin, w*Cin)

    conv0_w = params["conv0_w"]                                 # (Cout, 2*Cin, 3, 3)
    conv0_band = jnp.concatenate(
        [_make_band(conv0_w[:, :Cin], W), _make_band(conv0_w[:, Cin:], W)], axis=0)
    resfus_band = jnp.stack(
        [_make_band(params["res_conv1_w"], W),
         _make_band(params["res_conv2_w"], W),
         _make_band(params["fusion_w"], W)], axis=0)            # (3, 3*W*Cout, W*Cout)

    rh = _interp_matrix(H, h)                                   # (H, h)
    rw = _interp_matrix(W, w)                                   # (W, w)
    rwc = (jnp.transpose(rw)[:, None, :, None] *
           jnp.eye(Cin, dtype=jnp.float32)[None, :, None, :]
           ).reshape(w * Cin, W * Cin)                          # (w*Cin, W*Cin)

    sH = _shift_matrices(H, kh)      # high-pass H shifts (kh, H, H)
    sh = _shift_matrices(h, kh)      # high-pass h shifts (kh, h, h)
    sHc = _shift_matrices(H, 3)      # 3x3-conv H shifts  (3, H, H)

    def tile_row(v):
        # channel scale/shift broadcast over the fused (x, c) lane axis
        return jnp.tile(v.astype(jnp.float32), W).reshape(1, W * Cout)

    bn_rows = jnp.concatenate([
        tile_row(params["bn0_scale"]), tile_row(params["bn0_shift"]),
        tile_row(params["res_bn1_scale"]), tile_row(params["res_bn1_shift"]),
        tile_row(params["res_bn2_scale"]), tile_row(params["res_bn2_shift"]),
        tile_row(params["bn3_scale"]), tile_row(params["bn3_shift"]),
        tile_row(params["fusion_bn_scale"]), tile_row(params["fusion_bn_shift"]),
    ], axis=0)                                                  # (10, W*Cout)

    const2 = lambda b: (0, 0)
    const3 = lambda b: (0, 0, 0)

    out = pl.pallas_call(
        _structure_enhance_kernel,
        out_shape=jax.ShapeDtypeStruct((B, H, W * Cout), jnp.float32),
        grid=(B,),
        in_specs=[
            pl.BlockSpec((1, H, W * Cin), lambda b: (b, 0, 0)),
            pl.BlockSpec((1, h, w * Cin), lambda b: (b, 0, 0)),
            pl.BlockSpec(sH.shape, const3),
            pl.BlockSpec(sh.shape, const3),
            pl.BlockSpec(sHc.shape, const3),
            pl.BlockSpec(hp_band_low.shape, const2),
            pl.BlockSpec(hp_band_high.shape, const2),
            pl.BlockSpec(rh.shape, const2),
            pl.BlockSpec(rwc.shape, const2),
            pl.BlockSpec(conv0_band.shape, const2),
            pl.BlockSpec(resfus_band.shape, const3),
            pl.BlockSpec(bn_rows.shape, const2),
        ],
        out_specs=pl.BlockSpec((1, H, W * Cout), lambda b: (b, 0, 0)),
        compiler_params=pltpu.CompilerParams(
            dimension_semantics=("parallel",)),
    )(low, high, sH, sh, sHc, hp_band_low, hp_band_high, rh, rwc,
      conv0_band, resfus_band, bn_rows)

    # lane-dense slab -> NCHW
    return jnp.transpose(out.reshape(B, H, W, Cout), (0, 3, 1, 2))


if __name__ == "__main__":
    B = 2
    C_IN = 8
    C_OUT = 8
    H = W = 16     # low-resolution feature spatial size
    h = w = 8      # high-level feature spatial size (to be upsampled)

    key = jax.random.PRNGKey(0)
    k_low, k_high, k_params = jax.random.split(key, 3)
    low_feat = jax.random.normal(k_low, (B, C_IN, H, W), jnp.float32)
    high_feat = jax.random.normal(k_high, (B, C_IN, h, w), jnp.float32)

    params = init_params(k_params, C_IN, C_OUT, kernel_size=(3, 3))

    fwd = jax.jit(functools.partial(structure_enhance, kernel_size=(3, 3)))
    out = fwd(params, low_feat, high_feat)
    out = jax.block_until_ready(out)
    assert out.shape == (B, C_OUT, H, W), out.shape
    assert bool(jnp.all(jnp.isfinite(out)))
    print("KERNEL_OK")
</pallas_src>

<mosaic_0001>
module attributes {stable_mosaic.version = 11 : i64} {
  func.func private @main(%arg0: i32) attributes {dimension_semantics = [#tpu.dimension_semantics<core_parallel>], iteration_bounds = array<i64: 2>, tpu.core_type = #tpu.core_type<sc_scalar_subcore>, window_params = []} {
    return
  }
}

module attributes {stable_mosaic.version = 11 : i64} {
  func.func private @main(%arg0: i32) attributes {dimension_semantics = [#tpu.dimension_semantics<core_parallel>], iteration_bounds = array<i64: 2>, tpu.core_type = #tpu.core_type<sc_scalar_subcore>, window_params = []} {
    return
  }
}

module attributes {stable_mosaic.version = 11 : i64} {
  func.func @_structure_enhance_kernel(%arg0: i32, %arg1: memref<1x16x128xf32, #tpu.memory_space<vmem>>, %arg2: memref<1x8x64xf32, #tpu.memory_space<vmem>>, %arg3: memref<3x16x16xf32, #tpu.memory_space<vmem>>, %arg4: memref<3x8x8xf32, #tpu.memory_space<vmem>>, %arg5: memref<3x16x16xf32, #tpu.memory_space<vmem>>, %arg6: memref<384x128xf32, #tpu.memory_space<vmem>>, %arg7: memref<192x64xf32, #tpu.memory_space<vmem>>, %arg8: memref<16x8xf32, #tpu.memory_space<vmem>>, %arg9: memref<64x128xf32, #tpu.memory_space<vmem>>, %arg10: memref<768x128xf32, #tpu.memory_space<vmem>>, %arg11: memref<3x384x128xf32, #tpu.memory_space<vmem>>, %arg12: memref<10x128xf32, #tpu.memory_space<vmem>>, %arg13: memref<1x16x128xf32, #tpu.memory_space<vmem>>) attributes {dimension_semantics = [#tpu.dimension_semantics<parallel>], iteration_bounds = array<i64: 2>, scalar_prefetch = 0 : i64, scratch_operands = 0 : i64, tpu.core_type = #tpu.core_type<tc>, window_params = [{transform_indices = @transform_0, window_bounds = array<i64: 1, 16, 128>}, {transform_indices = @transform_1, window_bounds = array<i64: 1, 8, 64>}, {pipeline_mode = #tpu.pipeline_mode<synchronous>, transform_indices = @transform_2, window_bounds = array<i64: 3, 16, 16>}, {pipeline_mode = #tpu.pipeline_mode<synchronous>, transform_indices = @transform_3, window_bounds = array<i64: 3, 8, 8>}, {pipeline_mode = #tpu.pipeline_mode<synchronous>, transform_indices = @transform_4, window_bounds = array<i64: 3, 16, 16>}, {pipeline_mode = #tpu.pipeline_mode<synchronous>, transform_indices = @transform_5, window_bounds = array<i64: 384, 128>}, {pipeline_mode = #tpu.pipeline_mode<synchronous>, transform_indices = @transform_6, window_bounds = array<i64: 192, 64>}, {pipeline_mode = #tpu.pipeline_mode<synchronous>, transform_indices = @transform_7, window_bounds = array<i64: 16, 8>}, {pipeline_mode = #tpu.pipeline_mode<synchronous>, transform_indices = @transform_8, window_bounds = array<i64: 64, 128>}, {pipeline_mode = #tpu.pipeline_mode<synchronous>, transform_indices = @transform_9, window_bounds = array<i64: 768, 128>}, {pipeline_mode = #tpu.pipeline_mode<synchronous>, transform_indices = @transform_10, window_bounds = array<i64: 3, 384, 128>}, {pipeline_mode = #tpu.pipeline_mode<synchronous>, transform_indices = @transform_11, window_bounds = array<i64: 10, 128>}, {transform_indices = @transform_12, window_bounds = array<i64: 1, 16, 128>}]} {
    %c0 = arith.constant 0 : index
    %c0_0 = arith.constant 0 : index
    %c0_1 = arith.constant 0 : index
    %0 = vector.load %arg1[%c0, %c0_0, %c0_1] : memref<1x16x128xf32, #tpu.memory_space<vmem>>, vector<1x16x128xf32>
    %1 = vector.shape_cast %0 : vector<1x16x128xf32> to vector<16x128xf32>
    %c0_2 = arith.constant 0 : index
    %c0_3 = arith.constant 0 : index
    %c0_4 = arith.constant 0 : index
    %2 = vector.load %arg2[%c0_2, %c0_3, %c0_4] : memref<1x8x64xf32, #tpu.memory_space<vmem>>, vector<1x8x64xf32>
    %3 = vector.shape_cast %2 : vector<1x8x64xf32> to vector<8x64xf32>
    %c0_5 = arith.constant 0 : index
    %c0_6 = arith.constant 0 : index
    %c0_7 = arith.constant 0 : index
    %4 = vector.load %arg3[%c0_5, %c0_6, %c0_7] : memref<3x16x16xf32, #tpu.memory_space<vmem>>, vector<1x16x16xf32>
    %5 = vector.shape_cast %4 : vector<1x16x16xf32> to vector<16x16xf32>
    %cst = arith.constant dense<0.000000e+00> : vector<16x128xf32>
    %6 = tpu.matmul %5, %1, %cst {dimension_numbers = #tpu.dot_dimension_numbers<[1], [0], [0], [1], [0, 0, 1, 1], [], []>} : vector<16x16xf32>, vector<16x128xf32>, vector<16x128xf32> -> vector<16x128xf32>
    %c1 = arith.constant 1 : index
    %c0_8 = arith.constant 0 : index
    %c0_9 = arith.constant 0 : index
    %7 = vector.load %arg3[%c1, %c0_8, %c0_9] : memref<3x16x16xf32, #tpu.memory_space<vmem>>, vector<1x16x16xf32>
    %8 = vector.shape_cast %7 : vector<1x16x16xf32> to vector<16x16xf32>
    %cst_10 = arith.constant dense<0.000000e+00> : vector<16x128xf32>
    %9 = tpu.matmul %8, %1, %cst_10 {dimension_numbers = #tpu.dot_dimension_numbers<[1], [0], [0], [1], [0, 0, 1, 1], [], []>} : vector<16x16xf32>, vector<16x128xf32>, vector<16x128xf32> -> vector<16x128xf32>
    %c2 = arith.constant 2 : index
    %c0_11 = arith.constant 0 : index
    %c0_12 = arith.constant 0 : index
    %10 = vector.load %arg3[%c2, %c0_11, %c0_12] : memref<3x16x16xf32, #tpu.memory_space<vmem>>, vector<1x16x16xf32>
    %11 = vector.shape_cast %10 : vector<1x16x16xf32> to vector<16x16xf32>
    %cst_13 = arith.constant dense<0.000000e+00> : vector<16x128xf32>
    %12 = tpu.matmul %11, %1, %cst_13 {dimension_numbers = #tpu.dot_dimension_numbers<[1], [0], [0], [1], [0, 0, 1, 1], [], []>} : vector<16x16xf32>, vector<16x128xf32>, vector<16x128xf32> -> vector<16x128xf32>
    %13 = tpu.concatenate %6, %9, %12 in 1 : vector<16x128xf32>, vector<16x128xf32>, vector<16x128xf32> -> vector<16x384xf32>
    %c0_14 = arith.constant 0 : index
    %c0_15 = arith.constant 0 : index
    %14 = vector.load %arg6[%c0_14, %c0_15] : memref<384x128xf32, #tpu.memory_space<vmem>>, vector<384x128xf32>
    %cst_16 = arith.constant dense<0.000000e+00> : vector<16x128xf32>
    %15 = tpu.matmul %13, %14, %cst_16 {dimension_numbers = #tpu.dot_dimension_numbers<[1], [0], [0], [1], [0, 0, 1, 1], [], []>} : vector<16x384xf32>, vector<384x128xf32>, vector<16x128xf32> -> vector<16x128xf32>
    %c0_17 = arith.constant 0 : index
    %c0_18 = arith.constant 0 : index
    %c0_19 = arith.constant 0 : index
    %16 = vector.load %arg4[%c0_17, %c0_18, %c0_19] : memref<3x8x8xf32, #tpu.memory_space<vmem>>, vector<1x8x8xf32>
    %17 = vector.shape_cast %16 : vector<1x8x8xf32> to vector<8x8xf32>
    %cst_20 = arith.constant dense<0.000000e+00> : vector<8x64xf32>
    %18 = tpu.matmul %17, %3, %cst_20 {dimension_numbers = #tpu.dot_dimension_numbers<[1], [0], [0], [1], [0, 0, 1, 1], [], []>} : vector<8x8xf32>, vector<8x64xf32>, vector<8x64xf32> -> vector<8x64xf32>
    %c1_21 = arith.constant 1 : index
    %c0_22 = arith.constant 0 : index
    %c0_23 = arith.constant 0 : index
    %19 = vector.load %arg4[%c1_21, %c0_22, %c0_23] : memref<3x8x8xf32, #tpu.memory_space<vmem>>, vector<1x8x8xf32>
    %20 = vector.shape_cast %19 : vector<1x8x8xf32> to vector<8x8xf32>
    %cst_24 = arith.constant dense<0.000000e+00> : vector<8x64xf32>
    %21 = tpu.matmul %20, %3, %cst_24 {dimension_numbers = #tpu.dot_dimension_numbers<[1], [0], [0], [1], [0, 0, 1, 1], [], []>} : vector<8x8xf32>, vector<8x64xf32>, vector<8x64xf32> -> vector<8x64xf32>
    %c2_25 = arith.constant 2 : index
    %c0_26 = arith.constant 0 : index
    %c0_27 = arith.constant 0 : index
    %22 = vector.load %arg4[%c2_25, %c0_26, %c0_27] : memref<3x8x8xf32, #tpu.memory_space<vmem>>, vector<1x8x8xf32>
    %23 = vector.shape_cast %22 : vector<1x8x8xf32> to vector<8x8xf32>
    %cst_28 = arith.constant dense<0.000000e+00> : vector<8x64xf32>
    %24 = tpu.matmul %23, %3, %cst_28 {dimension_numbers = #tpu.dot_dimension_numbers<[1], [0], [0], [1], [0, 0, 1, 1], [], []>} : vector<8x8xf32>, vector<8x64xf32>, vector<8x64xf32> -> vector<8x64xf32>
    %25 = tpu.concatenate %18, %21, %24 in 1 : vector<8x64xf32>, vector<8x64xf32>, vector<8x64xf32> -> vector<8x192xf32>
    %c0_29 = arith.constant 0 : index
    %c0_30 = arith.constant 0 : index
    %26 = vector.load %arg7[%c0_29, %c0_30] : memref<192x64xf32, #tpu.memory_space<vmem>>, vector<192x64xf32>
    %cst_31 = arith.constant dense<0.000000e+00> : vector<8x64xf32>
    %27 = tpu.matmul %25, %26, %cst_31 {dimension_numbers = #tpu.dot_dimension_numbers<[1], [0], [0], [1], [0, 0, 1, 1], [], []>} : vector<8x192xf32>, vector<192x64xf32>, vector<8x64xf32> -> vector<8x64xf32>
    %c0_32 = arith.constant 0 : index
    %c0_33 = arith.constant 0 : index
    %28 = vector.load %arg8[%c0_32, %c0_33] : memref<16x8xf32, #tpu.memory_space<vmem>>, vector<16x8xf32>
    %c0_34 = arith.constant 0 : index
    %c0_35 = arith.constant 0 : index
    %29 = vector.load %arg9[%c0_34, %c0_35] : memref<64x128xf32, #tpu.memory_space<vmem>>, vector<64x128xf32>
    %cst_36 = arith.constant dense<0.000000e+00> : vector<16x64xf32>
    %30 = tpu.matmul %28, %3, %cst_36 {dimension_numbers = #tpu.dot_dimension_numbers<[1], [0], [0], [1], [0, 0, 1, 1], [], []>} : vector<16x8xf32>, vector<8x64xf32>, vector<16x64xf32> -> vector<16x64xf32>
    %cst_37 = arith.constant dense<0.000000e+00> : vector<16x128xf32>
    %31 = tpu.matmul %30, %29, %cst_37 {dimension_numbers = #tpu.dot_dimension_numbers<[1], [0], [0], [1], [0, 0, 1, 1], [], []>} : vector<16x64xf32>, vector<64x128xf32>, vector<16x128xf32> -> vector<16x128xf32>
    %cst_38 = arith.constant dense<0.000000e+00> : vector<16x64xf32>
    %32 = tpu.matmul %28, %27, %cst_38 {dimension_numbers = #tpu.dot_dimension_numbers<[1], [0], [0], [1], [0, 0, 1, 1], [], []>} : vector<16x8xf32>, vector<8x64xf32>, vector<16x64xf32> -> vector<16x64xf32>
    %cst_39 = arith.constant dense<0.000000e+00> : vector<16x128xf32>
    %33 = tpu.matmul %32, %29, %cst_39 {dimension_numbers = #tpu.dot_dimension_numbers<[1], [0], [0], [1], [0, 0, 1, 1], [], []>} : vector<16x64xf32>, vector<64x128xf32>, vector<16x128xf32> -> vector<16x128xf32>
    %c0_40 = arith.constant 0 : index
    %c0_41 = arith.constant 0 : index
    %c0_42 = arith.constant 0 : index
    %34 = vector.load %arg5[%c0_40, %c0_41, %c0_42] : memref<3x16x16xf32, #tpu.memory_space<vmem>>, vector<1x16x16xf32>
    %35 = vector.shape_cast %34 : vector<1x16x16xf32> to vector<16x16xf32>
    %cst_43 = arith.constant dense<0.000000e+00> : vector<16x128xf32>
    %36 = tpu.matmul %35, %15, %cst_43 {dimension_numbers = #tpu.dot_dimension_numbers<[1], [0], [0], [1], [0, 0, 1, 1], [], []>} : vector<16x16xf32>, vector<16x128xf32>, vector<16x128xf32> -> vector<16x128xf32>
    %c1_44 = arith.constant 1 : index
    %c0_45 = arith.constant 0 : index
    %c0_46 = arith.constant 0 : index
    %37 = vector.load %arg5[%c1_44, %c0_45, %c0_46] : memref<3x16x16xf32, #tpu.memory_space<vmem>>, vector<1x16x16xf32>
    %38 = vector.shape_cast %37 : vector<1x16x16xf32> to vector<16x16xf32>
    %cst_47 = arith.constant dense<0.000000e+00> : vector<16x128xf32>
    %39 = tpu.matmul %38, %15, %cst_47 {dimension_numbers = #tpu.dot_dimension_numbers<[1], [0], [0], [1], [0, 0, 1, 1], [], []>} : vector<16x16xf32>, vector<16x128xf32>, vector<16x128xf32> -> vector<16x128xf32>
    %c2_48 = arith.constant 2 : index
    %c0_49 = arith.constant 0 : index
    %c0_50 = arith.constant 0 : index
    %40 = vector.load %arg5[%c2_48, %c0_49, %c0_50] : memref<3x16x16xf32, #tpu.memory_space<vmem>>, vector<1x16x16xf32>
    %41 = vector.shape_cast %40 : vector<1x16x16xf32> to vector<16x16xf32>
    %cst_51 = arith.constant dense<0.000000e+00> : vector<16x128xf32>
    %42 = tpu.matmul %41, %15, %cst_51 {dimension_numbers = #tpu.dot_dimension_numbers<[1], [0], [0], [1], [0, 0, 1, 1], [], []>} : vector<16x16xf32>, vector<16x128xf32>, vector<16x128xf32> -> vector<16x128xf32>
    %43 = tpu.concatenate %36, %39, %42 in 1 : vector<16x128xf32>, vector<16x128xf32>, vector<16x128xf32> -> vector<16x384xf32>
    %c0_52 = arith.constant 0 : index
    %c0_53 = arith.constant 0 : index
    %c0_54 = arith.constant 0 : index
    %44 = vector.load %arg5[%c0_52, %c0_53, %c0_54] : memref<3x16x16xf32, #tpu.memory_space<vmem>>, vector<1x16x16xf32>
    %45 = vector.shape_cast %44 : vector<1x16x16xf32> to vector<16x16xf32>
    %cst_55 = arith.constant dense<0.000000e+00> : vector<16x128xf32>
    %46 = tpu.matmul %45, %33, %cst_55 {dimension_numbers = #tpu.dot_dimension_numbers<[1], [0], [0], [1], [0, 0, 1, 1], [], []>} : vector<16x16xf32>, vector<16x128xf32>, vector<16x128xf32> -> vector<16x128xf32>
    %c1_56 = arith.constant 1 : index
    %c0_57 = arith.constant 0 : index
    %c0_58 = arith.constant 0 : index
    %47 = vector.load %arg5[%c1_56, %c0_57, %c0_58] : memref<3x16x16xf32, #tpu.memory_space<vmem>>, vector<1x16x16xf32>
    %48 = vector.shape_cast %47 : vector<1x16x16xf32> to vector<16x16xf32>
    %cst_59 = arith.constant dense<0.000000e+00> : vector<16x128xf32>
    %49 = tpu.matmul %48, %33, %cst_59 {dimension_numbers = #tpu.dot_dimension_numbers<[1], [0], [0], [1], [0, 0, 1, 1], [], []>} : vector<16x16xf32>, vector<16x128xf32>, vector<16x128xf32> -> vector<16x128xf32>
    %c2_60 = arith.constant 2 : index
    %c0_61 = arith.constant 0 : index
    %c0_62 = arith.constant 0 : index
    %50 = vector.load %arg5[%c2_60, %c0_61, %c0_62] : memref<3x16x16xf32, #tpu.memory_space<vmem>>, vector<1x16x16xf32>
    %51 = vector.shape_cast %50 : vector<1x16x16xf32> to vector<16x16xf32>
    %cst_63 = arith.constant dense<0.000000e+00> : vector<16x128xf32>
    %52 = tpu.matmul %51, %33, %cst_63 {dimension_numbers = #tpu.dot_dimension_numbers<[1], [0], [0], [1], [0, 0, 1, 1], [], []>} : vector<16x16xf32>, vector<16x128xf32>, vector<16x128xf32> -> vector<16x128xf32>
    %53 = tpu.concatenate %46, %49, %52 in 1 : vector<16x128xf32>, vector<16x128xf32>, vector<16x128xf32> -> vector<16x384xf32>
    %54 = tpu.concatenate %43, %53 in 1 : vector<16x384xf32>, vector<16x384xf32> -> vector<16x768xf32>
    %c0_64 = arith.constant 0 : index
    %c0_65 = arith.constant 0 : index
    %55 = vector.load %arg10[%c0_64, %c0_65] : memref<768x128xf32, #tpu.memory_space<vmem>>, vector<768x128xf32>
    %cst_66 = arith.constant dense<0.000000e+00> : vector<16x128xf32>
    %56 = tpu.matmul %54, %55, %cst_66 {dimension_numbers = #tpu.dot_dimension_numbers<[1], [0], [0], [1], [0, 0, 1, 1], [], []>} : vector<16x768xf32>, vector<768x128xf32>, vector<16x128xf32> -> vector<16x128xf32>
    %c0_67 = arith.constant 0 : index
    %c0_68 = arith.constant 0 : index
    %57 = vector.load %arg12[%c0_67, %c0_68] : memref<10x128xf32, #tpu.memory_space<vmem>>, vector<1x128xf32>
    %58 = vector.broadcast %57 : vector<1x128xf32> to vector<16x128xf32>
    %59 = arith.mulf %56, %58 : vector<16x128xf32>
    %c1_69 = arith.constant 1 : index
    %c0_70 = arith.constant 0 : index
    %60 = vector.load %arg12[%c1_69, %c0_70] : memref<10x128xf32, #tpu.memory_space<vmem>>, vector<1x128xf32>
    %61 = vector.broadcast %60 : vector<1x128xf32> to vector<16x128xf32>
    %62 = arith.addf %59, %61 : vector<16x128xf32>
    %cst_71 = arith.constant 0.000000e+00 : f32
    %63 = vector.broadcast %cst_71 : f32 to vector<16x128xf32>
    %64 = arith.maximumf %62, %63 : vector<16x128xf32>
    %c0_72 = arith.constant 0 : index
    %c0_73 = arith.constant 0 : index
    %c0_74 = arith.constant 0 : index
    %65 = vector.load %arg5[%c0_72, %c0_73, %c0_74] : memref<3x16x16xf32, #tpu.memory_space<vmem>>, vector<1x16x16xf32>
    %66 = vector.shape_cast %65 : vector<1x16x16xf32> to vector<16x16xf32>
    %cst_75 = arith.constant dense<0.000000e+00> : vector<16x128xf32>
    %67 = tpu.matmul %66, %64, %cst_75 {dimension_numbers = #tpu.dot_dimension_numbers<[1], [0], [0], [1], [0, 0, 1, 1], [], []>} : vector<16x16xf32>, vector<16x128xf32>, vector<16x128xf32> -> vector<16x128xf32>
    %c1_76 = arith.constant 1 : index
    %c0_77 = arith.constant 0 : index
    %c0_78 = arith.constant 0 : index
    %68 = vector.load %arg5[%c1_76, %c0_77, %c0_78] : memref<3x16x16xf32, #tpu.memory_space<vmem>>, vector<1x16x16xf32>
    %69 = vector.shape_cast %68 : vector<1x16x16xf32> to vector<16x16xf32>
    %cst_79 = arith.constant dense<0.000000e+00> : vector<16x128xf32>
    %70 = tpu.matmul %69, %64, %cst_79 {dimension_numbers = #tpu.dot_dimension_numbers<[1], [0], [0], [1], [0, 0, 1, 1], [], []>} : vector<16x16xf32>, vector<16x128xf32>, vector<16x128xf32> -> vector<16x128xf32>
    %c2_80 = arith.constant 2 : index
    %c0_81 = arith.constant 0 : index
    %c0_82 = arith.constant 0 : index
    %71 = vector.load %arg5[%c2_80, %c0_81, %c0_82] : memref<3x16x16xf32, #tpu.memory_space<vmem>>, vector<1x16x16xf32>
    %72 = vector.shape_cast %71 : vector<1x16x16xf32> to vector<16x16xf32>
    %cst_83 = arith.constant dense<0.000000e+00> : vector<16x128xf32>
    %73 = tpu.matmul %72, %64, %cst_83 {dimension_numbers = #tpu.dot_dimension_numbers<[1], [0], [0], [1], [0, 0, 1, 1], [], []>} : vector<16x16xf32>, vector<16x128xf32>, vector<16x128xf32> -> vector<16x128xf32>
    %74 = tpu.concatenate %67, %70, %73 in 1 : vector<16x128xf32>, vector<16x128xf32>, vector<16x128xf32> -> vector<16x384xf32>
    %c0_84 = arith.constant 0 : index
    %c0_85 = arith.constant 0 : index
    %c0_86 = arith.constant 0 : index
    %75 = vector.load %arg11[%c0_84, %c0_85, %c0_86] : memref<3x384x128xf32, #tpu.memory_space<vmem>>, vector<1x384x128xf32>
    %76 = vector.shape_cast %75 : vector<1x384x128xf32> to vector<384x128xf32>
    %cst_87 = arith.constant dense<0.000000e+00> : vector<16x128xf32>
    %77 = tpu.matmul %74, %76, %cst_87 {dimension_numbers = #tpu.dot_dimension_numbers<[1], [0], [0], [1], [0, 0, 1, 1], [], []>} : vector<16x384xf32>, vector<384x128xf32>, vector<16x128xf32> -> vector<16x128xf32>
    %c2_88 = arith.constant 2 : index
    %c0_89 = arith.constant 0 : index
    %78 = vector.load %arg12[%c2_88, %c0_89] : memref<10x128xf32, #tpu.memory_space<vmem>>, vector<1x128xf32>
    %79 = vector.broadcast %78 : vector<1x128xf32> to vector<16x128xf32>
    %80 = arith.mulf %77, %79 : vector<16x128xf32>
    %c3 = arith.constant 3 : index
    %c0_90 = arith.constant 0 : index
    %81 = vector.load %arg12[%c3, %c0_90] : memref<10x128xf32, #tpu.memory_space<vmem>>, vector<1x128xf32>
    %82 = vector.broadcast %81 : vector<1x128xf32> to vector<16x128xf32>
    %83 = arith.addf %80, %82 : vector<16x128xf32>
    %cst_91 = arith.constant 0.000000e+00 : f32
    %84 = vector.broadcast %cst_91 : f32 to vector<16x128xf32>
    %85 = arith.maximumf %83, %84 : vector<16x128xf32>
    %c0_92 = arith.constant 0 : index
    %c0_93 = arith.constant 0 : index
    %c0_94 = arith.constant 0 : index
    %86 = vector.load %arg5[%c0_92, %c0_93, %c0_94] : memref<3x16x16xf32, #tpu.memory_space<vmem>>, vector<1x16x16xf32>
    %87 = vector.shape_cast %86 : vector<1x16x16xf32> to vector<16x16xf32>
    %cst_95 = arith.constant dense<0.000000e+00> : vector<16x128xf32>
    %88 = tpu.matmul %87, %85, %cst_95 {dimension_numbers = #tpu.dot_dimension_numbers<[1], [0], [0], [1], [0, 0, 1, 1], [], []>} : vector<16x16xf32>, vector<16x128xf32>, vector<16x128xf32> -> vector<16x128xf32>
    %c1_96 = arith.constant 1 : index
    %c0_97 = arith.constant 0 : index
    %c0_98 = arith.constant 0 : index
    %89 = vector.load %arg5[%c1_96, %c0_97, %c0_98] : memref<3x16x16xf32, #tpu.memory_space<vmem>>, vector<1x16x16xf32>
    %90 = vector.shape_cast %89 : vector<1x16x16xf32> to vector<16x16xf32>
    %cst_99 = arith.constant dense<0.000000e+00> : vector<16x128xf32>
    %91 = tpu.matmul %90, %85, %cst_99 {dimension_numbers = #tpu.dot_dimension_numbers<[1], [0], [0], [1], [0, 0, 1, 1], [], []>} : vector<16x16xf32>, vector<16x128xf32>, vector<16x128xf32> -> vector<16x128xf32>
    %c2_100 = arith.constant 2 : index
    %c0_101 = arith.constant 0 : index
    %c0_102 = arith.constant 0 : index
    %92 = vector.load %arg5[%c2_100, %c0_101, %c0_102] : memref<3x16x16xf32, #tpu.memory_space<vmem>>, vector<1x16x16xf32>
    %93 = vector.shape_cast %92 : vector<1x16x16xf32> to vector<16x16xf32>
    %cst_103 = arith.constant dense<0.000000e+00> : vector<16x128xf32>
    %94 = tpu.matmul %93, %85, %cst_103 {dimension_numbers = #tpu.dot_dimension_numbers<[1], [0], [0], [1], [0, 0, 1, 1], [], []>} : vector<16x16xf32>, vector<16x128xf32>, vector<16x128xf32> -> vector<16x128xf32>
    %95 = tpu.concatenate %88, %91, %94 in 1 : vector<16x128xf32>, vector<16x128xf32>, vector<16x128xf32> -> vector<16x384xf32>
    %c1_104 = arith.constant 1 : index
    %c0_105 = arith.constant 0 : index
    %c0_106 = arith.constant 0 : index
    %96 = vector.load %arg11[%c1_104, %c0_105, %c0_106] : memref<3x384x128xf32, #tpu.memory_space<vmem>>, vector<1x384x128xf32>
    %97 = vector.shape_cast %96 : vector<1x384x128xf32> to vector<384x128xf32>
    %cst_107 = arith.constant dense<0.000000e+00> : vector<16x128xf32>
    %98 = tpu.matmul %95, %97, %cst_107 {dimension_numbers = #tpu.dot_dimension_numbers<[1], [0], [0], [1], [0, 0, 1, 1], [], []>} : vector<16x384xf32>, vector<384x128xf32>, vector<16x128xf32> -> vector<16x128xf32>
    %c4 = arith.constant 4 : index
    %c0_108 = arith.constant 0 : index
    %99 = vector.load %arg12[%c4, %c0_108] : memref<10x128xf32, #tpu.memory_space<vmem>>, vector<1x128xf32>
    %100 = vector.broadcast %99 : vector<1x128xf32> to vector<16x128xf32>
    %101 = arith.mulf %98, %100 : vector<16x128xf32>
    %c5 = arith.constant 5 : index
    %c0_109 = arith.constant 0 : index
    %102 = vector.load %arg12[%c5, %c0_109] : memref<10x128xf32, #tpu.memory_space<vmem>>, vector<1x128xf32>
    %103 = vector.broadcast %102 : vector<1x128xf32> to vector<16x128xf32>
    %104 = arith.addf %101, %103 : vector<16x128xf32>
    %105 = arith.addf %104, %64 : vector<16x128xf32>
    %cst_110 = arith.constant 0.000000e+00 : f32
    %106 = vector.broadcast %cst_110 : f32 to vector<16x128xf32>
    %107 = arith.maximumf %105, %106 : vector<16x128xf32>
    %108 = arith.addf %107, %31 : vector<16x128xf32>
    %c6 = arith.constant 6 : index
    %c0_111 = arith.constant 0 : index
    %109 = vector.load %arg12[%c6, %c0_111] : memref<10x128xf32, #tpu.memory_space<vmem>>, vector<1x128xf32>
    %110 = vector.broadcast %109 : vector<1x128xf32> to vector<16x128xf32>
    %111 = arith.mulf %108, %110 : vector<16x128xf32>
    %c7 = arith.constant 7 : index
    %c0_112 = arith.constant 0 : index
    %112 = vector.load %arg12[%c7, %c0_112] : memref<10x128xf32, #tpu.memory_space<vmem>>, vector<1x128xf32>
    %113 = vector.broadcast %112 : vector<1x128xf32> to vector<16x128xf32>
    %114 = arith.addf %111, %113 : vector<16x128xf32>
    %cst_113 = arith.constant 0.000000e+00 : f32
    %115 = vector.broadcast %cst_113 : f32 to vector<16x128xf32>
    %116 = arith.maximumf %114, %115 : vector<16x128xf32>
    %c0_114 = arith.constant 0 : index
    %c0_115 = arith.constant 0 : index
    %c0_116 = arith.constant 0 : index
    %117 = vector.load %arg5[%c0_114, %c0_115, %c0_116] : memref<3x16x16xf32, #tpu.memory_space<vmem>>, vector<1x16x16xf32>
    %118 = vector.shape_cast %117 : vector<1x16x16xf32> to vector<16x16xf32>
    %cst_117 = arith.constant dense<0.000000e+00> : vector<16x128xf32>
    %119 = tpu.matmul %118, %116, %cst_117 {dimension_numbers = #tpu.dot_dimension_numbers<[1], [0], [0], [1], [0, 0, 1, 1], [], []>} : vector<16x16xf32>, vector<16x128xf32>, vector<16x128xf32> -> vector<16x128xf32>
    %c1_118 = arith.constant 1 : index
    %c0_119 = arith.constant 0 : index
    %c0_120 = arith.constant 0 : index
    %120 = vector.load %arg5[%c1_118, %c0_119, %c0_120] : memref<3x16x16xf32, #tpu.memory_space<vmem>>, vector<1x16x16xf32>
    %121 = vector.shape_cast %120 : vector<1x16x16xf32> to vector<16x16xf32>
    %cst_121 = arith.constant dense<0.000000e+00> : vector<16x128xf32>
    %122 = tpu.matmul %121, %116, %cst_121 {dimension_numbers = #tpu.dot_dimension_numbers<[1], [0], [0], [1], [0, 0, 1, 1], [], []>} : vector<16x16xf32>, vector<16x128xf32>, vector<16x128xf32> -> vector<16x128xf32>
    %c2_122 = arith.constant 2 : index
    %c0_123 = arith.constant 0 : index
    %c0_124 = arith.constant 0 : index
    %123 = vector.load %arg5[%c2_122, %c0_123, %c0_124] : memref<3x16x16xf32, #tpu.memory_space<vmem>>, vector<1x16x16xf32>
    %124 = vector.shape_cast %123 : vector<1x16x16xf32> to vector<16x16xf32>
    %cst_125 = arith.constant dense<0.000000e+00> : vector<16x128xf32>
    %125 = tpu.matmul %124, %116, %cst_125 {dimension_numbers = #tpu.dot_dimension_numbers<[1], [0], [0], [1], [0, 0, 1, 1], [], []>} : vector<16x16xf32>, vector<16x128xf32>, vector<16x128xf32> -> vector<16x128xf32>
    %126 = tpu.concatenate %119, %122, %125 in 1 : vector<16x128xf32>, vector<16x128xf32>, vector<16x128xf32> -> vector<16x384xf32>
    %c2_126 = arith.constant 2 : index
    %c0_127 = arith.constant 0 : index
    %c0_128 = arith.constant 0 : index
    %127 = vector.load %arg11[%c2_126, %c0_127, %c0_128] : memref<3x384x128xf32, #tpu.memory_space<vmem>>, vector<1x384x128xf32>
    %128 = vector.shape_cast %127 : vector<1x384x128xf32> to vector<384x128xf32>
    %cst_129 = arith.constant dense<0.000000e+00> : vector<16x128xf32>
    %129 = tpu.matmul %126, %128, %cst_129 {dimension_numbers = #tpu.dot_dimension_numbers<[1], [0], [0], [1], [0, 0, 1, 1], [], []>} : vector<16x384xf32>, vector<384x128xf32>, vector<16x128xf32> -> vector<16x128xf32>
    %c8 = arith.constant 8 : index
    %c0_130 = arith.constant 0 : index
    %130 = vector.load %arg12[%c8, %c0_130] : memref<10x128xf32, #tpu.memory_space<vmem>>, vector<1x128xf32>
    %131 = vector.broadcast %130 : vector<1x128xf32> to vector<16x128xf32>
    %132 = arith.mulf %129, %131 : vector<16x128xf32>
    %c9 = arith.constant 9 : index
    %c0_131 = arith.constant 0 : index
    %133 = vector.load %arg12[%c9, %c0_131] : memref<10x128xf32, #tpu.memory_space<vmem>>, vector<1x128xf32>
    %134 = vector.broadcast %133 : vector<1x128xf32> to vector<16x128xf32>
    %135 = arith.addf %132, %134 : vector<16x128xf32>
    %cst_132 = arith.constant 0.000000e+00 : f32
    %136 = vector.broadcast %cst_132 : f32 to vector<16x128xf32>
    %137 = arith.maximumf %135, %136 : vector<16x128xf32>
    %138 = vector.shape_cast %137 : vector<16x128xf32> to vector<1x16x128xf32>
    %c0_133 = arith.constant 0 : index
    %c0_134 = arith.constant 0 : index
    %c0_135 = arith.constant 0 : index
    %139 = vector.load %arg13[%c0_133, %c0_134, %c0_135] : memref<1x16x128xf32, #tpu.memory_space<vmem>>, vector<1x16x128xf32>
    tpu.vector_store %arg13[%c0_133, %c0_134, %c0_135], %138 {strides = array<i32>} : memref<1x16x128xf32, #tpu.memory_space<vmem>>, vector<1x16x128xf32>,
    return
  }
  func.func @transform_0(%arg0: i32) -> (i32, i32, i32) {
    %c0_i32 = arith.constant 0 : i32
    %c0_i32_0 = arith.constant 0 : i32
    %c0_i32_1 = arith.constant 0 : i32
    return %arg0, %c0_i32, %c0_i32_0 : i32, i32, i32
  }
  func.func @transform_1(%arg0: i32) -> (i32, i32, i32) {
    %c0_i32 = arith.constant 0 : i32
    %c0_i32_0 = arith.constant 0 : i32
    %c0_i32_1 = arith.constant 0 : i32
    return %arg0, %c0_i32, %c0_i32_0 : i32, i32, i32
  }
  func.func @transform_2(%arg0: i32) -> (i32, i32, i32) {
    %c0_i32 = arith.constant 0 : i32
    %c0_i32_0 = arith.constant 0 : i32
    %c0_i32_1 = arith.constant 0 : i32
    %c0_i32_2 = arith.constant 0 : i32
    return %c0_i32, %c0_i32_0, %c0_i32_1 : i32, i32, i32
  }
  func.func @transform_3(%arg0: i32) -> (i32, i32, i32) {
    %c0_i32 = arith.constant 0 : i32
    %c0_i32_0 = arith.constant 0 : i32
    %c0_i32_1 = arith.constant 0 : i32
    %c0_i32_2 = arith.constant 0 : i32
    return %c0_i32, %c0_i32_0, %c0_i32_1 : i32, i32, i32
  }
  func.func @transform_4(%arg0: i32) -> (i32, i32, i32) {
    %c0_i32 = arith.constant 0 : i32
    %c0_i32_0 = arith.constant 0 : i32
    %c0_i32_1 = arith.constant 0 : i32
    %c0_i32_2 = arith.constant 0 : i32
    return %c0_i32, %c0_i32_0, %c0_i32_1 : i32, i32, i32
  }
  func.func @transform_5(%arg0: i32) -> (i32, i32) {
    %c0_i32 = arith.constant 0 : i32
    %c0_i32_0 = arith.constant 0 : i32
    %c0_i32_1 = arith.constant 0 : i32
    return %c0_i32, %c0_i32_0 : i32, i32
  }
  func.func @transform_6(%arg0: i32) -> (i32, i32) {
    %c0_i32 = arith.constant 0 : i32
    %c0_i32_0 = arith.constant 0 : i32
    %c0_i32_1 = arith.constant 0 : i32
    return %c0_i32, %c0_i32_0 : i32, i32
  }
  func.func @transform_7(%arg0: i32) -> (i32, i32) {
    %c0_i32 = arith.constant 0 : i32
    %c0_i32_0 = arith.constant 0 : i32
    %c0_i32_1 = arith.constant 0 : i32
    return %c0_i32, %c0_i32_0 : i32, i32
  }
  func.func @transform_8(%arg0: i32) -> (i32, i32) {
    %c0_i32 = arith.constant 0 : i32
    %c0_i32_0 = arith.constant 0 : i32
    %c0_i32_1 = arith.constant 0 : i32
    return %c0_i32, %c0_i32_0 : i32, i32
  }
  func.func @transform_9(%arg0: i32) -> (i32, i32) {
    %c0_i32 = arith.constant 0 : i32
    %c0_i32_0 = arith.constant 0 : i32
    %c0_i32_1 = arith.constant 0 : i32
    return %c0_i32, %c0_i32_0 : i32, i32
  }
  func.func @transform_10(%arg0: i32) -> (i32, i32, i32) {
    %c0_i32 = arith.constant 0 : i32
    %c0_i32_0 = arith.constant 0 : i32
    %c0_i32_1 = arith.constant 0 : i32
    %c0_i32_2 = arith.constant 0 : i32
    return %c0_i32, %c0_i32_0, %c0_i32_1 : i32, i32, i32
  }
  func.func @transform_11(%arg0: i32) -> (i32, i32) {
    %c0_i32 = arith.constant 0 : i32
    %c0_i32_0 = arith.constant 0 : i32
    %c0_i32_1 = arith.constant 0 : i32
    return %c0_i32, %c0_i32_0 : i32, i32
  }
  func.func @transform_12(%arg0: i32) -> (i32, i32, i32) {
    %c0_i32 = arith.constant 0 : i32
    %c0_i32_0 = arith.constant 0 : i32
    %c0_i32_1 = arith.constant 0 : i32
    return %arg0, %c0_i32, %c0_i32_0 : i32, i32, i32
  }
}

</mosaic_0001>

<llo_original>
// kernel: tile.53
$region0: #{tile.53}
  #allocation0 [shape = 's32[1]{0}', space=sflag, size = 0x4, scoped, tag = 'scoped memory for tile.53']
  %s0 = inlined_call_operand.vmem [shape: f32[8], index: 0, kind: input, shape index: {}]
  %s1 = inlined_call_operand.vmem [shape: f32[16,8], index: 1, kind: output, shape index: {}]
  // Predicated region
  $region2: #{tile.53} parent=0 // pred_check
    _
  $region3: #{tile.53} parent=0 // pred_check_branch
    %3 = sbr.rel (0) target = $region5
  $region4: #{tile.53} parent=0 // pred_region
    _
  $region5: #{tile.53} parent=0 // pred_fallthru
    _
  %v4 = vld [vmem:[%s0] ss:$0 sm:$0xff]
  %5 = vst [vmem:[%s1] sm:$0xff] %v4
  %s6 = scalar_lea.vmem %s1, 8
  %7 = vst [vmem:[%s6] sm:$0xff] %v4

// kernel: tile.54
$region0: #{tile.54}
  %s0 = inlined_call_operand.vmem [shape: f32[16,8], index: 0, kind: input, shape index: {}]
  %s1 = inlined_call_operand.vmem [shape: f32[1,128], index: 1, kind: output, shape index: {}]
  $region1: #{tile.54} parent=0
    #allocation0 [shape = 'u8[4096]{0}', space=vmem, size = 0x1000, scoped, tag = 'scoped mem for output reshape']
    %v2 = vld [vmem:[%s0] sm:$0x1]
    %vm3 = vcmask 64512
    %4 = vst.msk [vmem:[#allocation0] sm:$0x1] %vm3, %v2
    %s5 = scalar_lea.vmem %s0, 15
    %v6 = vld [vmem:[%s5] sm:$0x1]
    %7 = vrot.lane.b32.xlu0 %v6, 120
    %v8 = vpop.permute.xlu0 %7
    %vm9 = vcmask 1048512
    %10 = vst.msk [vmem:[#allocation0] sm:$0x1] %vm9, %v8
    %s11 = scalar_lea.vmem %s0, 14
    %v12 = vld [vmem:[%s11] sm:$0x1]
    %13 = vrot.lane.b32.xlu0 %v12, 112
    %v14 = vpop.permute.xlu0 %13
    %vm15 = vcmask 982912
    %16 = vst.msk [vmem:[#allocation0] sm:$0x1] %vm15, %v14
    %s17 = scalar_lea.vmem %s0, 13
    %v18 = vld [vmem:[%s17] sm:$0x1]
    %19 = vrot.lane.b32.xlu0 %v18, 104
    %v20 = vpop.permute.xlu0 %19
    %vm21 = vcmask 917312
    %22 = vst.msk [vmem:[#allocation0] sm:$0x1] %vm21, %v20
    %s23 = scalar_lea.vmem %s0, 12
    %v24 = vld [vmem:[%s23] sm:$0x1]
    %25 = vrot.lane.b32.xlu0 %v24, 96
    %v26 = vpop.permute.xlu0 %25
    %vm27 = vcmask 851712
    %28 = vst.msk [vmem:[#allocation0] sm:$0x1] %vm27, %v26
    %s29 = scalar_lea.vmem %s0, 11
    %v30 = vld [vmem:[%s29] sm:$0x1]
    %31 = vrot.lane.b32.xlu0 %v30, 88
    %v32 = vpop.permute.xlu0 %31
    %vm33 = vcmask 786112
    %34 = vst.msk [vmem:[#allocation0] sm:$0x1] %vm33, %v32
    %s35 = scalar_lea.vmem %s0, 10
    %v36 = vld [vmem:[%s35] sm:$0x1]
    %37 = vrot.lane.b32.xlu0 %v36, 80
    %v38 = vpop.permute.xlu0 %37
    %vm39 = vcmask 720512
    %40 = vst.msk [vmem:[#allocation0] sm:$0x1] %vm39, %v38
    %s41 = scalar_lea.vmem %s0, 9
    %v42 = vld [vmem:[%s41] sm:$0x1]
    %43 = vrot.lane.b32.xlu0 %v42, 72
    %v44 = vpop.permute.xlu0 %43
    %vm45 = vcmask 654912
    %46 = vst.msk [vmem:[#allocation0] sm:$0x1] %vm45, %v44
    %s47 = scalar_lea.vmem %s0, 8
    %v48 = vld [vmem:[%s47] sm:$0x1]
    %49 = vrot.lane.b32.xlu0 %v48, 64
    %v50 = vpop.permute.xlu0 %49
    %vm51 = vcmask 589312
    %52 = vst.msk [vmem:[#allocation0] sm:$0x1] %vm51, %v50
    %s53 = scalar_lea.vmem %s0, 7
    %v54 = vld [vmem:[%s53] sm:$0x1]
    %55 = vrot.lane.b32.xlu0 %v54, 56
    %v56 = vpop.permute.xlu0 %55
    %vm57 = vcmask 523712
    %58 = vst.msk [vmem:[#allocation0] sm:$0x1] %vm57, %v56
    %s59 = scalar_lea.vmem %s0, 6
    %v60 = vld [vmem:[%s59] sm:$0x1]
    %61 = vrot.lane.b32.xlu0 %v60, 48
    %v62 = vpop.permute.xlu0 %61
    %vm63 = vcmask 458112
    %64 = vst.msk [vmem:[#allocation0] sm:$0x1] %vm63, %v62
    %s65 = scalar_lea.vmem %s0, 5
    %v66 = vld [vmem:[%s65] sm:$0x1]
    %67 = vrot.lane.b32.xlu0 %v66, 40
    %v68 = vpop.permute.xlu0 %67
    %vm69 = vcmask 392512
    %70 = vst.msk [vmem:[#allocation0] sm:$0x1] %vm69, %v68
    %s71 = scalar_lea.vmem %s0, 4
    %v72 = vld [vmem:[%s71] sm:$0x1]
    %73 = vrot.lane.b32.xlu0 %v72, 32
    %v74 = vpop.permute.xlu0 %73
    %vm75 = vcmask 326912
    %76 = vst.msk [vmem:[#allocation0] sm:$0x1] %vm75, %v74
    %s77 = scalar_lea.vmem %s0, 3
    %v78 = vld [vmem:[%s77] sm:$0x1]
    %79 = vrot.lane.b32.xlu0 %v78, 24
    %v80 = vpop.permute.xlu0 %79
    %vm81 = vcmask 261312
    %82 = vst.msk [vmem:[#allocation0] sm:$0x1] %vm81, %v80
    %s83 = scalar_lea.vmem %s0, 2
    %v84 = vld [vmem:[%s83] sm:$0x1]
    %85 = vrot.lane.b32.xlu0 %v84, 16
    %v86 = vpop.permute.xlu0 %85
    %vm87 = vcmask 195712
    %88 = vst.msk [vmem:[#allocation0] sm:$0x1] %vm87, %v86
    %s89 = scalar_lea.vmem %s0, 1
    %v90 = vld [vmem:[%s89] sm:$0x1]
    %91 = vrot.lane.b32.xlu0 %v90, 8
    %v92 = vpop.permute.xlu0 %91
    %vm93 = vcmask 130112
    %94 = vst.msk [vmem:[#allocation0] sm:$0x1] %vm93, %v92
    %s96 = sshll.u32 1, 1
    %s97 = ssub.s32 %s96, 1
    %v99 = vld [vmem:[#allocation0] sm:%s97]
    %s100 = sshll.u32 1, 1
    %s101 = ssub.s32 %s100, 1
    %102 = vst [vmem:[%s1] sm:%s101] %v99

// kernel: structure_enhance.1
$region0: #{structure_enhance.1}
  #allocation0 [shape = 'u32[]', space=smem, size = 0x4, offset = 0x4, fixed_abs, tag = 'smem constant byte address 0x4 - core index']
  #allocation1 [shape = 'u32[144,128]{1,0:T(1,128)}', space=vmem, size = 0x12000, scoped, tag = 'internal scratch']
  %s0 = inlined_call_operand.vmem [shape: f32[2,16,128], index: 0, kind: input, shape index: {}]
  %s1 = inlined_call_operand.vmem [shape: f32[2,8,64], index: 1, kind: input, shape index: {}]
  %s2 = inlined_call_operand.vmem [shape: f32[3,16,16], index: 2, kind: input, shape index: {}, may-alias: {2,4}]
  %s3 = inlined_call_operand.vmem [shape: f32[3,8,8], index: 3, kind: input, shape index: {}]
  %s4 = inlined_call_operand.vmem [shape: f32[3,16,16], index: 4, kind: input, shape index: {}, may-alias: {2,4}]
  %s5 = inlined_call_operand.vmem [shape: f32[384,128], index: 5, kind: input, shape index: {}]
  %s6 = inlined_call_operand.vmem [shape: f32[192,64], index: 6, kind: input, shape index: {}]
  %s7 = inlined_call_operand.vmem [shape: f32[16,8], index: 7, kind: input, shape index: {}]
  %s8 = inlined_call_operand.vmem [shape: f32[64,128], index: 8, kind: input, shape index: {}]
  %s9 = inlined_call_operand.vmem [shape: f32[768,128], index: 9, kind: input, shape index: {}]
  %s10 = inlined_call_operand.vmem [shape: f32[3,384,128], index: 10, kind: input, shape index: {}]
  %s11 = inlined_call_operand.vmem [shape: f32[10,128], index: 11, kind: input, shape index: {}]
  %s12 = inlined_call_operand.vmem [shape: f32[2,16,128], index: 12, kind: output, shape index: {}]
  %s13 = sld [smem:[#allocation0]]
  $region81: #{structure_enhance.1} parent=0
    _
  %s15 = ssub.s32 1, %s13
  %s16 = scalar_select 0, %s15, %s13
  loop: start=0, step=1, limit=4
  $region2: #{structure_enhance.1} parent=0 // loop_pre_header
    _
  $region3: #{structure_enhance.1} parent=0 // loop_header
    %s18 = sphi 0, %s22
    %p19 = scmp.ge.s32.totalorder %s18, 4
    %s28 = sphi 0, %s30
    %s31 = sphi 0, %s28
    %s32 = sphi 0, %s31
    %s48 = sphi 0, %s32
    %s54 = sphi 0, %s56
    %s57 = sphi 0, %s54
    %s58 = sphi 0, %s57
    %s74 = sphi 0, %s58
    %s78 = sphi 0, %s78
    %s80 = sphi 0, %s78
    %s81 = sphi 0, %s80
    %s95 = sphi 0, %s81
    %s99 = sphi 0, %s99
    %s101 = sphi 0, %s99
    %s102 = sphi 0, %s101
    %s116 = sphi 0, %s102
    %s120 = sphi 0, %s120
    %s122 = sphi 0, %s120
    %s123 = sphi 0, %s122
    %s137 = sphi 0, %s123
    %s141 = sphi 0, %s141
    %s143 = sphi 0, %s141
    %s144 = sphi 0, %s143
    %s158 = sphi 0, %s144
    %s162 = sphi 0, %s162
    %s164 = sphi 0, %s162
    %s165 = sphi 0, %s164
    %s179 = sphi 0, %s165
    %s183 = sphi 0, %s183
    %s185 = sphi 0, %s183
    %s186 = sphi 0, %s185
    %s200 = sphi 0, %s186
    %s204 = sphi 0, %s204
    %s206 = sphi 0, %s204
    %s207 = sphi 0, %s206
    %s221 = sphi 0, %s207
    %s225 = sphi 0, %s225
    %s227 = sphi 0, %s225
    %s228 = sphi 0, %s227
    %s242 = sphi 0, %s228
    %s246 = sphi 0, %s246
    %s248 = sphi 0, %s246
    %s249 = sphi 0, %s248
    %s263 = sphi 0, %s249
    %s267 = sphi 0, %s267
    %s269 = sphi 0, %s267
    %s270 = sphi 0, %s269
    %s284 = sphi 0, %s270
    %s290 = sphi 0, %s292
    %s293 = sphi 0, %s290
    %s294 = sphi 0, %s293
    %s310 = sphi 0, %s294
  $region4: #{structure_enhance.1} parent=0 // loop_header_branch
    %21 = sbr.rel (%p19) target = $region8
  $region5: #{structure_enhance.1} parent=0 // loop_body
    %s23 = ssub.s32 %s18, 1
    %s24 = ssub.s32 %s18, 2
    %s25 = sadd.s32 %s18, 1
    %s26 = ssub.s32 %s18, %s25
    %p27 = scmp.eq.s32.totalorder %s26, 0
    %s29 = sadd.s32 %s28, 1
    %s30 = scalar_select %p27, %s28, %s29
    %p33 = pneg %p27
    %p34 = scmp.eq.s32.totalorder %s18, 1
    %p35 = por %p33, %p34
    %p36 = scmp.ne.s32.totalorder %s28, %s31
    %p37 = scmp.eq.s32.totalorder %s18, 0
    %p38 = por %p36, %p37
    %p39 = scmp.ne.s32.totalorder %s28, %s31
    %p40 = scmp.eq.s32.totalorder %s23, 1
    %p41 = por %p39, %p40
    %p42 = scmp.ne.s32.totalorder %s31, %s32
    %p43 = scmp.eq.s32.totalorder %s23, 0
    %p44 = por %p42, %p43
    %p45 = scmp.ne.s32.totalorder %s31, %s32
    %p46 = scmp.eq.s32.totalorder %s24, 1
    %p47 = por %p45, %p46
    %p49 = scmp.ne.s32.totalorder %s32, %s48
    %p50 = scmp.eq.s32.totalorder %s24, 0
    %p51 = por %p49, %p50
    %s52 = ssub.s32 %s18, %s25
    %p53 = scmp.eq.s32.totalorder %s52, 0
    %s55 = sadd.s32 %s54, 1
    %s56 = scalar_select %p53, %s54, %s55
    %p59 = pneg %p53
    %p60 = scmp.eq.s32.totalorder %s18, 1
    %p61 = por %p59, %p60
    %p62 = scmp.ne.s32.totalorder %s54, %s57
    %p63 = scmp.eq.s32.totalorder %s18, 0
    %p64 = por %p62, %p63
    %p65 = scmp.ne.s32.totalorder %s54, %s57
    %p66 = scmp.eq.s32.totalorder %s23, 1
    %p67 = por %p65, %p66
    %p68 = scmp.ne.s32.totalorder %s57, %s58
    %p69 = scmp.eq.s32.totalorder %s23, 0
    %p70 = por %p68, %p69
    %p71 = scmp.ne.s32.totalorder %s57, %s58
    %p72 = scmp.eq.s32.totalorder %s24, 1
    %p73 = por %p71, %p72
    %p75 = scmp.ne.s32.totalorder %s58, %s74
    %p76 = scmp.eq.s32.totalorder %s24, 0
    %p77 = por %p75, %p76
    %s79 = sadd.s32 %s78, 1
    %p82 = scmp.eq.s32.totalorder %s18, 1
    %p83 = scmp.ne.s32.totalorder %s78, %s80
    %p84 = scmp.eq.s32.totalorder %s18, 0
    %p85 = por %p83, %p84
    %p86 = scmp.ne.s32.totalorder %s78, %s80
    %p87 = scmp.eq.s32.totalorder %s23, 1
    %p88 = por %p86, %p87
    %p89 = scmp.ne.s32.totalorder %s80, %s81
    %p90 = scmp.eq.s32.totalorder %s23, 0
    %p91 = por %p89, %p90
    %p92 = scmp.ne.s32.totalorder %s80, %s81
    %p93 = scmp.eq.s32.totalorder %s24, 1
    %p94 = por %p92, %p93
    %p96 = scmp.ne.s32.totalorder %s81, %s95
    %p97 = scmp.eq.s32.totalorder %s24, 0
    %p98 = por %p96, %p97
    %s100 = sadd.s32 %s99, 1
    %p103 = scmp.eq.s32.totalorder %s18, 1
    %p104 = scmp.ne.s32.totalorder %s99, %s101
    %p105 = scmp.eq.s32.totalorder %s18, 0
    %p106 = por %p104, %p105
    %p107 = scmp.ne.s32.totalorder %s99, %s101
    %p108 = scmp.eq.s32.totalorder %s23, 1
    %p109 = por %p107, %p108
    %p110 = scmp.ne.s32.totalorder %s101, %s102
    %p111 = scmp.eq.s32.totalorder %s23, 0
    %p112 = por %p110, %p111
    %p113 = scmp.ne.s32.totalorder %s101, %s102
    %p114 = scmp.eq.s32.totalorder %s24, 1
    %p115 = por %p113, %p114
    %p117 = scmp.ne.s32.totalorder %s102, %s116
    %p118 = scmp.eq.s32.totalorder %s24, 0
    %p119 = por %p117, %p118
    %s121 = sadd.s32 %s120, 1
    %p124 = scmp.eq.s32.totalorder %s18, 1
    %p125 = scmp.ne.s32.totalorder %s120, %s122
    %p126 = scmp.eq.s32.totalorder %s18, 0
    %p127 = por %p125, %p126
    %p128 = scmp.ne.s32.totalorder %s120, %s122
    %p129 = scmp.eq.s32.totalorder %s23, 1
    %p130 = por %p128, %p129
    %p131 = scmp.ne.s32.totalorder %s122, %s123
    %p132 = scmp.eq.s32.totalorder %s23, 0
    %p133 = por %p131, %p132
    %p134 = scmp.ne.s32.totalorder %s122, %s123
    %p135 = scmp.eq.s32.totalorder %s24, 1
    %p136 = por %p134, %p135
    %p138 = scmp.ne.s32.totalorder %s123, %s137
    %p139 = scmp.eq.s32.totalorder %s24, 0
    %p140 = por %p138, %p139
    %s142 = sadd.s32 %s141, 1
    %p145 = scmp.eq.s32.totalorder %s18, 1
    %p146 = scmp.ne.s32.totalorder %s141, %s143
    %p147 = scmp.eq.s32.totalorder %s18, 0
    %p148 = por %p146, %p147
    %p149 = scmp.ne.s32.totalorder %s141, %s143
    %p150 = scmp.eq.s32.totalorder %s23, 1
    %p151 = por %p149, %p150
    %p152 = scmp.ne.s32.totalorder %s143, %s144
    %p153 = scmp.eq.s32.totalorder %s23, 0
    %p154 = por %p152, %p153
    %p155 = scmp.ne.s32.totalorder %s143, %s144
    %p156 = scmp.eq.s32.totalorder %s24, 1
    %p157 = por %p155, %p156
    %p159 = scmp.ne.s32.totalorder %s144, %s158
    %p160 = scmp.eq.s32.totalorder %s24, 0
    %p161 = por %p159, %p160
    %s163 = sadd.s32 %s162, 1
    %p166 = scmp.eq.s32.totalorder %s18, 1
    %p167 = scmp.ne.s32.totalorder %s162, %s164
    %p168 = scmp.eq.s32.totalorder %s18, 0
    %p169 = por %p167, %p168
    %p170 = scmp.ne.s32.totalorder %s162, %s164
    %p171 = scmp.eq.s32.totalorder %s23, 1
    %p172 = por %p170, %p171
    %p173 = scmp.ne.s32.totalorder %s164, %s165
    %p174 = scmp.eq.s32.totalorder %s23, 0
    %p175 = por %p173, %p174
    %p176 = scmp.ne.s32.totalorder %s164, %s165
    %p177 = scmp.eq.s32.totalorder %s24, 1
    %p178 = por %p176, %p177
    %p180 = scmp.ne.s32.totalorder %s165, %s179
    %p181 = scmp.eq.s32.totalorder %s24, 0
    %p182 = por %p180, %p181
    %s184 = sadd.s32 %s183, 1
    %p187 = scmp.eq.s32.totalorder %s18, 1
    %p188 = scmp.ne.s32.totalorder %s183, %s185
    %p189 = scmp.eq.s32.totalorder %s18, 0
    %p190 = por %p188, %p189
    %p191 = scmp.ne.s32.totalorder %s183, %s185
    %p192 = scmp.eq.s32.totalorder %s23, 1
    %p193 = por %p191, %p192
    %p194 = scmp.ne.s32.totalorder %s185, %s186
    %p195 = scmp.eq.s32.totalorder %s23, 0
    %p196 = por %p194, %p195
    %p197 = scmp.ne.s32.totalorder %s185, %s186
    %p198 = scmp.eq.s32.totalorder %s24, 1
    %p199 = por %p197, %p198
    %p201 = scmp.ne.s32.totalorder %s186, %s200
    %p202 = scmp.eq.s32.totalorder %s24, 0
    %p203 = por %p201, %p202
    %s205 = sadd.s32 %s204, 1
    %p208 = scmp.eq.s32.totalorder %s18, 1
    %p209 = scmp.ne.s32.totalorder %s204, %s206
    %p210 = scmp.eq.s32.totalorder %s18, 0
    %p211 = por %p209, %p210
    %p212 = scmp.ne.s32.totalorder %s204, %s206
    %p213 = scmp.eq.s32.totalorder %s23, 1
    %p214 = por %p212, %p213
    %p215 = scmp.ne.s32.totalorder %s206, %s207
    %p216 = scmp.eq.s32.totalorder %s23, 0
    %p217 = por %p215, %p216
    %p218 = scmp.ne.s32.totalorder %s206, %s207
    %p219 = scmp.eq.s32.totalorder %s24, 1
    %p220 = por %p218, %p219
    %p222 = scmp.ne.s32.totalorder %s207, %s221
    %p223 = scmp.eq.s32.totalorder %s24, 0
    %p224 = por %p222, %p223
    %s226 = sadd.s32 %s225, 1
    %p229 = scmp.eq.s32.totalorder %s18, 1
    %p230 = scmp.ne.s32.totalorder %s225, %s227
    %p231 = scmp.eq.s32.totalorder %s18, 0
    %p232 = por %p230, %p231
    %p233 = scmp.ne.s32.totalorder %s225, %s227
    %p234 = scmp.eq.s32.totalorder %s23, 1
    %p235 = por %p233, %p234
    %p236 = scmp.ne.s32.totalorder %s227, %s228
    %p237 = scmp.eq.s32.totalorder %s23, 0
    %p238 = por %p236, %p237
    %p239 = scmp.ne.s32.totalorder %s227, %s228
    %p240 = scmp.eq.s32.totalorder %s24, 1
    %p241 = por %p239, %p240
    %p243 = scmp.ne.s32.totalorder %s228, %s242
    %p244 = scmp.eq.s32.totalorder %s24, 0
    %p245 = por %p243, %p244
    %s247 = sadd.s32 %s246, 1
    %p250 = scmp.eq.s32.totalorder %s18, 1
    %p251 = scmp.ne.s32.totalorder %s246, %s248
    %p252 = scmp.eq.s32.totalorder %s18, 0
    %p253 = por %p251, %p252
    %p254 = scmp.ne.s32.totalorder %s246, %s248
    %p255 = scmp.eq.s32.totalorder %s23, 1
    %p256 = por %p254, %p255
    %p257 = scmp.ne.s32.totalorder %s248, %s249
    %p258 = scmp.eq.s32.totalorder %s23, 0
    %p259 = por %p257, %p258
    %p260 = scmp.ne.s32.totalorder %s248, %s249
    %p261 = scmp.eq.s32.totalorder %s24, 1
    %p262 = por %p260, %p261
    %p264 = scmp.ne.s32.totalorder %s249, %s263
    %p265 = scmp.eq.s32.totalorder %s24, 0
    %p266 = por %p264, %p265
    %s268 = sadd.s32 %s267, 1
    %p271 = scmp.eq.s32.totalorder %s18, 1
    %p272 = scmp.ne.s32.totalorder %s267, %s269
    %p273 = scmp.eq.s32.totalorder %s18, 0
    %p274 = por %p272, %p273
    %p275 = scmp.ne.s32.totalorder %s267, %s269
    %p276 = scmp.eq.s32.totalorder %s23, 1
    %p277 = por %p275, %p276
    %p278 = scmp.ne.s32.totalorder %s269, %s270
    %p279 = scmp.eq.s32.totalorder %s23, 0
    %p280 = por %p278, %p279
    %p281 = scmp.ne.s32.totalorder %s269, %s270
    %p282 = scmp.eq.s32.totalorder %s24, 1
    %p283 = por %p281, %p282
    %p285 = scmp.ne.s32.totalorder %s270, %s284
    %p286 = scmp.eq.s32.totalorder %s24, 0
    %p287 = por %p285, %p286
    %s288 = ssub.s32 %s18, %s25
    %p289 = scmp.eq.s32.totalorder %s288, 0
    %s291 = sadd.s32 %s290, 1
    %s292 = scalar_select %p289, %s290, %s291
    %p295 = pneg %p289
    %p296 = scmp.eq.s32.totalorder %s18, 1
    %p297 = por %p295, %p296
    %p298 = scmp.ne.s32.totalorder %s290, %s293
    %p299 = scmp.eq.s32.totalorder %s18, 0
    %p300 = por %p298, %p299
    %p301 = scmp.ne.s32.totalorder %s290, %s293
    %p302 = scmp.eq.s32.totalorder %s23, 1
    %p303 = por %p301, %p302
    %p304 = scmp.ne.s32.totalorder %s293, %s294
    %p305 = scmp.eq.s32.totalorder %s23, 0
    %p306 = por %p304, %p305
    %p307 = scmp.ne.s32.totalorder %s293, %s294
    %p308 = scmp.eq.s32.totalorder %s24, 1
    %p309 = por %p307, %p308
    %p311 = scmp.ne.s32.totalorder %s294, %s310
    %p312 = scmp.eq.s32.totalorder %s24, 0
    %p313 = por %p311, %p312
    %p314 = scmp.le.s32.totalorder 1, %s18
    %p315 = scmp.lt.s32.totalorder %s18, 3
    %p316 = pnand %p314, %p315
    %p317 = pneg %p316
    // Predicated region
    $region9: #{structure_enhance.1} parent=5 // pred_check
      _
    $region10: #{structure_enhance.1} parent=5 // pred_check_branch
      %319 = sbr.rel (%p316) target = $region12
    $region11: #{structure_enhance.1} parent=5 // pred_region
      %s320 = ssub.s32 %s18, 1
      // Predicated region
      $region13: #{structure_enhance.1} parent=11 // pred_check
        %p321 = pneg %p91
      $region14: #{structure_enhance.1} parent=11 // pred_check_branch
        %323 = sbr.rel (%p321) target = $region16
      $region15: #{structure_enhance.1} parent=11 // pred_region
        _
      $region16: #{structure_enhance.1} parent=11 // pred_fallthru
        _
      // Predicated region
      $region17: #{structure_enhance.1} parent=11 // pred_check
        %p324 = pneg %p112
      $region18: #{structure_enhance.1} parent=11 // pred_check_branch
        %326 = sbr.rel (%p324) target = $region20
      $region19: #{structure_enhance.1} parent=11 // pred_region
        _
      $region20: #{structure_enhance.1} parent=11 // pred_fallthru
        _
      // Predicated region
      $region21: #{structure_enhance.1} parent=11 // pred_check
        %p327 = pneg %p133
      $region22: #{structure_enhance.1} parent=11 // pred_check_branch
        %329 = sbr.rel (%p327) target = $region24
      $region23: #{structure_enhance.1} parent=11 // pred_region
        _
      $region24: #{structure_enhance.1} parent=11 // pred_fallthru
        _
      // Predicated region
      $region25: #{structure_enhance.1} parent=11 // pred_check
        %p330 = pneg %p154
      $region26: #{structure_enhance.1} parent=11 // pred_check_branch
        %332 = sbr.rel (%p330) target = $region28
      $region27: #{structure_enhance.1} parent=11 // pred_region
        _
      $region28: #{structure_enhance.1} parent=11 // pred_fallthru
        _
      // Predicated region
      $region29: #{structure_enhance.1} parent=11 // pred_check
        %p333 = pneg %p175
      $region30: #{structure_enhance.1} parent=11 // pred_check_branch
        %335 = sbr.rel (%p333) target = $region32
      $region31: #{structure_enhance.1} parent=11 // pred_region
        _
      $region32: #{structure_enhance.1} parent=11 // pred_fallthru
        _
      // Predicated region
      $region33: #{structure_enhance.1} parent=11 // pred_check
        %p336 = pneg %p196
      $region34: #{structure_enhance.1} parent=11 // pred_check_branch
        %338 = sbr.rel (%p336) target = $region36
      $region35: #{structure_enhance.1} parent=11 // pred_region
        _
      $region36: #{structure_enhance.1} parent=11 // pred_fallthru
        _
      // Predicated region
      $region37: #{structure_enhance.1} parent=11 // pred_check
        %p339 = pneg %p217
      $region38: #{structure_enhance.1} parent=11 // pred_check_branch
        %341 = sbr.rel (%p339) target = $region40
      $region39: #{structure_enhance.1} parent=11 // pred_region
        _
      $region40: #{structure_enhance.1} parent=11 // pred_fallthru
        _
      // Predicated region
      $region41: #{structure_enhance.1} parent=11 // pred_check
        %p342 = pneg %p238
      $region42: #{structure_enhance.1} parent=11 // pred_check_branch
        %344 = sbr.rel (%p342) target = $region44
      $region43: #{structure_enhance.1} parent=11 // pred_region
        _
      $region44: #{structure_enhance.1} parent=11 // pred_fallthru
        _
      // Predicated region
      $region45: #{structure_enhance.1} parent=11 // pred_check
        %p345 = pneg %p259
      $region46: #{structure_enhance.1} parent=11 // pred_check_branch
        %347 = sbr.rel (%p345) target = $region48
      $region47: #{structure_enhance.1} parent=11 // pred_region
        _
      $region48: #{structure_enhance.1} parent=11 // pred_fallthru
        _
      // Predicated region
      $region49: #{structure_enhance.1} parent=11 // pred_check
        %p348 = pneg %p280
      $region50: #{structure_enhance.1} parent=11 // pred_check_branch
        %350 = sbr.rel (%p348) target = $region52
      $region51: #{structure_enhance.1} parent=11 // pred_region
        _
      $region52: #{structure_enhance.1} parent=11 // pred_fallthru
        _
    $region12: #{structure_enhance.1} parent=5 // pred_fallthru
      _
    %p351 = scmp.lt.s32.totalorder %s18, 2
    // Predicated region
    $region53: #{structure_enhance.1} parent=5 // pred_check
      %p352 = pneg %p351
    $region54: #{structure_enhance.1} parent=5 // pred_check_branch
      %354 = sbr.rel (%p352) target = $region56
    $region55: #{structure_enhance.1} parent=5 // pred_region
      // Predicated region
      $region57: #{structure_enhance.1} parent=55 // pred_check
        %p355 = pneg %p38
      $region58: #{structure_enhance.1} parent=55 // pred_check_branch
        %357 = sbr.rel (%p355) target = $region60
      $region59: #{structure_enhance.1} parent=55 // pred_region
        %p358 = scmp.lt.s32.totalorder %s18, 1
        %s359 = scalar_select %p358, %s18, 1
        %s360 = smul.addr %s359, 2
        %s361 = smul.addr %s360, 8
        %s362 = scalar_lea.vmem %s0, %s361
      $region60: #{structure_enhance.1} parent=55 // pred_fallthru
        _
      // Predicated region
      $region61: #{structure_enhance.1} parent=55 // pred_check
        %p363 = pneg %p64
      $region62: #{structure_enhance.1} parent=55 // pred_check_branch
        %365 = sbr.rel (%p363) target = $region64
      $region63: #{structure_enhance.1} parent=55 // pred_region
        %p366 = scmp.lt.s32.totalorder %s18, 1
        %s367 = scalar_select %p366, %s18, 1
        %s368 = smul.addr %s367, 8
        %s369 = scalar_lea.vmem %s1, %s368
      $region64: #{structure_enhance.1} parent=55 // pred_fallthru
        _
    $region56: #{structure_enhance.1} parent=5 // pred_fallthru
      _
    %p370 = scmp.le.s32.totalorder 1, %s18
    %p371 = scmp.lt.s32.totalorder %s18, 3
    %p372 = pnand %p370, %p371
    %p373 = pneg %p372
    // Predicated region
    $region65: #{structure_enhance.1} parent=5 // pred_check
      _
    $region66: #{structure_enhance.1} parent=5 // pred_check_branch
      %375 = sbr.rel (%p372) target = $region68
    $region67: #{structure_enhance.1} parent=5 // pred_region
      %s376 = ssub.s32 %s18, 1
      %p377 = scmp.lt.s32.totalorder %s23, 1
      %s378 = scalar_select %p377, %s23, 1
      %s379 = smul.addr %s378, 2
      %s380 = smul.addr %s379, 8
      %s381 = scalar_lea.vmem %s0, %s380
      %p382 = pneg %p44
      %p383 = pneg %p41
      %p384 = scmp.lt.s32.totalorder %s23, 1
      %s385 = scalar_select %p384, %s23, 1
      %s386 = smul.addr %s385, 8
      %s387 = scalar_lea.vmem %s1, %s386
      %p388 = pneg %p70
      %p389 = pneg %p67
      %p390 = pneg %p91
      %p391 = pneg %p88
      %p392 = pneg %p112
      %p393 = pneg %p109
      %p394 = pneg %p133
      %p395 = pneg %p130
      %p396 = pneg %p154
      %p397 = pneg %p151
      %p398 = pneg %p175
      %p399 = pneg %p172
      %p400 = pneg %p196
      %p401 = pneg %p193
      %p402 = pneg %p217
      %p403 = pneg %p214
      %p404 = pneg %p238
      %p405 = pneg %p235
      %p406 = pneg %p259
      %p407 = pneg %p256
      %p408 = pneg %p280
      %p409 = pneg %p277
      %p410 = pneg %p306
      %p411 = pneg %p303
      %p412 = scmp.lt.s32.totalorder %s23, 1
      %s413 = scalar_select %p412, %s23, 1
      %s414 = smul.addr %s413, 2
      %s415 = smul.addr %s414, 8
      %s416 = scalar_lea.vmem %s12, %s415
      %p417 = scmp.lt.s32.totalorder %s23, 1
      %s418 = scalar_select %p417, %s23, 1
      %s419 = smul.addr %s418, 2
      %s420 = smul.addr %s419, 8
      %s421 = scalar_lea.vmem %s0, %s420
      %p422 = scmp.lt.s32.totalorder %s23, 1
      %s423 = scalar_select %p422, %s23, 1
      %s424 = smul.addr %s423, 8
      %s425 = scalar_lea.vmem %s1, %s424
      %p426 = scmp.lt.s32.totalorder %s23, 1
      %s427 = scalar_select %p426, %s23, 1
      %s428 = smul.addr %s427, 2
      %s429 = smul.addr %s428, 8
      %s430 = scalar_lea.vmem %s12, %s429
      %v431 = vld [vmem:[%s421] sm:$0xff]
      %v432 = vld [vmem:[%s421 + $0x8] sm:$0xff]
      %v433 = vld [vmem:[%s425] sm:$0xff]
      %v434 = vld [vmem:[%s2] sm:$0xff]
      %v435 = vld [vmem:[%s2 + $0x8] sm:$0xff]
      %vm436 = vcmask 130048
      %v438 = vsel %vm436, %v434, 0
      %v441 = vsel %vm436, %v435, 0
      %443 = vmatprep.subr.mxu0 0.0
      %444 = vmatpush1.msra.mxu0 0.0
      %445 = vmatprep.subr.mxu0 0.0
      %446 = vmatpush1.msra.mxu0 0.0
      %447 = vmatprep.subr.mxu0 0.0
      %448 = vmatpush1.msra.mxu0 0.0
      %449 = vmatprep.subr.mxu0 0.0
      %450 = vmatpush1.msra.mxu0 0.0
      %451 = vmatprep.subr.mxu0 0.0
      %452 = vmatpush1.msra.mxu0 0.0
      %453 = vmatprep.subr.mxu0 0.0
      %454 = vmatpush1.msra.mxu0 0.0
      %455 = vmatprep.subr.mxu0 0.0
      %456 = vmatpush1.msra.mxu0 0.0
      %457 = vmatprep.subr.mxu0 0.0
      %458 = vmatpush1.msra.mxu0 0.0
      %459 = vmatprep.subr.mxu0 0.0
      %460 = vmatpush1.msra.mxu0 0.0
      %461 = vmatprep.subr.mxu0 0.0
      %462 = vmatpush1.msra.mxu0 0.0
      %463 = vmatprep.subr.mxu0 0.0
      %464 = vmatpush1.msra.mxu0 0.0
      %465 = vmatprep.subr.mxu0 0.0
      %466 = vmatpush1.msra.mxu0 0.0
      %467 = vmatprep.subr.mxu0 0.0
      %468 = vmatpush1.msra.mxu0 0.0
      %469 = vmatprep.subr.mxu0 0.0
      %470 = vmatpush1.msra.mxu0 0.0
      %471 = vmatprep.subr.mxu0 0.0
      %472 = vmatpush1.msra.mxu0 %v432
      %473 = vmatprep.subr.mxu0 0.0
      %474 = vmatpush1.msra.mxu0 %v431
      %475 = vmatprep.subr.mxu0 0.0
      %476 = vmatpush2.msra.mxu0 0.0
      %477 = vmatprep.subr.mxu0 0.0
      %478 = vmatpush2.msra.mxu0 0.0
      %479 = vmatprep.subr.mxu0 0.0
      %480 = vmatpush2.msra.mxu0 0.0
      %481 = vmatprep.subr.mxu0 0.0
      %482 = vmatpush2.msra.mxu0 0.0
      %483 = vmatprep.subr.mxu0 0.0
      %484 = vmatpush2.msra.mxu0 0.0
      %485 = vmatprep.subr.mxu0 0.0
      %486 = vmatpush2.msra.mxu0 0.0
      %487 = vmatprep.subr.mxu0 0.0
      %488 = vmatpush2.msra.mxu0 0.0
      %489 = vmatprep.subr.mxu0 0.0
      %490 = vmatpush2.msra.mxu0 0.0
      %491 = vmatprep.subr.mxu0 0.0
      %492 = vmatpush2.msra.mxu0 0.0
      %493 = vmatprep.subr.mxu0 0.0
      %494 = vmatpush2.msra.mxu0 0.0
      %495 = vmatprep.subr.mxu0 0.0
      %496 = vmatpush2.msra.mxu0 0.0
      %497 = vmatprep.subr.mxu0 0.0
      %498 = vmatpush2.msra.mxu0 0.0
      %499 = vmatprep.subr.mxu0 0.0
      %500 = vmatpush2.msra.mxu0 0.0
      %501 = vmatprep.subr.mxu0 0.0
      %502 = vmatpush2.msra.mxu0 0.0
      %503 = vmatprep.subr.mxu0 0.0
      %504 = vmatpush2.msra.mxu0 0.0
      %505 = vmatprep.subr.mxu0 0.0
      %506 = vmatpush2.msra.mxu0 0.0
      %507 = vmatprep.mubr.f32.mxu0 0.0
      %508 = vmatmul.mubr.f32.gmra.mxu0 %v438
      %v509 = vpop.f32.mrf.mxu0
      %v510 = vadd.f32 0.0, %v509
      %v511 = vpop.f32.mrf.mxu0
      %512 = vmatprep.mubr.f32.mxu0 0.0
      %513 = vmatmul.mubr.f32.gmra.mxu0 %v441
      %v514 = vpop.f32.mrf.mxu0
      %v515 = vadd.f32 0.0, %v514
      %v516 = vpop.f32.mrf.mxu0
      %517 = vdwg.mxu0
      %s518 = scalar_lea.vmem %s2, 16
      %v519 = vld [vmem:[%s518] sm:$0xff]
      %v520 = vld [vmem:[%s518 + $0x8] sm:$0xff]
      %v522 = vsel %vm436, %v519, 0
      %v525 = vsel %vm436, %v520, 0
      %527 = vmatprep.subr.mxu0 0.0
      %528 = vmatpush1.msra.mxu0 0.0
      %529 = vmatprep.subr.mxu0 0.0
      %530 = vmatpush1.msra.mxu0 0.0
      %531 = vmatprep.subr.mxu0 0.0
      %532 = vmatpush1.msra.mxu0 0.0
      %533 = vmatprep.subr.mxu0 0.0
      %534 = vmatpush1.msra.mxu0 0.0
      %535 = vmatprep.subr.mxu0 0.0
      %536 = vmatpush1.msra.mxu0 0.0
      %537 = vmatprep.subr.mxu0 0.0
      %538 = vmatpush1.msra.mxu0 0.0
      %539 = vmatprep.subr.mxu0 0.0
      %540 = vmatpush1.msra.mxu0 0.0
      %541 = vmatprep.subr.mxu0 0.0
      %542 = vmatpush1.msra.mxu0 0.0
      %543 = vmatprep.subr.mxu0 0.0
      %544 = vmatpush1.msra.mxu0 0.0
      %545 = vmatprep.subr.mxu0 0.0
      %546 = vmatpush1.msra.mxu0 0.0
      %547 = vmatprep.subr.mxu0 0.0
      %548 = vmatpush1.msra.mxu0 0.0
      %549 = vmatprep.subr.mxu0 0.0
      %550 = vmatpush1.msra.mxu0 0.0
      %551 = vmatprep.subr.mxu0 0.0
      %552 = vmatpush1.msra.mxu0 0.0
      %553 = vmatprep.subr.mxu0 0.0
      %554 = vmatpush1.msra.mxu0 0.0
      %555 = vmatprep.subr.mxu0 0.0
      %556 = vmatpush1.msra.mxu0 %v432
      %557 = vmatprep.subr.mxu0 0.0
      %558 = vmatpush1.msra.mxu0 %v431
      %559 = vmatprep.subr.mxu0 0.0
      %560 = vmatpush2.msra.mxu0 0.0
      %561 = vmatprep.subr.mxu0 0.0
      %562 = vmatpush2.msra.mxu0 0.0
      %563 = vmatprep.subr.mxu0 0.0
      %564 = vmatpush2.msra.mxu0 0.0
      %565 = vmatprep.subr.mxu0 0.0
      %566 = vmatpush2.msra.mxu0 0.0
      %567 = vmatprep.subr.mxu0 0.0
      %568 = vmatpush2.msra.mxu0 0.0
      %569 = vmatprep.subr.mxu0 0.0
      %570 = vmatpush2.msra.mxu0 0.0
      %571 = vmatprep.subr.mxu0 0.0
      %572 = vmatpush2.msra.mxu0 0.0
      %573 = vmatprep.subr.mxu0 0.0
      %574 = vmatpush2.msra.mxu0 0.0
      %575 = vmatprep.subr.mxu0 0.0
      %576 = vmatpush2.msra.mxu0 0.0
      %577 = vmatprep.subr.mxu0 0.0
      %578 = vmatpush2.msra.mxu0 0.0
      %579 = vmatprep.subr.mxu0 0.0
      %580 = vmatpush2.msra.mxu0 0.0
      %581 = vmatprep.subr.mxu0 0.0
      %582 = vmatpush2.msra.mxu0 0.0
      %583 = vmatprep.subr.mxu0 0.0
      %584 = vmatpush2.msra.mxu0 0.0
      %585 = vmatprep.subr.mxu0 0.0
      %586 = vmatpush2.msra.mxu0 0.0
      %587 = vmatprep.subr.mxu0 0.0
      %588 = vmatpush2.msra.mxu0 0.0
      %589 = vmatprep.subr.mxu0 0.0
      %590 = vmatpush2.msra.mxu0 0.0
      %591 = vmatprep.mubr.f32.mxu0 0.0
      %592 = vmatmul.mubr.f32.gmra.mxu0 %v522
      %v593 = vpop.f32.mrf.mxu0
      %v594 = vadd.f32 0.0, %v593
      %v595 = vpop.f32.mrf.mxu0
      %596 = vmatprep.mubr.f32.mxu0 0.0
      %597 = vmatmul.mubr.f32.gmra.mxu0 %v525
      %v598 = vpop.f32.mrf.mxu0
      %v599 = vadd.f32 0.0, %v598
      %v600 = vpop.f32.mrf.mxu0
      %601 = vdwg.mxu0
      %s602 = scalar_lea.vmem %s2, 32
      %v603 = vld [vmem:[%s602] sm:$0xff]
      %v604 = vld [vmem:[%s602 + $0x8] sm:$0xff]
      %v606 = vsel %vm436, %v603, 0
      %v609 = vsel %vm436, %v604, 0
      %611 = vmatprep.subr.mxu0 0.0
      %612 = vmatpush1.msra.mxu0 0.0
      %613 = vmatprep.subr.mxu0 0.0
      %614 = vmatpush1.msra.mxu0 0.0
      %615 = vmatprep.subr.mxu0 0.0
      %616 = vmatpush1.msra.mxu0 0.0
      %617 = vmatprep.subr.mxu0 0.0
      %618 = vmatpush1.msra.mxu0 0.0
      %619 = vmatprep.subr.mxu0 0.0
      %620 = vmatpush1.msra.mxu0 0.0
      %621 = vmatprep.subr.mxu0 0.0
      %622 = vmatpush1.msra.mxu0 0.0
      %623 = vmatprep.subr.mxu0 0.0
      %624 = vmatpush1.msra.mxu0 0.0
      %625 = vmatprep.subr.mxu0 0.0
      %626 = vmatpush1.msra.mxu0 0.0
      %627 = vmatprep.subr.mxu0 0.0
      %628 = vmatpush1.msra.mxu0 0.0
      %629 = vmatprep.subr.mxu0 0.0
      %630 = vmatpush1.msra.mxu0 0.0
      %631 = vmatprep.subr.mxu0 0.0
      %632 = vmatpush1.msra.mxu0 0.0
      %633 = vmatprep.subr.mxu0 0.0
      %634 = vmatpush1.msra.mxu0 0.0
      %635 = vmatprep.subr.mxu0 0.0
      %636 = vmatpush1.msra.mxu0 0.0
      %637 = vmatprep.subr.mxu0 0.0
      %638 = vmatpush1.msra.mxu0 0.0
      %639 = vmatprep.subr.mxu0 0.0
      %640 = vmatpush1.msra.mxu0 %v432
      %641 = vmatprep.subr.mxu0 0.0
      %642 = vmatpush1.msra.mxu0 %v431
      %643 = vmatprep.subr.mxu0 0.0
      %644 = vmatpush2.msra.mxu0 0.0
      %645 = vmatprep.subr.mxu0 0.0
      %646 = vmatpush2.msra.mxu0 0.0
      %647 = vmatprep.subr.mxu0 0.0
      %648 = vmatpush2.msra.mxu0 0.0
      %649 = vmatprep.subr.mxu0 0.0
      %650 = vmatpush2.msra.mxu0 0.0
      %651 = vmatprep.subr.mxu0 0.0
      %652 = vmatpush2.msra.mxu0 0.0
      %653 = vmatprep.subr.mxu0 0.0
      %654 = vmatpush2.msra.mxu0 0.0
      %655 = vmatprep.subr.mxu0 0.0
      %656 = vmatpush2.msra.mxu0 0.0
      %657 = vmatprep.subr.mxu0 0.0
      %658 = vmatpush2.msra.mxu0 0.0
      %659 = vmatprep.subr.mxu0 0.0
      %660 = vmatpush2.msra.mxu0 0.0
      %661 = vmatprep.subr.mxu0 0.0
      %662 = vmatpush2.msra.mxu0 0.0
      %663 = vmatprep.subr.mxu0 0.0
      %664 = vmatpush2.msra.mxu0 0.0
      %665 = vmatprep.subr.mxu0 0.0
      %666 = vmatpush2.msra.mxu0 0.0
      %667 = vmatprep.subr.mxu0 0.0
      %668 = vmatpush2.msra.mxu0 0.0
      %669 = vmatprep.subr.mxu0 0.0
      %670 = vmatpush2.msra.mxu0 0.0
      %671 = vmatprep.subr.mxu0 0.0
      %672 = vmatpush2.msra.mxu0 0.0
      %673 = vmatprep.subr.mxu0 0.0
      %674 = vmatpush2.msra.mxu0 0.0
      %675 = vmatprep.mubr.f32.mxu0 0.0
      %676 = vmatmul.mubr.f32.gmra.mxu0 %v606
      %v677 = vpop.f32.mrf.mxu0
      %v678 = vadd.f32 0.0, %v677
      %v679 = vpop.f32.mrf.mxu0
      %680 = vmatprep.mubr.f32.mxu0 0.0
      %681 = vmatmul.mubr.f32.gmra.mxu0 %v609
      %v682 = vpop.f32.mrf.mxu0
      %v683 = vadd.f32 0.0, %v682
      %v684 = vpop.f32.mrf.mxu0
      %685 = vdwg.mxu0
      %v686 = vld [vmem:[%s5] sm:$0xff]
      %v687 = vld [vmem:[%s5 + $0x8] sm:$0xff]
      %v688 = vld [vmem:[%s5 + $0x10] sm:$0xff]
      %v689 = vld [vmem:[%s5 + $0x18] sm:$0xff]
      %v690 = vld [vmem:[%s5 + $0x20] sm:$0xff]
      %v691 = vld [vmem:[%s5 + $0x28] sm:$0xff]
      %v692 = vld [vmem:[%s5 + $0x30] sm:$0xff]
      %v693 = vld [vmem:[%s5 + $0x38] sm:$0xff]
      %v694 = vld [vmem:[%s5 + $0x40] sm:$0xff]
      %v695 = vld [vmem:[%s5 + $0x48] sm:$0xff]
      %v696 = vld [vmem:[%s5 + $0x50] sm:$0xff]
      %v697 = vld [vmem:[%s5 + $0x58] sm:$0xff]
      %v698 = vld [vmem:[%s5 + $0x60] sm:$0xff]
      %v699 = vld [vmem:[%s5 + $0x68] sm:$0xff]
      %v700 = vld [vmem:[%s5 + $0x70] sm:$0xff]
      %v701 = vld [vmem:[%s5 + $0x78] sm:$0xff]
      %v702 = vld [vmem:[%s5 + $0x80] sm:$0xff]
      %v703 = vld [vmem:[%s5 + $0x88] sm:$0xff]
      %v704 = vld [vmem:[%s5 + $0x90] sm:$0xff]
      %v705 = vld [vmem:[%s5 + $0x98] sm:$0xff]
      %v706 = vld [vmem:[%s5 + $0xa0] sm:$0xff]
      %v707 = vld [vmem:[%s5 + $0xa8] sm:$0xff]
      %v708 = vld [vmem:[%s5 + $0xb0] sm:$0xff]
      %v709 = vld [vmem:[%s5 + $0xb8] sm:$0xff]
      %v710 = vld [vmem:[%s5 + $0xc0] sm:$0xff]
      %v711 = vld [vmem:[%s5 + $0xc8] sm:$0xff]
      %v712 = vld [vmem:[%s5 + $0xd0] sm:$0xff]
      %v713 = vld [vmem:[%s5 + $0xd8] sm:$0xff]
      %v714 = vld [vmem:[%s5 + $0xe0] sm:$0xff]
      %v715 = vld [vmem:[%s5 + $0xe8] sm:$0xff]
      %v716 = vld [vmem:[%s5 + $0xf0] sm:$0xff]
      %v717 = vld [vmem:[%s5 + $0xf8] sm:$0xff]
      %v718 = vld [vmem:[%s5 + $0x100] sm:$0xff]
      %v719 = vld [vmem:[%s5 + $0x108] sm:$0xff]
      %v720 = vld [vmem:[%s5 + $0x110] sm:$0xff]
      %v721 = vld [vmem:[%s5 + $0x118] sm:$0xff]
      %v722 = vld [vmem:[%s5 + $0x120] sm:$0xff]
      %v723 = vld [vmem:[%s5 + $0x128] sm:$0xff]
      %v724 = vld [vmem:[%s5 + $0x130] sm:$0xff]
      %v725 = vld [vmem:[%s5 + $0x138] sm:$0xff]
      %v726 = vld [vmem:[%s5 + $0x140] sm:$0xff]
      %v727 = vld [vmem:[%s5 + $0x148] sm:$0xff]
      %v728 = vld [vmem:[%s5 + $0x150] sm:$0xff]
      %v729 = vld [vmem:[%s5 + $0x158] sm:$0xff]
      %v730 = vld [vmem:[%s5 + $0x160] sm:$0xff]
      %v731 = vld [vmem:[%s5 + $0x168] sm:$0xff]
      %v732 = vld [vmem:[%s5 + $0x170] sm:$0xff]
      %v733 = vld [vmem:[%s5 + $0x178] sm:$0xff]
      %734 = vmatprep.subr.mxu0 0.0
      %735 = vmatpush1.msra.mxu0 %v701
      %736 = vmatprep.subr.mxu0 0.0
      %737 = vmatpush1.msra.mxu0 %v700
      %738 = vmatprep.subr.mxu0 0.0
      %739 = vmatpush1.msra.mxu0 %v699
      %740 = vmatprep.subr.mxu0 0.0
      %741 = vmatpush1.msra.mxu0 %v698
      %742 = vmatprep.subr.mxu0 0.0
      %743 = vmatpush1.msra.mxu0 %v697
      %744 = vmatprep.subr.mxu0 0.0
      %745 = vmatpush1.msra.mxu0 %v696
      %746 = vmatprep.subr.mxu0 0.0
      %747 = vmatpush1.msra.mxu0 %v695
      %748 = vmatprep.subr.mxu0 0.0
      %749 = vmatpush1.msra.mxu0 %v694
      %750 = vmatprep.subr.mxu0 0.0
      %751 = vmatpush1.msra.mxu0 %v693
      %752 = vmatprep.subr.mxu0 0.0
      %753 = vmatpush1.msra.mxu0 %v692
      %754 = vmatprep.subr.mxu0 0.0
      %755 = vmatpush1.msra.mxu0 %v691
      %756 = vmatprep.subr.mxu0 0.0
      %757 = vmatpush1.msra.mxu0 %v690
      %758 = vmatprep.subr.mxu0 0.0
      %759 = vmatpush1.msra.mxu0 %v689
      %760 = vmatprep.subr.mxu0 0.0
      %761 = vmatpush1.msra.mxu0 %v688
      %762 = vmatprep.subr.mxu0 0.0
      %763 = vmatpush1.msra.mxu0 %v687
      %764 = vmatprep.subr.mxu0 0.0
      %765 = vmatpush1.msra.mxu0 %v686
      %766 = vmatprep.subr.mxu0 0.0
      %767 = vmatpush2.msra.mxu0 %v717
      %768 = vmatprep.subr.mxu0 0.0
      %769 = vmatpush2.msra.mxu0 %v716
      %770 = vmatprep.subr.mxu0 0.0
      %771 = vmatpush2.msra.mxu0 %v715
      %772 = vmatprep.subr.mxu0 0.0
      %773 = vmatpush2.msra.mxu0 %v714
      %774 = vmatprep.subr.mxu0 0.0
      %775 = vmatpush2.msra.mxu0 %v713
      %776 = vmatprep.subr.mxu0 0.0
      %777 = vmatpush2.msra.mxu0 %v712
      %778 = vmatprep.subr.mxu0 0.0
      %779 = vmatpush2.msra.mxu0 %v711
      %780 = vmatprep.subr.mxu0 0.0
      %781 = vmatpush2.msra.mxu0 %v710
      %782 = vmatprep.subr.mxu0 0.0
      %783 = vmatpush2.msra.mxu0 %v709
      %784 = vmatprep.subr.mxu0 0.0
      %785 = vmatpush2.msra.mxu0 %v708
      %786 = vmatprep.subr.mxu0 0.0
      %787 = vmatpush2.msra.mxu0 %v707
      %788 = vmatprep.subr.mxu0 0.0
      %789 = vmatpush2.msra.mxu0 %v706
      %790 = vmatprep.subr.mxu0 0.0
      %791 = vmatpush2.msra.mxu0 %v705
      %792 = vmatprep.subr.mxu0 0.0
      %793 = vmatpush2.msra.mxu0 %v704
      %794 = vmatprep.subr.mxu0 0.0
      %795 = vmatpush2.msra.mxu0 %v703
      %796 = vmatprep.subr.mxu0 0.0
      %797 = vmatpush2.msra.mxu0 %v702
      %798 = vmatprep.mubr.f32.mxu0 %v594
      %799 = vmatmul.mubr.f32.gmra.mxu0 %v510
      %v800 = vpop.f32.mrf.mxu0
      %v801 = vadd.f32 0.0, %v800
      %v802 = vpop.f32.mrf.mxu0
      %803 = vmatprep.mubr.f32.mxu0 %v599
      %804 = vmatmul.mubr.f32.gmra.mxu0 %v515
      %v805 = vpop.f32.mrf.mxu0
      %v806 = vadd.f32 0.0, %v805
      %v807 = vpop.f32.mrf.mxu0
      %808 = vdwg.mxu0
      %809 = vmatprep.subr.mxu0 0.0
      %810 = vmatpush1.msra.mxu0 %v733
      %811 = vmatprep.subr.mxu0 0.0
      %812 = vmatpush1.msra.mxu0 %v732
      %813 = vmatprep.subr.mxu0 0.0
      %814 = vmatpush1.msra.mxu0 %v731
      %815 = vmatprep.subr.mxu0 0.0
      %816 = vmatpush1.msra.mxu0 %v730
      %817 = vmatprep.subr.mxu0 0.0
      %818 = vmatpush1.msra.mxu0 %v729
      %819 = vmatprep.subr.mxu0 0.0
      %820 = vmatpush1.msra.mxu0 %v728
      %821 = vmatprep.subr.mxu0 0.0
      %822 = vmatpush1.msra.mxu0 %v727
      %823 = vmatprep.subr.mxu0 0.0
      %824 = vmatpush1.msra.mxu0 %v726
      %825 = vmatprep.subr.mxu0 0.0
      %826 = vmatpush1.msra.mxu0 %v725
      %827 = vmatprep.subr.mxu0 0.0
      %828 = vmatpush1.msra.mxu0 %v724
      %829 = vmatprep.subr.mxu0 0.0
      %830 = vmatpush1.msra.mxu0 %v723
      %831 = vmatprep.subr.mxu0 0.0
      %832 = vmatpush1.msra.mxu0 %v722
      %833 = vmatprep.subr.mxu0 0.0
      %834 = vmatpush1.msra.mxu0 %v721
      %835 = vmatprep.subr.mxu0 0.0
      %836 = vmatpush1.msra.mxu0 %v720
      %837 = vmatprep.subr.mxu0 0.0
      %838 = vmatpush1.msra.mxu0 %v719
      %839 = vmatprep.subr.mxu0 0.0
      %840 = vmatpush1.msra.mxu0 %v718
      %841 = vmatprep.subr.mxu0 0.0
      %842 = vmatpush2.msra.mxu0 0.0
      %843 = vmatprep.subr.mxu0 0.0
      %844 = vmatpush2.msra.mxu0 0.0
      %845 = vmatprep.subr.mxu0 0.0
      %846 = vmatpush2.msra.mxu0 0.0
      %847 = vmatprep.subr.mxu0 0.0
      %848 = vmatpush2.msra.mxu0 0.0
      %849 = vmatprep.subr.mxu0 0.0
      %850 = vmatpush2.msra.mxu0 0.0
      %851 = vmatprep.subr.mxu0 0.0
      %852 = vmatpush2.msra.mxu0 0.0
      %853 = vmatprep.subr.mxu0 0.0
      %854 = vmatpush2.msra.mxu0 0.0
      %855 = vmatprep.subr.mxu0 0.0
      %856 = vmatpush2.msra.mxu0 0.0
      %857 = vmatprep.subr.mxu0 0.0
      %858 = vmatpush2.msra.mxu0 0.0
      %859 = vmatprep.subr.mxu0 0.0
      %860 = vmatpush2.msra.mxu0 0.0
      %861 = vmatprep.subr.mxu0 0.0
      %862 = vmatpush2.msra.mxu0 0.0
      %863 = vmatprep.subr.mxu0 0.0
      %864 = vmatpush2.msra.mxu0 0.0
      %865 = vmatprep.subr.mxu0 0.0
      %866 = vmatpush2.msra.mxu0 0.0
      %867 = vmatprep.subr.mxu0 0.0
      %868 = vmatpush2.msra.mxu0 0.0
      %869 = vmatprep.subr.mxu0 0.0
      %870 = vmatpush2.msra.mxu0 0.0
      %871 = vmatprep.subr.mxu0 0.0
      %872 = vmatpush2.msra.mxu0 0.0
      %873 = vmatprep.mubr.f32.mxu0 0.0
      %874 = vmatmul.mubr.f32.gmra.mxu0 %v678
      %v875 = vpop.f32.mrf.mxu0
      %v876 = vadd.f32 %v801, %v875
      %v877 = vpop.f32.mrf.mxu0
      %878 = vmatprep.mubr.f32.mxu0 0.0
      %879 = vmatmul.mubr.f32.gmra.mxu0 %v683
      %v880 = vpop.f32.mrf.mxu0
      %v881 = vadd.f32 %v806, %v880
      %v882 = vpop.f32.mrf.mxu0
      %883 = vdwg.mxu0
      %v884 = vld [vmem:[%s3] sm:$0xff]
      %vm885 = vcmask 64512
      %v887 = vsel %vm885, %v884, 0
      %889 = vmatprep.subr.mxu0 0.0
      %890 = vmatpush1.msra.mxu0 0.0
      %891 = vmatprep.subr.mxu0 0.0
      %892 = vmatpush1.msra.mxu0 0.0
      %893 = vmatprep.subr.mxu0 0.0
      %894 = vmatpush1.msra.mxu0 0.0
      %895 = vmatprep.subr.mxu0 0.0
      %896 = vmatpush1.msra.mxu0 0.0
      %897 = vmatprep.subr.mxu0 0.0
      %898 = vmatpush1.msra.mxu0 0.0
      %899 = vmatprep.subr.mxu0 0.0
      %900 = vmatpush1.msra.mxu0 0.0
      %901 = vmatprep.subr.mxu0 0.0
      %902 = vmatpush1.msra.mxu0 0.0
      %903 = vmatprep.subr.mxu0 0.0
      %904 = vmatpush1.msra.mxu0 0.0
      %905 = vmatprep.subr.mxu0 0.0
      %906 = vmatpush1.msra.mxu0 0.0
      %907 = vmatprep.subr.mxu0 0.0
      %908 = vmatpush1.msra.mxu0 0.0
      %909 = vmatprep.subr.mxu0 0.0
      %910 = vmatpush1.msra.mxu0 0.0
      %911 = vmatprep.subr.mxu0 0.0
      %912 = vmatpush1.msra.mxu0 0.0
      %913 = vmatprep.subr.mxu0 0.0
      %914 = vmatpush1.msra.mxu0 0.0
      %915 = vmatprep.subr.mxu0 0.0
      %916 = vmatpush1.msra.mxu0 0.0
      %917 = vmatprep.subr.mxu0 0.0
      %918 = vmatpush1.msra.mxu0 0.0
      %919 = vmatprep.subr.mxu0 0.0
      %920 = vmatpush1.msra.mxu0 %v433
      %921 = vmatprep.subr.mxu0 0.0
      %922 = vmatpush2.msra.mxu0 0.0
      %923 = vmatprep.subr.mxu0 0.0
      %924 = vmatpush2.msra.mxu0 0.0
      %925 = vmatprep.subr.mxu0 0.0
      %926 = vmatpush2.msra.mxu0 0.0
      %927 = vmatprep.subr.mxu0 0.0
      %928 = vmatpush2.msra.mxu0 0.0
      %929 = vmatprep.subr.mxu0 0.0
      %930 = vmatpush2.msra.mxu0 0.0
      %931 = vmatprep.subr.mxu0 0.0
      %932 = vmatpush2.msra.mxu0 0.0
      %933 = vmatprep.subr.mxu0 0.0
      %934 = vmatpush2.msra.mxu0 0.0
      %935 = vmatprep.subr.mxu0 0.0
      %936 = vmatpush2.msra.mxu0 0.0
      %937 = vmatprep.subr.mxu0 0.0
      %938 = vmatpush2.msra.mxu0 0.0
      %939 = vmatprep.subr.mxu0 0.0
      %940 = vmatpush2.msra.mxu0 0.0
      %941 = vmatprep.subr.mxu0 0.0
      %942 = vmatpush2.msra.mxu0 0.0
      %943 = vmatprep.subr.mxu0 0.0
      %944 = vmatpush2.msra.mxu0 0.0
      %945 = vmatprep.subr.mxu0 0.0
      %946 = vmatpush2.msra.mxu0 0.0
      %947 = vmatprep.subr.mxu0 0.0
      %948 = vmatpush2.msra.mxu0 0.0
      %949 = vmatprep.subr.mxu0 0.0
      %950 = vmatpush2.msra.mxu0 0.0
      %951 = vmatprep.subr.mxu0 0.0
      %952 = vmatpush2.msra.mxu0 0.0
      %953 = vmatprep.mubr.f32.mxu0 0.0
      %954 = vmatmul.mubr.f32.gmra.mxu0 %v887
      %v955 = vpop.f32.mrf.mxu0
      %v956 = vadd.f32 0.0, %v955
      %v957 = vpop.f32.mrf.mxu0
      %958 = vdwg.mxu0
      %s959 = scalar_lea.vmem %s3, 8
      %v960 = vld [vmem:[%s959] sm:$0xff]
      %v962 = vsel %vm885, %v960, 0
      %964 = vmatprep.subr.mxu0 0.0
      %965 = vmatpush1.msra.mxu0 0.0
      %966 = vmatprep.subr.mxu0 0.0
      %967 = vmatpush1.msra.mxu0 0.0
      %968 = vmatprep.subr.mxu0 0.0
      %969 = vmatpush1.msra.mxu0 0.0
      %970 = vmatprep.subr.mxu0 0.0
      %971 = vmatpush1.msra.mxu0 0.0
      %972 = vmatprep.subr.mxu0 0.0
      %973 = vmatpush1.msra.mxu0 0.0
      %974 = vmatprep.subr.mxu0 0.0
      %975 = vmatpush1.msra.mxu0 0.0
      %976 = vmatprep.subr.mxu0 0.0
      %977 = vmatpush1.msra.mxu0 0.0
      %978 = vmatprep.subr.mxu0 0.0
      %979 = vmatpush1.msra.mxu0 0.0
      %980 = vmatprep.subr.mxu0 0.0
      %981 = vmatpush1.msra.mxu0 0.0
      %982 = vmatprep.subr.mxu0 0.0
      %983 = vmatpush1.msra.mxu0 0.0
      %984 = vmatprep.subr.mxu0 0.0
      %985 = vmatpush1.msra.mxu0 0.0
      %986 = vmatprep.subr.mxu0 0.0
      %987 = vmatpush1.msra.mxu0 0.0
      %988 = vmatprep.subr.mxu0 0.0
      %989 = vmatpush1.msra.mxu0 0.0
      %990 = vmatprep.subr.mxu0 0.0
      %991 = vmatpush1.msra.mxu0 0.0
      %992 = vmatprep.subr.mxu0 0.0
      %993 = vmatpush1.msra.mxu0 0.0
      %994 = vmatprep.subr.mxu0 0.0
      %995 = vmatpush1.msra.mxu0 %v433
      %996 = vmatprep.subr.mxu0 0.0
      %997 = vmatpush2.msra.mxu0 0.0
      %998 = vmatprep.subr.mxu0 0.0
      %999 = vmatpush2.msra.mxu0 0.0
      %1000 = vmatprep.subr.mxu0 0.0
      %1001 = vmatpush2.msra.mxu0 0.0
      %1002 = vmatprep.subr.mxu0 0.0
      %1003 = vmatpush2.msra.mxu0 0.0
      %1004 = vmatprep.subr.mxu0 0.0
      %1005 = vmatpush2.msra.mxu0 0.0
      %1006 = vmatprep.subr.mxu0 0.0
      %1007 = vmatpush2.msra.mxu0 0.0
      %1008 = vmatprep.subr.mxu0 0.0
      %1009 = vmatpush2.msra.mxu0 0.0
      %1010 = vmatprep.subr.mxu0 0.0
      %1011 = vmatpush2.msra.mxu0 0.0
      %1012 = vmatprep.subr.mxu0 0.0
      %1013 = vmatpush2.msra.mxu0 0.0
      %1014 = vmatprep.subr.mxu0 0.0
      %1015 = vmatpush2.msra.mxu0 0.0
      %1016 = vmatprep.subr.mxu0 0.0
      %1017 = vmatpush2.msra.mxu0 0.0
      %1018 = vmatprep.subr.mxu0 0.0
      %1019 = vmatpush2.msra.mxu0 0.0
      %1020 = vmatprep.subr.mxu0 0.0
      %1021 = vmatpush2.msra.mxu0 0.0
      %1022 = vmatprep.subr.mxu0 0.0
      %1023 = vmatpush2.msra.mxu0 0.0
      %1024 = vmatprep.subr.mxu0 0.0
      %1025 = vmatpush2.msra.mxu0 0.0
      %1026 = vmatprep.subr.mxu0 0.0
      %1027 = vmatpush2.msra.mxu0 0.0
      %1028 = vmatprep.mubr.f32.mxu0 0.0
      %1029 = vmatmul.mubr.f32.gmra.mxu0 %v962
      %v1030 = vpop.f32.mrf.mxu0
      %v1031 = vadd.f32 0.0, %v1030
      %v1032 = vpop.f32.mrf.mxu0
      %1033 = vdwg.mxu0
      %s1034 = scalar_lea.vmem %s3, 16
      %v1035 = vld [vmem:[%s1034] sm:$0xff]
      %v1037 = vsel %vm885, %v1035, 0
      %1039 = vmatprep.subr.mxu0 0.0
      %1040 = vmatpush1.msra.mxu0 0.0
      %1041 = vmatprep.subr.mxu0 0.0
      %1042 = vmatpush1.msra.mxu0 0.0
      %1043 = vmatprep.subr.mxu0 0.0
      %1044 = vmatpush1.msra.mxu0 0.0
      %1045 = vmatprep.subr.mxu0 0.0
      %1046 = vmatpush1.msra.mxu0 0.0
      %1047 = vmatprep.subr.mxu0 0.0
      %1048 = vmatpush1.msra.mxu0 0.0
      %1049 = vmatprep.subr.mxu0 0.0
      %1050 = vmatpush1.msra.mxu0 0.0
      %1051 = vmatprep.subr.mxu0 0.0
      %1052 = vmatpush1.msra.mxu0 0.0
      %1053 = vmatprep.subr.mxu0 0.0
      %1054 = vmatpush1.msra.mxu0 0.0
      %1055 = vmatprep.subr.mxu0 0.0
      %1056 = vmatpush1.msra.mxu0 0.0
      %1057 = vmatprep.subr.mxu0 0.0
      %1058 = vmatpush1.msra.mxu0 0.0
      %1059 = vmatprep.subr.mxu0 0.0
      %1060 = vmatpush1.msra.mxu0 0.0
      %1061 = vmatprep.subr.mxu0 0.0
      %1062 = vmatpush1.msra.mxu0 0.0
      %1063 = vmatprep.subr.mxu0 0.0
      %1064 = vmatpush1.msra.mxu0 0.0
      %1065 = vmatprep.subr.mxu0 0.0
      %1066 = vmatpush1.msra.mxu0 0.0
      %1067 = vmatprep.subr.mxu0 0.0
      %1068 = vmatpush1.msra.mxu0 0.0
      %1069 = vmatprep.subr.mxu0 0.0
      %1070 = vmatpush1.msra.mxu0 %v433
      %1071 = vmatprep.subr.mxu0 0.0
      %1072 = vmatpush2.msra.mxu0 0.0
      %1073 = vmatprep.subr.mxu0 0.0
      %1074 = vmatpush2.msra.mxu0 0.0
      %1075 = vmatprep.subr.mxu0 0.0
      %1076 = vmatpush2.msra.mxu0 0.0
      %1077 = vmatprep.subr.mxu0 0.0
      %1078 = vmatpush2.msra.mxu0 0.0
      %1079 = vmatprep.subr.mxu0 0.0
      %1080 = vmatpush2.msra.mxu0 0.0
      %1081 = vmatprep.subr.mxu0 0.0
      %1082 = vmatpush2.msra.mxu0 0.0
      %1083 = vmatprep.subr.mxu0 0.0
      %1084 = vmatpush2.msra.mxu0 0.0
      %1085 = vmatprep.subr.mxu0 0.0
      %1086 = vmatpush2.msra.mxu0 0.0
      %1087 = vmatprep.subr.mxu0 0.0
      %1088 = vmatpush2.msra.mxu0 0.0
      %1089 = vmatprep.subr.mxu0 0.0
      %1090 = vmatpush2.msra.mxu0 0.0
      %1091 = vmatprep.subr.mxu0 0.0
      %1092 = vmatpush2.msra.mxu0 0.0
      %1093 = vmatprep.subr.mxu0 0.0
      %1094 = vmatpush2.msra.mxu0 0.0
      %1095 = vmatprep.subr.mxu0 0.0
      %1096 = vmatpush2.msra.mxu0 0.0
      %1097 = vmatprep.subr.mxu0 0.0
      %1098 = vmatpush2.msra.mxu0 0.0
      %1099 = vmatprep.subr.mxu0 0.0
      %1100 = vmatpush2.msra.mxu0 0.0
      %1101 = vmatprep.subr.mxu0 0.0
      %1102 = vmatpush2.msra.mxu0 0.0
      %1103 = vmatprep.mubr.f32.mxu0 0.0
      %1104 = vmatmul.mubr.f32.gmra.mxu0 %v1037
      %v1105 = vpop.f32.mrf.mxu0
      %v1106 = vadd.f32 0.0, %v1105
      %v1107 = vpop.f32.mrf.mxu0
      %1108 = vdwg.mxu0
      %1110 = vrot.lane.b32.xlu0 %v1031, 64
      %v1111 = vpop.permute.xlu0 %1110
      %vm1113 = vcmask 523264
      %v1114 = vsel %vm1113, %v956, %v1111
      %v1115 = vld [vmem:[%s6] sm:$0xff]
      %v1116 = vld [vmem:[%s6 + $0x8] sm:$0xff]
      %v1117 = vld [vmem:[%s6 + $0x10] sm:$0xff]
      %v1118 = vld [vmem:[%s6 + $0x18] sm:$0xff]
      %v1119 = vld [vmem:[%s6 + $0x20] sm:$0xff]
      %v1120 = vld [vmem:[%s6 + $0x28] sm:$0xff]
      %v1121 = vld [vmem:[%s6 + $0x30] sm:$0xff]
      %v1122 = vld [vmem:[%s6 + $0x38] sm:$0xff]
      %v1123 = vld [vmem:[%s6 + $0x40] sm:$0xff]
      %v1124 = vld [vmem:[%s6 + $0x48] sm:$0xff]
      %v1125 = vld [vmem:[%s6 + $0x50] sm:$0xff]
      %v1126 = vld [vmem:[%s6 + $0x58] sm:$0xff]
      %v1127 = vld [vmem:[%s6 + $0x60] sm:$0xff]
      %v1128 = vld [vmem:[%s6 + $0x68] sm:$0xff]
      %v1129 = vld [vmem:[%s6 + $0x70] sm:$0xff]
      %v1130 = vld [vmem:[%s6 + $0x78] sm:$0xff]
      %v1131 = vld [vmem:[%s6 + $0x80] sm:$0xff]
      %v1132 = vld [vmem:[%s6 + $0x88] sm:$0xff]
      %v1133 = vld [vmem:[%s6 + $0x90] sm:$0xff]
      %v1134 = vld [vmem:[%s6 + $0x98] sm:$0xff]
      %v1135 = vld [vmem:[%s6 + $0xa0] sm:$0xff]
      %v1136 = vld [vmem:[%s6 + $0xa8] sm:$0xff]
      %v1137 = vld [vmem:[%s6 + $0xb0] sm:$0xff]
      %v1138 = vld [vmem:[%s6 + $0xb8] sm:$0xff]
      %v1140 = vsel %vm1113, %v1106, 0
      %1142 = vmatprep.subr.mxu0 0.0
      %1143 = vmatpush1.msra.mxu0 %v1130
      %1144 = vmatprep.subr.mxu0 0.0
      %1145 = vmatpush1.msra.mxu0 %v1129
      %1146 = vmatprep.subr.mxu0 0.0
      %1147 = vmatpush1.msra.mxu0 %v1128
      %1148 = vmatprep.subr.mxu0 0.0
      %1149 = vmatpush1.msra.mxu0 %v1127
      %1150 = vmatprep.subr.mxu0 0.0
      %1151 = vmatpush1.msra.mxu0 %v1126
      %1152 = vmatprep.subr.mxu0 0.0
      %1153 = vmatpush1.msra.mxu0 %v1125
      %1154 = vmatprep.subr.mxu0 0.0
      %1155 = vmatpush1.msra.mxu0 %v1124
      %1156 = vmatprep.subr.mxu0 0.0
      %1157 = vmatpush1.msra.mxu0 %v1123
      %1158 = vmatprep.subr.mxu0 0.0
      %1159 = vmatpush1.msra.mxu0 %v1122
      %1160 = vmatprep.subr.mxu0 0.0
      %1161 = vmatpush1.msra.mxu0 %v1121
      %1162 = vmatprep.subr.mxu0 0.0
      %1163 = vmatpush1.msra.mxu0 %v1120
      %1164 = vmatprep.subr.mxu0 0.0
      %1165 = vmatpush1.msra.mxu0 %v1119
      %1166 = vmatprep.subr.mxu0 0.0
      %1167 = vmatpush1.msra.mxu0 %v1118
      %1168 = vmatprep.subr.mxu0 0.0
      %1169 = vmatpush1.msra.mxu0 %v1117
      %1170 = vmatprep.subr.mxu0 0.0
      %1171 = vmatpush1.msra.mxu0 %v1116
      %1172 = vmatprep.subr.mxu0 0.0
      %1173 = vmatpush1.msra.mxu0 %v1115
      %1174 = vmatprep.subr.mxu0 0.0
      %1175 = vmatpush2.msra.mxu0 0.0
      %1176 = vmatprep.subr.mxu0 0.0
      %1177 = vmatpush2.msra.mxu0 0.0
      %1178 = vmatprep.subr.mxu0 0.0
      %1179 = vmatpush2.msra.mxu0 0.0
      %1180 = vmatprep.subr.mxu0 0.0
      %1181 = vmatpush2.msra.mxu0 0.0
      %1182 = vmatprep.subr.mxu0 0.0
      %1183 = vmatpush2.msra.mxu0 0.0
      %1184 = vmatprep.subr.mxu0 0.0
      %1185 = vmatpush2.msra.mxu0 0.0
      %1186 = vmatprep.subr.mxu0 0.0
      %1187 = vmatpush2.msra.mxu0 0.0
      %1188 = vmatprep.subr.mxu0 0.0
      %1189 = vmatpush2.msra.mxu0 0.0
      %1190 = vmatprep.subr.mxu0 0.0
      %1191 = vmatpush2.msra.mxu0 %v1138
      %1192 = vmatprep.subr.mxu0 0.0
      %1193 = vmatpush2.msra.mxu0 %v1137
      %1194 = vmatprep.subr.mxu0 0.0
      %1195 = vmatpush2.msra.mxu0 %v1136
      %1196 = vmatprep.subr.mxu0 0.0
      %1197 = vmatpush2.msra.mxu0 %v1135
      %1198 = vmatprep.subr.mxu0 0.0
      %1199 = vmatpush2.msra.mxu0 %v1134
      %1200 = vmatprep.subr.mxu0 0.0
      %1201 = vmatpush2.msra.mxu0 %v1133
      %1202 = vmatprep.subr.mxu0 0.0
      %1203 = vmatpush2.msra.mxu0 %v1132
      %1204 = vmatprep.subr.mxu0 0.0
      %1205 = vmatpush2.msra.mxu0 %v1131
      %1206 = vmatprep.mubr.f32.mxu0 %v1140
      %1207 = vmatmul.mubr.f32.gmra.mxu0 %v1114
      %v1208 = vpop.f32.mrf.mxu0
      %v1209 = vadd.f32 0.0, %v1208
      %v1210 = vpop.f32.mrf.mxu0
      %1211 = vdwg.mxu0
      %v1212 = vld [vmem:[%s7] sm:$0xff]
      %v1213 = vld [vmem:[%s7 + $0x8] sm:$0xff]
      %v1214 = vld [vmem:[%s8] sm:$0xff]
      %v1215 = vld [vmem:[%s8 + $0x8] sm:$0xff]
      %v1216 = vld [vmem:[%s8 + $0x10] sm:$0xff]
      %v1217 = vld [vmem:[%s8 + $0x18] sm:$0xff]
      %v1218 = vld [vmem:[%s8 + $0x20] sm:$0xff]
      %v1219 = vld [vmem:[%s8 + $0x28] sm:$0xff]
      %v1220 = vld [vmem:[%s8 + $0x30] sm:$0xff]
      %v1221 = vld [vmem:[%s8 + $0x38] sm:$0xff]
      %v1223 = vsel %vm885, %v1212, 0
      %v1226 = vsel %vm885, %v1213, 0
      %1228 = vmatprep.subr.mxu0 0.0
      %1229 = vmatpush1.msra.mxu0 0.0
      %1230 = vmatprep.subr.mxu0 0.0
      %1231 = vmatpush1.msra.mxu0 0.0
      %1232 = vmatprep.subr.mxu0 0.0
      %1233 = vmatpush1.msra.mxu0 0.0
      %1234 = vmatprep.subr.mxu0 0.0
      %1235 = vmatpush1.msra.mxu0 0.0
      %1236 = vmatprep.subr.mxu0 0.0
      %1237 = vmatpush1.msra.mxu0 0.0
      %1238 = vmatprep.subr.mxu0 0.0
      %1239 = vmatpush1.msra.mxu0 0.0
      %1240 = vmatprep.subr.mxu0 0.0
      %1241 = vmatpush1.msra.mxu0 0.0
      %1242 = vmatprep.subr.mxu0 0.0
      %1243 = vmatpush1.msra.mxu0 0.0
      %1244 = vmatprep.subr.mxu0 0.0
      %1245 = vmatpush1.msra.mxu0 0.0
      %1246 = vmatprep.subr.mxu0 0.0
      %1247 = vmatpush1.msra.mxu0 0.0
      %1248 = vmatprep.subr.mxu0 0.0
      %1249 = vmatpush1.msra.mxu0 0.0
      %1250 = vmatprep.subr.mxu0 0.0
      %1251 = vmatpush1.msra.mxu0 0.0
      %1252 = vmatprep.subr.mxu0 0.0
      %1253 = vmatpush1.msra.mxu0 0.0
      %1254 = vmatprep.subr.mxu0 0.0
      %1255 = vmatpush1.msra.mxu0 0.0
      %1256 = vmatprep.subr.mxu0 0.0
      %1257 = vmatpush1.msra.mxu0 0.0
      %1258 = vmatprep.subr.mxu0 0.0
      %1259 = vmatpush1.msra.mxu0 %v433
      %1260 = vmatprep.subr.mxu0 0.0
      %1261 = vmatpush2.msra.mxu0 0.0
      %1262 = vmatprep.subr.mxu0 0.0
      %1263 = vmatpush2.msra.mxu0 0.0
      %1264 = vmatprep.subr.mxu0 0.0
      %1265 = vmatpush2.msra.mxu0 0.0
      %1266 = vmatprep.subr.mxu0 0.0
      %1267 = vmatpush2.msra.mxu0 0.0
      %1268 = vmatprep.subr.mxu0 0.0
      %1269 = vmatpush2.msra.mxu0 0.0
      %1270 = vmatprep.subr.mxu0 0.0
      %1271 = vmatpush2.msra.mxu0 0.0
      %1272 = vmatprep.subr.mxu0 0.0
      %1273 = vmatpush2.msra.mxu0 0.0
      %1274 = vmatprep.subr.mxu0 0.0
      %1275 = vmatpush2.msra.mxu0 0.0
      %1276 = vmatprep.subr.mxu0 0.0
      %1277 = vmatpush2.msra.mxu0 0.0
      %1278 = vmatprep.subr.mxu0 0.0
      %1279 = vmatpush2.msra.mxu0 0.0
      %1280 = vmatprep.subr.mxu0 0.0
      %1281 = vmatpush2.msra.mxu0 0.0
      %1282 = vmatprep.subr.mxu0 0.0
      %1283 = vmatpush2.msra.mxu0 0.0
      %1284 = vmatprep.subr.mxu0 0.0
      %1285 = vmatpush2.msra.mxu0 0.0
      %1286 = vmatprep.subr.mxu0 0.0
      %1287 = vmatpush2.msra.mxu0 0.0
      %1288 = vmatprep.subr.mxu0 0.0
      %1289 = vmatpush2.msra.mxu0 0.0
      %1290 = vmatprep.subr.mxu0 0.0
      %1291 = vmatpush2.msra.mxu0 0.0
      %1292 = vmatprep.mubr.f32.mxu0 0.0
      %1293 = vmatmul.mubr.f32.gmra.mxu0 %v1223
      %v1294 = vpop.f32.mrf.mxu0
      %v1295 = vadd.f32 0.0, %v1294
      %v1296 = vpop.f32.mrf.mxu0
      %1297 = vmatprep.mubr.f32.mxu0 0.0
      %1298 = vmatmul.mubr.f32.gmra.mxu0 %v1226
      %v1299 = vpop.f32.mrf.mxu0
      %v1300 = vadd.f32 0.0, %v1299
      %v1301 = vpop.f32.mrf.mxu0
      %1302 = vdwg.mxu0
      %v1304 = vsel %vm1113, %v1295, 0
      %v1307 = vsel %vm1113, %v1300, 0
      %1309 = vmatprep.subr.mxu0 0.0
      %1310 = vmatpush1.msra.mxu0 0.0
      %1311 = vmatprep.subr.mxu0 0.0
      %1312 = vmatpush1.msra.mxu0 0.0
      %1313 = vmatprep.subr.mxu0 0.0
      %1314 = vmatpush1.msra.mxu0 0.0
      %1315 = vmatprep.subr.mxu0 0.0
      %1316 = vmatpush1.msra.mxu0 0.0
      %1317 = vmatprep.subr.mxu0 0.0
      %1318 = vmatpush1.msra.mxu0 0.0
      %1319 = vmatprep.subr.mxu0 0.0
      %1320 = vmatpush1.msra.mxu0 0.0
      %1321 = vmatprep.subr.mxu0 0.0
      %1322 = vmatpush1.msra.mxu0 0.0
      %1323 = vmatprep.subr.mxu0 0.0
      %1324 = vmatpush1.msra.mxu0 0.0
      %1325 = vmatprep.subr.mxu0 0.0
      %1326 = vmatpush1.msra.mxu0 %v1221
      %1327 = vmatprep.subr.mxu0 0.0
      %1328 = vmatpush1.msra.mxu0 %v1220
      %1329 = vmatprep.subr.mxu0 0.0
      %1330 = vmatpush1.msra.mxu0 %v1219
      %1331 = vmatprep.subr.mxu0 0.0
      %1332 = vmatpush1.msra.mxu0 %v1218
      %1333 = vmatprep.subr.mxu0 0.0
      %1334 = vmatpush1.msra.mxu0 %v1217
      %1335 = vmatprep.subr.mxu0 0.0
      %1336 = vmatpush1.msra.mxu0 %v1216
      %1337 = vmatprep.subr.mxu0 0.0
      %1338 = vmatpush1.msra.mxu0 %v1215
      %1339 = vmatprep.subr.mxu0 0.0
      %1340 = vmatpush1.msra.mxu0 %v1214
      %1341 = vmatprep.subr.mxu0 0.0
      %1342 = vmatpush2.msra.mxu0 0.0
      %1343 = vmatprep.subr.mxu0 0.0
      %1344 = vmatpush2.msra.mxu0 0.0
      %1345 = vmatprep.subr.mxu0 0.0
      %1346 = vmatpush2.msra.mxu0 0.0
      %1347 = vmatprep.subr.mxu0 0.0
      %1348 = vmatpush2.msra.mxu0 0.0
      %1349 = vmatprep.subr.mxu0 0.0
      %1350 = vmatpush2.msra.mxu0 0.0
      %1351 = vmatprep.subr.mxu0 0.0
      %1352 = vmatpush2.msra.mxu0 0.0
      %1353 = vmatprep.subr.mxu0 0.0
      %1354 = vmatpush2.msra.mxu0 0.0
      %1355 = vmatprep.subr.mxu0 0.0
      %1356 = vmatpush2.msra.mxu0 0.0
      %1357 = vmatprep.subr.mxu0 0.0
      %1358 = vmatpush2.msra.mxu0 0.0
      %1359 = vmatprep.subr.mxu0 0.0
      %1360 = vmatpush2.msra.mxu0 0.0
      %1361 = vmatprep.subr.mxu0 0.0
      %1362 = vmatpush2.msra.mxu0 0.0
      %1363 = vmatprep.subr.mxu0 0.0
      %1364 = vmatpush2.msra.mxu0 0.0
      %1365 = vmatprep.subr.mxu0 0.0
      %1366 = vmatpush2.msra.mxu0 0.0
      %1367 = vmatprep.subr.mxu0 0.0
      %1368 = vmatpush2.msra.mxu0 0.0
      %1369 = vmatprep.subr.mxu0 0.0
      %1370 = vmatpush2.msra.mxu0 0.0
      %1371 = vmatprep.subr.mxu0 0.0
      %1372 = vmatpush2.msra.mxu0 0.0
      %1373 = vmatprep.mubr.f32.mxu0 0.0
      %1374 = vmatmul.mubr.f32.gmra.mxu0 %v1304
      %v1375 = vpop.f32.mrf.mxu0
      %v1376 = vadd.f32 0.0, %v1375
      %v1377 = vpop.f32.mrf.mxu0
      %1378 = vmatprep.mubr.f32.mxu0 0.0
      %1379 = vmatmul.mubr.f32.gmra.mxu0 %v1307
      %v1380 = vpop.f32.mrf.mxu0
      %v1381 = vadd.f32 0.0, %v1380
      %v1382 = vpop.f32.mrf.mxu0
      %1383 = vdwg.mxu0
      %1384 = vmatprep.subr.mxu0 0.0
      %1385 = vmatpush1.msra.mxu0 0.0
      %1386 = vmatprep.subr.mxu0 0.0
      %1387 = vmatpush1.msra.mxu0 0.0
      %1388 = vmatprep.subr.mxu0 0.0
      %1389 = vmatpush1.msra.mxu0 0.0
      %1390 = vmatprep.subr.mxu0 0.0
      %1391 = vmatpush1.msra.mxu0 0.0
      %1392 = vmatprep.subr.mxu0 0.0
      %1393 = vmatpush1.msra.mxu0 0.0
      %1394 = vmatprep.subr.mxu0 0.0
      %1395 = vmatpush1.msra.mxu0 0.0
      %1396 = vmatprep.subr.mxu0 0.0
      %1397 = vmatpush1.msra.mxu0 0.0
      %1398 = vmatprep.subr.mxu0 0.0
      %1399 = vmatpush1.msra.mxu0 0.0
      %1400 = vmatprep.subr.mxu0 0.0
      %1401 = vmatpush1.msra.mxu0 0.0
      %1402 = vmatprep.subr.mxu0 0.0
      %1403 = vmatpush1.msra.mxu0 0.0
      %1404 = vmatprep.subr.mxu0 0.0
      %1405 = vmatpush1.msra.mxu0 0.0
      %1406 = vmatprep.subr.mxu0 0.0
      %1407 = vmatpush1.msra.mxu0 0.0
      %1408 = vmatprep.subr.mxu0 0.0
      %1409 = vmatpush1.msra.mxu0 0.0
      %1410 = vmatprep.subr.mxu0 0.0
      %1411 = vmatpush1.msra.mxu0 0.0
      %1412 = vmatprep.subr.mxu0 0.0
      %1413 = vmatpush1.msra.mxu0 0.0
      %1414 = vmatprep.subr.mxu0 0.0
      %1415 = vmatpush1.msra.mxu0 %v1209
      %1416 = vmatprep.subr.mxu0 0.0
      %1417 = vmatpush2.msra.mxu0 0.0
      %1418 = vmatprep.subr.mxu0 0.0
      %1419 = vmatpush2.msra.mxu0 0.0
      %1420 = vmatprep.subr.mxu0 0.0
      %1421 = vmatpush2.msra.mxu0 0.0
      %1422 = vmatprep.subr.mxu0 0.0
      %1423 = vmatpush2.msra.mxu0 0.0
      %1424 = vmatprep.subr.mxu0 0.0
      %1425 = vmatpush2.msra.mxu0 0.0
      %1426 = vmatprep.subr.mxu0 0.0
      %1427 = vmatpush2.msra.mxu0 0.0
      %1428 = vmatprep.subr.mxu0 0.0
      %1429 = vmatpush2.msra.mxu0 0.0
      %1430 = vmatprep.subr.mxu0 0.0
      %1431 = vmatpush2.msra.mxu0 0.0
      %1432 = vmatprep.subr.mxu0 0.0
      %1433 = vmatpush2.msra.mxu0 0.0
      %1434 = vmatprep.subr.mxu0 0.0
      %1435 = vmatpush2.msra.mxu0 0.0
      %1436 = vmatprep.subr.mxu0 0.0
      %1437 = vmatpush2.msra.mxu0 0.0
      %1438 = vmatprep.subr.mxu0 0.0
      %1439 = vmatpush2.msra.mxu0 0.0
      %1440 = vmatprep.subr.mxu0 0.0
      %1441 = vmatpush2.msra.mxu0 0.0
      %1442 = vmatprep.subr.mxu0 0.0
      %1443 = vmatpush2.msra.mxu0 0.0
      %1444 = vmatprep.subr.mxu0 0.0
      %1445 = vmatpush2.msra.mxu0 0.0
      %1446 = vmatprep.subr.mxu0 0.0
      %1447 = vmatpush2.msra.mxu0 0.0
      %1448 = vmatprep.mubr.f32.mxu0 0.0
      %1449 = vmatmul.mubr.f32.gmra.mxu0 %v1223
      %v1450 = vpop.f32.mrf.mxu0
      %v1451 = vadd.f32 0.0, %v1450
      %v1452 = vpop.f32.mrf.mxu0
      %1453 = vmatprep.mubr.f32.mxu0 0.0
      %1454 = vmatmul.mubr.f32.gmra.mxu0 %v1226
      %v1455 = vpop.f32.mrf.mxu0
      %v1456 = vadd.f32 0.0, %v1455
      %v1457 = vpop.f32.mrf.mxu0
      %1458 = vdwg.mxu0
      %v1460 = vsel %vm1113, %v1451, 0
      %v1463 = vsel %vm1113, %v1456, 0
      %1465 = vmatprep.subr.mxu0 0.0
      %1466 = vmatpush1.msra.mxu0 0.0
      %1467 = vmatprep.subr.mxu0 0.0
      %1468 = vmatpush1.msra.mxu0 0.0
      %1469 = vmatprep.subr.mxu0 0.0
      %1470 = vmatpush1.msra.mxu0 0.0
      %1471 = vmatprep.subr.mxu0 0.0
      %1472 = vmatpush1.msra.mxu0 0.0
      %1473 = vmatprep.subr.mxu0 0.0
      %1474 = vmatpush1.msra.mxu0 0.0
      %1475 = vmatprep.subr.mxu0 0.0
      %1476 = vmatpush1.msra.mxu0 0.0
      %1477 = vmatprep.subr.mxu0 0.0
      %1478 = vmatpush1.msra.mxu0 0.0
      %1479 = vmatprep.subr.mxu0 0.0
      %1480 = vmatpush1.msra.mxu0 0.0
      %1481 = vmatprep.subr.mxu0 0.0
      %1482 = vmatpush1.msra.mxu0 %v1221
      %1483 = vmatprep.subr.mxu0 0.0
      %1484 = vmatpush1.msra.mxu0 %v1220
      %1485 = vmatprep.subr.mxu0 0.0
      %1486 = vmatpush1.msra.mxu0 %v1219
      %1487 = vmatprep.subr.mxu0 0.0
      %1488 = vmatpush1.msra.mxu0 %v1218
      %1489 = vmatprep.subr.mxu0 0.0
      %1490 = vmatpush1.msra.mxu0 %v1217
      %1491 = vmatprep.subr.mxu0 0.0
      %1492 = vmatpush1.msra.mxu0 %v1216
      %1493 = vmatprep.subr.mxu0 0.0
      %1494 = vmatpush1.msra.mxu0 %v1215
      %1495 = vmatprep.subr.mxu0 0.0
      %1496 = vmatpush1.msra.mxu0 %v1214
      %1497 = vmatprep.subr.mxu0 0.0
      %1498 = vmatpush2.msra.mxu0 0.0
      %1499 = vmatprep.subr.mxu0 0.0
      %1500 = vmatpush2.msra.mxu0 0.0
      %1501 = vmatprep.subr.mxu0 0.0
      %1502 = vmatpush2.msra.mxu0 0.0
      %1503 = vmatprep.subr.mxu0 0.0
      %1504 = vmatpush2.msra.mxu0 0.0
      %1505 = vmatprep.subr.mxu0 0.0
      %1506 = vmatpush2.msra.mxu0 0.0
      %1507 = vmatprep.subr.mxu0 0.0
      %1508 = vmatpush2.msra.mxu0 0.0
      %1509 = vmatprep.subr.mxu0 0.0
      %1510 = vmatpush2.msra.mxu0 0.0
      %1511 = vmatprep.subr.mxu0 0.0
      %1512 = vmatpush2.msra.mxu0 0.0
      %1513 = vmatprep.subr.mxu0 0.0
      %1514 = vmatpush2.msra.mxu0 0.0
      %1515 = vmatprep.subr.mxu0 0.0
      %1516 = vmatpush2.msra.mxu0 0.0
      %1517 = vmatprep.subr.mxu0 0.0
      %1518 = vmatpush2.msra.mxu0 0.0
      %1519 = vmatprep.subr.mxu0 0.0
      %1520 = vmatpush2.msra.mxu0 0.0
      %1521 = vmatprep.subr.mxu0 0.0
      %1522 = vmatpush2.msra.mxu0 0.0
      %1523 = vmatprep.subr.mxu0 0.0
      %1524 = vmatpush2.msra.mxu0 0.0
      %1525 = vmatprep.subr.mxu0 0.0
      %1526 = vmatpush2.msra.mxu0 0.0
      %1527 = vmatprep.subr.mxu0 0.0
      %1528 = vmatpush2.msra.mxu0 0.0
      %1529 = vmatprep.mubr.f32.mxu0 0.0
      %1530 = vmatmul.mubr.f32.gmra.mxu0 %v1460
      %v1531 = vpop.f32.mrf.mxu0
      %v1532 = vadd.f32 0.0, %v1531
      %v1533 = vpop.f32.mrf.mxu0
      %1534 = vmatprep.mubr.f32.mxu0 0.0
      %1535 = vmatmul.mubr.f32.gmra.mxu0 %v1463
      %v1536 = vpop.f32.mrf.mxu0
      %v1537 = vadd.f32 0.0, %v1536
      %v1538 = vpop.f32.mrf.mxu0
      %1539 = vdwg.mxu0
      %v1540 = vld [vmem:[%s4] sm:$0xff]
      %v1541 = vld [vmem:[%s4 + $0x8] sm:$0xff]
      %v1543 = vsel %vm436, %v1540, 0
      %v1546 = vsel %vm436, %v1541, 0
      %1548 = vmatprep.subr.mxu0 0.0
      %1549 = vmatpush1.msra.mxu0 0.0
      %1550 = vmatprep.subr.mxu0 0.0
      %1551 = vmatpush1.msra.mxu0 0.0
      %1552 = vmatprep.subr.mxu0 0.0
      %1553 = vmatpush1.msra.mxu0 0.0
      %1554 = vmatprep.subr.mxu0 0.0
      %1555 = vmatpush1.msra.mxu0 0.0
      %1556 = vmatprep.subr.mxu0 0.0
      %1557 = vmatpush1.msra.mxu0 0.0
      %1558 = vmatprep.subr.mxu0 0.0
      %1559 = vmatpush1.msra.mxu0 0.0
      %1560 = vmatprep.subr.mxu0 0.0
      %1561 = vmatpush1.msra.mxu0 0.0
      %1562 = vmatprep.subr.mxu0 0.0
      %1563 = vmatpush1.msra.mxu0 0.0
      %1564 = vmatprep.subr.mxu0 0.0
      %1565 = vmatpush1.msra.mxu0 0.0
      %1566 = vmatprep.subr.mxu0 0.0
      %1567 = vmatpush1.msra.mxu0 0.0
      %1568 = vmatprep.subr.mxu0 0.0
      %1569 = vmatpush1.msra.mxu0 0.0
      %1570 = vmatprep.subr.mxu0 0.0
      %1571 = vmatpush1.msra.mxu0 0.0
      %1572 = vmatprep.subr.mxu0 0.0
      %1573 = vmatpush1.msra.mxu0 0.0
      %1574 = vmatprep.subr.mxu0 0.0
      %1575 = vmatpush1.msra.mxu0 0.0
      %1576 = vmatprep.subr.mxu0 0.0
      %1577 = vmatpush1.msra.mxu0 %v881
      %1578 = vmatprep.subr.mxu0 0.0
      %1579 = vmatpush1.msra.mxu0 %v876
      %1580 = vmatprep.subr.mxu0 0.0
      %1581 = vmatpush2.msra.mxu0 0.0
      %1582 = vmatprep.subr.mxu0 0.0
      %1583 = vmatpush2.msra.mxu0 0.0
      %1584 = vmatprep.subr.mxu0 0.0
      %1585 = vmatpush2.msra.mxu0 0.0
      %1586 = vmatprep.subr.mxu0 0.0
      %1587 = vmatpush2.msra.mxu0 0.0
      %1588 = vmatprep.subr.mxu0 0.0
      %1589 = vmatpush2.msra.mxu0 0.0
      %1590 = vmatprep.subr.mxu0 0.0
      %1591 = vmatpush2.msra.mxu0 0.0
      %1592 = vmatprep.subr.mxu0 0.0
      %1593 = vmatpush2.msra.mxu0 0.0
      %1594 = vmatprep.subr.mxu0 0.0
      %1595 = vmatpush2.msra.mxu0 0.0
      %1596 = vmatprep.subr.mxu0 0.0
      %1597 = vmatpush2.msra.mxu0 0.0
      %1598 = vmatprep.subr.mxu0 0.0
      %1599 = vmatpush2.msra.mxu0 0.0
      %1600 = vmatprep.subr.mxu0 0.0
      %1601 = vmatpush2.msra.mxu0 0.0
      %1602 = vmatprep.subr.mxu0 0.0
      %1603 = vmatpush2.msra.mxu0 0.0
      %1604 = vmatprep.subr.mxu0 0.0
      %1605 = vmatpush2.msra.mxu0 0.0
      %1606 = vmatprep.subr.mxu0 0.0
      %1607 = vmatpush2.msra.mxu0 0.0
      %1608 = vmatprep.subr.mxu0 0.0
      %1609 = vmatpush2.msra.mxu0 0.0
      %1610 = vmatprep.subr.mxu0 0.0
      %1611 = vmatpush2.msra.mxu0 0.0
      %1612 = vmatprep.mubr.f32.mxu0 0.0
      %1613 = vmatmul.mubr.f32.gmra.mxu0 %v1543
      %v1614 = vpop.f32.mrf.mxu0
      %v1615 = vadd.f32 0.0, %v1614
      %v1616 = vpop.f32.mrf.mxu0
      %1617 = vmatprep.mubr.f32.mxu0 0.0
      %1618 = vmatmul.mubr.f32.gmra.mxu0 %v1546
      %v1619 = vpop.f32.mrf.mxu0
      %v1620 = vadd.f32 0.0, %v1619
      %v1621 = vpop.f32.mrf.mxu0
      %1622 = vdwg.mxu0
      %s1623 = scalar_lea.vmem %s4, 16
      %v1624 = vld [vmem:[%s1623] sm:$0xff]
      %v1625 = vld [vmem:[%s1623 + $0x8] sm:$0xff]
      %v1627 = vsel %vm436, %v1624, 0
      %v1630 = vsel %vm436, %v1625, 0
      %1632 = vmatprep.subr.mxu0 0.0
      %1633 = vmatpush1.msra.mxu0 0.0
      %1634 = vmatprep.subr.mxu0 0.0
      %1635 = vmatpush1.msra.mxu0 0.0
      %1636 = vmatprep.subr.mxu0 0.0
      %1637 = vmatpush1.msra.mxu0 0.0
      %1638 = vmatprep.subr.mxu0 0.0
      %1639 = vmatpush1.msra.mxu0 0.0
      %1640 = vmatprep.subr.mxu0 0.0
      %1641 = vmatpush1.msra.mxu0 0.0
      %1642 = vmatprep.subr.mxu0 0.0
      %1643 = vmatpush1.msra.mxu0 0.0
      %1644 = vmatprep.subr.mxu0 0.0
      %1645 = vmatpush1.msra.mxu0 0.0
      %1646 = vmatprep.subr.mxu0 0.0
      %1647 = vmatpush1.msra.mxu0 0.0
      %1648 = vmatprep.subr.mxu0 0.0
      %1649 = vmatpush1.msra.mxu0 0.0
      %1650 = vmatprep.subr.mxu0 0.0
      %1651 = vmatpush1.msra.mxu0 0.0
      %1652 = vmatprep.subr.mxu0 0.0
      %1653 = vmatpush1.msra.mxu0 0.0
      %1654 = vmatprep.subr.mxu0 0.0
      %1655 = vmatpush1.msra.mxu0 0.0
      %1656 = vmatprep.subr.mxu0 0.0
      %1657 = vmatpush1.msra.mxu0 0.0
      %1658 = vmatprep.subr.mxu0 0.0
      %1659 = vmatpush1.msra.mxu0 0.0
      %1660 = vmatprep.subr.mxu0 0.0
      %1661 = vmatpush1.msra.mxu0 %v881
      %1662 = vmatprep.subr.mxu0 0.0
      %1663 = vmatpush1.msra.mxu0 %v876
      %1664 = vmatprep.subr.mxu0 0.0
      %1665 = vmatpush2.msra.mxu0 0.0
      %1666 = vmatprep.subr.mxu0 0.0
      %1667 = vmatpush2.msra.mxu0 0.0
      %1668 = vmatprep.subr.mxu0 0.0
      %1669 = vmatpush2.msra.mxu0 0.0
      %1670 = vmatprep.subr.mxu0 0.0
      %1671 = vmatpush2.msra.mxu0 0.0
      %1672 = vmatprep.subr.mxu0 0.0
      %1673 = vmatpush2.msra.mxu0 0.0
      %1674 = vmatprep.subr.mxu0 0.0
      %1675 = vmatpush2.msra.mxu0 0.0
      %1676 = vmatprep.subr.mxu0 0.0
      %1677 = vmatpush2.msra.mxu0 0.0
      %1678 = vmatprep.subr.mxu0 0.0
      %1679 = vmatpush2.msra.mxu0 0.0
      %1680 = vmatprep.subr.mxu0 0.0
      %1681 = vmatpush2.msra.mxu0 0.0
      %1682 = vmatprep.subr.mxu0 0.0
      %1683 = vmatpush2.msra.mxu0 0.0
      %1684 = vmatprep.subr.mxu0 0.0
      %1685 = vmatpush2.msra.mxu0 0.0
      %1686 = vmatprep.subr.mxu0 0.0
      %1687 = vmatpush2.msra.mxu0 0.0
      %1688 = vmatprep.subr.mxu0 0.0
      %1689 = vmatpush2.msra.mxu0 0.0
      %1690 = vmatprep.subr.mxu0 0.0
      %1691 = vmatpush2.msra.mxu0 0.0
      %1692 = vmatprep.subr.mxu0 0.0
      %1693 = vmatpush2.msra.mxu0 0.0
      %1694 = vmatprep.subr.mxu0 0.0
      %1695 = vmatpush2.msra.mxu0 0.0
      %1696 = vmatprep.mubr.f32.mxu0 0.0
      %1697 = vmatmul.mubr.f32.gmra.mxu0 %v1627
      %v1698 = vpop.f32.mrf.mxu0
      %v1699 = vadd.f32 0.0, %v1698
      %v1700 = vpop.f32.mrf.mxu0
      %1701 = vmatprep.mubr.f32.mxu0 0.0
      %1702 = vmatmul.mubr.f32.gmra.mxu0 %v1630
      %v1703 = vpop.f32.mrf.mxu0
      %v1704 = vadd.f32 0.0, %v1703
      %v1705 = vpop.f32.mrf.mxu0
      %1706 = vdwg.mxu0
      %s1707 = scalar_lea.vmem %s4, 32
      %v1708 = vld [vmem:[%s1707] sm:$0xff]
      %v1709 = vld [vmem:[%s1707 + $0x8] sm:$0xff]
      %v1711 = vsel %vm436, %v1708, 0
      %v1714 = vsel %vm436, %v1709, 0
      %1716 = vmatprep.subr.mxu0 0.0
      %1717 = vmatpush1.msra.mxu0 0.0
      %1718 = vmatprep.subr.mxu0 0.0
      %1719 = vmatpush1.msra.mxu0 0.0
      %1720 = vmatprep.subr.mxu0 0.0
      %1721 = vmatpush1.msra.mxu0 0.0
      %1722 = vmatprep.subr.mxu0 0.0
      %1723 = vmatpush1.msra.mxu0 0.0
      %1724 = vmatprep.subr.mxu0 0.0
      %1725 = vmatpush1.msra.mxu0 0.0
      %1726 = vmatprep.subr.mxu0 0.0
      %1727 = vmatpush1.msra.mxu0 0.0
      %1728 = vmatprep.subr.mxu0 0.0
      %1729 = vmatpush1.msra.mxu0 0.0
      %1730 = vmatprep.subr.mxu0 0.0
      %1731 = vmatpush1.msra.mxu0 0.0
      %1732 = vmatprep.subr.mxu0 0.0
      %1733 = vmatpush1.msra.mxu0 0.0
      %1734 = vmatprep.subr.mxu0 0.0
      %1735 = vmatpush1.msra.mxu0 0.0
      %1736 = vmatprep.subr.mxu0 0.0
      %1737 = vmatpush1.msra.mxu0 0.0
      %1738 = vmatprep.subr.mxu0 0.0
      %1739 = vmatpush1.msra.mxu0 0.0
      %1740 = vmatprep.subr.mxu0 0.0
      %1741 = vmatpush1.msra.mxu0 0.0
      %1742 = vmatprep.subr.mxu0 0.0
      %1743 = vmatpush1.msra.mxu0 0.0
      %1744 = vmatprep.subr.mxu0 0.0
      %1745 = vmatpush1.msra.mxu0 %v881
      %1746 = vmatprep.subr.mxu0 0.0
      %1747 = vmatpush1.msra.mxu0 %v876
      %1748 = vmatprep.subr.mxu0 0.0
      %1749 = vmatpush2.msra.mxu0 0.0
      %1750 = vmatprep.subr.mxu0 0.0
      %1751 = vmatpush2.msra.mxu0 0.0
      %1752 = vmatprep.subr.mxu0 0.0
      %1753 = vmatpush2.msra.mxu0 0.0
      %1754 = vmatprep.subr.mxu0 0.0
      %1755 = vmatpush2.msra.mxu0 0.0
      %1756 = vmatprep.subr.mxu0 0.0
      %1757 = vmatpush2.msra.mxu0 0.0
      %1758 = vmatprep.subr.mxu0 0.0
      %1759 = vmatpush2.msra.mxu0 0.0
      %1760 = vmatprep.subr.mxu0 0.0
      %1761 = vmatpush2.msra.mxu0 0.0
      %1762 = vmatprep.subr.mxu0 0.0
      %1763 = vmatpush2.msra.mxu0 0.0
      %1764 = vmatprep.subr.mxu0 0.0
      %1765 = vmatpush2.msra.mxu0 0.0
      %1766 = vmatprep.subr.mxu0 0.0
      %1767 = vmatpush2.msra.mxu0 0.0
      %1768 = vmatprep.subr.mxu0 0.0
      %1769 = vmatpush2.msra.mxu0 0.0
      %1770 = vmatprep.subr.mxu0 0.0
      %1771 = vmatpush2.msra.mxu0 0.0
      %1772 = vmatprep.subr.mxu0 0.0
      %1773 = vmatpush2.msra.mxu0 0.0
      %1774 = vmatprep.subr.mxu0 0.0
      %1775 = vmatpush2.msra.mxu0 0.0
      %1776 = vmatprep.subr.mxu0 0.0
      %1777 = vmatpush2.msra.mxu0 0.0
      %1778 = vmatprep.subr.mxu0 0.0
      %1779 = vmatpush2.msra.mxu0 0.0
      %1780 = vmatprep.mubr.f32.mxu0 0.0
      %1781 = vmatmul.mubr.f32.gmra.mxu0 %v1711
      %v1782 = vpop.f32.mrf.mxu0
      %v1783 = vadd.f32 0.0, %v1782
      %v1784 = vpop.f32.mrf.mxu0
      %1785 = vmatprep.mubr.f32.mxu0 0.0
      %1786 = vmatmul.mubr.f32.gmra.mxu0 %v1714
      %v1787 = vpop.f32.mrf.mxu0
      %v1788 = vadd.f32 0.0, %v1787
      %v1789 = vpop.f32.mrf.mxu0
      %1790 = vdwg.mxu0
      %1791 = vmatprep.subr.mxu0 0.0
      %1792 = vmatpush1.msra.mxu0 0.0
      %1793 = vmatprep.subr.mxu0 0.0
      %1794 = vmatpush1.msra.mxu0 0.0
      %1795 = vmatprep.subr.mxu0 0.0
      %1796 = vmatpush1.msra.mxu0 0.0
      %1797 = vmatprep.subr.mxu0 0.0
      %1798 = vmatpush1.msra.mxu0 0.0
      %1799 = vmatprep.subr.mxu0 0.0
      %1800 = vmatpush1.msra.mxu0 0.0
      %1801 = vmatprep.subr.mxu0 0.0
      %1802 = vmatpush1.msra.mxu0 0.0
      %1803 = vmatprep.subr.mxu0 0.0
      %1804 = vmatpush1.msra.mxu0 0.0
      %1805 = vmatprep.subr.mxu0 0.0
      %1806 = vmatpush1.msra.mxu0 0.0
      %1807 = vmatprep.subr.mxu0 0.0
      %1808 = vmatpush1.msra.mxu0 0.0
      %1809 = vmatprep.subr.mxu0 0.0
      %1810 = vmatpush1.msra.mxu0 0.0
      %1811 = vmatprep.subr.mxu0 0.0
      %1812 = vmatpush1.msra.mxu0 0.0
      %1813 = vmatprep.subr.mxu0 0.0
      %1814 = vmatpush1.msra.mxu0 0.0
      %1815 = vmatprep.subr.mxu0 0.0
      %1816 = vmatpush1.msra.mxu0 0.0
      %1817 = vmatprep.subr.mxu0 0.0
      %1818 = vmatpush1.msra.mxu0 0.0
      %1819 = vmatprep.subr.mxu0 0.0
      %1820 = vmatpush1.msra.mxu0 %v1537
      %1821 = vmatprep.subr.mxu0 0.0
      %1822 = vmatpush1.msra.mxu0 %v1532
      %1823 = vmatprep.subr.mxu0 0.0
      %1824 = vmatpush2.msra.mxu0 0.0
      %1825 = vmatprep.subr.mxu0 0.0
      %1826 = vmatpush2.msra.mxu0 0.0
      %1827 = vmatprep.subr.mxu0 0.0
      %1828 = vmatpush2.msra.mxu0 0.0
      %1829 = vmatprep.subr.mxu0 0.0
      %1830 = vmatpush2.msra.mxu0 0.0
      %1831 = vmatprep.subr.mxu0 0.0
      %1832 = vmatpush2.msra.mxu0 0.0
      %1833 = vmatprep.subr.mxu0 0.0
      %1834 = vmatpush2.msra.mxu0 0.0
      %1835 = vmatprep.subr.mxu0 0.0
      %1836 = vmatpush2.msra.mxu0 0.0
      %1837 = vmatprep.subr.mxu0 0.0
      %1838 = vmatpush2.msra.mxu0 0.0
      %1839 = vmatprep.subr.mxu0 0.0
      %1840 = vmatpush2.msra.mxu0 0.0
      %1841 = vmatprep.subr.mxu0 0.0
      %1842 = vmatpush2.msra.mxu0 0.0
      %1843 = vmatprep.subr.mxu0 0.0
      %1844 = vmatpush2.msra.mxu0 0.0
      %1845 = vmatprep.subr.mxu0 0.0
      %1846 = vmatpush2.msra.mxu0 0.0
      %1847 = vmatprep.subr.mxu0 0.0
      %1848 = vmatpush2.msra.mxu0 0.0
      %1849 = vmatprep.subr.mxu0 0.0
      %1850 = vmatpush2.msra.mxu0 0.0
      %1851 = vmatprep.subr.mxu0 0.0
      %1852 = vmatpush2.msra.mxu0 0.0
      %1853 = vmatprep.subr.mxu0 0.0
      %1854 = vmatpush2.msra.mxu0 0.0
      %1855 = vmatprep.mubr.f32.mxu0 0.0
      %1856 = vmatmul.mubr.f32.gmra.mxu0 %v1543
      %v1857 = vpop.f32.mrf.mxu0
      %v1858 = vadd.f32 0.0, %v1857
      %v1859 = vpop.f32.mrf.mxu0
      %1860 = vmatprep.mubr.f32.mxu0 0.0
      %1861 = vmatmul.mubr.f32.gmra.mxu0 %v1546
      %v1862 = vpop.f32.mrf.mxu0
      %v1863 = vadd.f32 0.0, %v1862
      %v1864 = vpop.f32.mrf.mxu0
      %1865 = vdwg.mxu0
      %1866 = vmatprep.subr.mxu0 0.0
      %1867 = vmatpush1.msra.mxu0 0.0
      %1868 = vmatprep.subr.mxu0 0.0
      %1869 = vmatpush1.msra.mxu0 0.0
      %1870 = vmatprep.subr.mxu0 0.0
      %1871 = vmatpush1.msra.mxu0 0.0
      %1872 = vmatprep.subr.mxu0 0.0
      %1873 = vmatpush1.msra.mxu0 0.0
      %1874 = vmatprep.subr.mxu0 0.0
      %1875 = vmatpush1.msra.mxu0 0.0
      %1876 = vmatprep.subr.mxu0 0.0
      %1877 = vmatpush1.msra.mxu0 0.0
      %1878 = vmatprep.subr.mxu0 0.0
      %1879 = vmatpush1.msra.mxu0 0.0
      %1880 = vmatprep.subr.mxu0 0.0
      %1881 = vmatpush1.msra.mxu0 0.0
      %1882 = vmatprep.subr.mxu0 0.0
      %1883 = vmatpush1.msra.mxu0 0.0
      %1884 = vmatprep.subr.mxu0 0.0
      %1885 = vmatpush1.msra.mxu0 0.0
      %1886 = vmatprep.subr.mxu0 0.0
      %1887 = vmatpush1.msra.mxu0 0.0
      %1888 = vmatprep.subr.mxu0 0.0
      %1889 = vmatpush1.msra.mxu0 0.0
      %1890 = vmatprep.subr.mxu0 0.0
      %1891 = vmatpush1.msra.mxu0 0.0
      %1892 = vmatprep.subr.mxu0 0.0
      %1893 = vmatpush1.msra.mxu0 0.0
      %1894 = vmatprep.subr.mxu0 0.0
      %1895 = vmatpush1.msra.mxu0 %v1537
      %1896 = vmatprep.subr.mxu0 0.0
      %1897 = vmatpush1.msra.mxu0 %v1532
      %1898 = vmatprep.subr.mxu0 0.0
      %1899 = vmatpush2.msra.mxu0 0.0
      %1900 = vmatprep.subr.mxu0 0.0
      %1901 = vmatpush2.msra.mxu0 0.0
      %1902 = vmatprep.subr.mxu0 0.0
      %1903 = vmatpush2.msra.mxu0 0.0
      %1904 = vmatprep.subr.mxu0 0.0
      %1905 = vmatpush2.msra.mxu0 0.0
      %1906 = vmatprep.subr.mxu0 0.0
      %1907 = vmatpush2.msra.mxu0 0.0
      %1908 = vmatprep.subr.mxu0 0.0
      %1909 = vmatpush2.msra.mxu0 0.0
      %1910 = vmatprep.subr.mxu0 0.0
      %1911 = vmatpush2.msra.mxu0 0.0
      %1912 = vmatprep.subr.mxu0 0.0
      %1913 = vmatpush2.msra.mxu0 0.0
      %1914 = vmatprep.subr.mxu0 0.0
      %1915 = vmatpush2.msra.mxu0 0.0
      %1916 = vmatprep.subr.mxu0 0.0
      %1917 = vmatpush2.msra.mxu0 0.0
      %1918 = vmatprep.subr.mxu0 0.0
      %1919 = vmatpush2.msra.mxu0 0.0
      %1920 = vmatprep.subr.mxu0 0.0
      %1921 = vmatpush2.msra.mxu0 0.0
      %1922 = vmatprep.subr.mxu0 0.0
      %1923 = vmatpush2.msra.mxu0 0.0
      %1924 = vmatprep.subr.mxu0 0.0
      %1925 = vmatpush2.msra.mxu0 0.0
      %1926 = vmatprep.subr.mxu0 0.0
      %1927 = vmatpush2.msra.mxu0 0.0
      %1928 = vmatprep.subr.mxu0 0.0
      %1929 = vmatpush2.msra.mxu0 0.0
      %1930 = vmatprep.mubr.f32.mxu0 0.0
      %1931 = vmatmul.mubr.f32.gmra.mxu0 %v1627
      %v1932 = vpop.f32.mrf.mxu0
      %v1933 = vadd.f32 0.0, %v1932
      %v1934 = vpop.f32.mrf.mxu0
      %1935 = vmatprep.mubr.f32.mxu0 0.0
      %1936 = vmatmul.mubr.f32.gmra.mxu0 %v1630
      %v1937 = vpop.f32.mrf.mxu0
      %v1938 = vadd.f32 0.0, %v1937
      %v1939 = vpop.f32.mrf.mxu0
      %1940 = vdwg.mxu0
      %1941 = vmatprep.subr.mxu0 0.0
      %1942 = vmatpush1.msra.mxu0 0.0
      %1943 = vmatprep.subr.mxu0 0.0
      %1944 = vmatpush1.msra.mxu0 0.0
      %1945 = vmatprep.subr.mxu0 0.0
      %1946 = vmatpush1.msra.mxu0 0.0
      %1947 = vmatprep.subr.mxu0 0.0
      %1948 = vmatpush1.msra.mxu0 0.0
      %1949 = vmatprep.subr.mxu0 0.0
      %1950 = vmatpush1.msra.mxu0 0.0
      %1951 = vmatprep.subr.mxu0 0.0
      %1952 = vmatpush1.msra.mxu0 0.0
      %1953 = vmatprep.subr.mxu0 0.0
      %1954 = vmatpush1.msra.mxu0 0.0
      %1955 = vmatprep.subr.mxu0 0.0
      %1956 = vmatpush1.msra.mxu0 0.0
      %1957 = vmatprep.subr.mxu0 0.0
      %1958 = vmatpush1.msra.mxu0 0.0
      %1959 = vmatprep.subr.mxu0 0.0
      %1960 = vmatpush1.msra.mxu0 0.0
      %1961 = vmatprep.subr.mxu0 0.0
      %1962 = vmatpush1.msra.mxu0 0.0
      %1963 = vmatprep.subr.mxu0 0.0
      %1964 = vmatpush1.msra.mxu0 0.0
      %1965 = vmatprep.subr.mxu0 0.0
      %1966 = vmatpush1.msra.mxu0 0.0
      %1967 = vmatprep.subr.mxu0 0.0
      %1968 = vmatpush1.msra.mxu0 0.0
      %1969 = vmatprep.subr.mxu0 0.0
      %1970 = vmatpush1.msra.mxu0 %v1537
      %1971 = vmatprep.subr.mxu0 0.0
      %1972 = vmatpush1.msra.mxu0 %v1532
      %1973 = vmatprep.subr.mxu0 0.0
      %1974 = vmatpush2.msra.mxu0 0.0
      %1975 = vmatprep.subr.mxu0 0.0
      %1976 = vmatpush2.msra.mxu0 0.0
      %1977 = vmatprep.subr.mxu0 0.0
      %1978 = vmatpush2.msra.mxu0 0.0
      %1979 = vmatprep.subr.mxu0 0.0
      %1980 = vmatpush2.msra.mxu0 0.0
      %1981 = vmatprep.subr.mxu0 0.0
      %1982 = vmatpush2.msra.mxu0 0.0
      %1983 = vmatprep.subr.mxu0 0.0
      %1984 = vmatpush2.msra.mxu0 0.0
      %1985 = vmatprep.subr.mxu0 0.0
      %1986 = vmatpush2.msra.mxu0 0.0
      %1987 = vmatprep.subr.mxu0 0.0
      %1988 = vmatpush2.msra.mxu0 0.0
      %1989 = vmatprep.subr.mxu0 0.0
      %1990 = vmatpush2.msra.mxu0 0.0
      %1991 = vmatprep.subr.mxu0 0.0
      %1992 = vmatpush2.msra.mxu0 0.0
      %1993 = vmatprep.subr.mxu0 0.0
      %1994 = vmatpush2.msra.mxu0 0.0
      %1995 = vmatprep.subr.mxu0 0.0
      %1996 = vmatpush2.msra.mxu0 0.0
      %1997 = vmatprep.subr.mxu0 0.0
      %1998 = vmatpush2.msra.mxu0 0.0
      %1999 = vmatprep.subr.mxu0 0.0
      %2000 = vmatpush2.msra.mxu0 0.0
      %2001 = vmatprep.subr.mxu0 0.0
      %2002 = vmatpush2.msra.mxu0 0.0
      %2003 = vmatprep.subr.mxu0 0.0
      %2004 = vmatpush2.msra.mxu0 0.0
      %2005 = vmatprep.mubr.f32.mxu0 0.0
      %2006 = vmatmul.mubr.f32.gmra.mxu0 %v1711
      %v2007 = vpop.f32.mrf.mxu0
      %v2008 = vadd.f32 0.0, %v2007
      %v2009 = vpop.f32.mrf.mxu0
      %2010 = vmatprep.mubr.f32.mxu0 0.0
      %2011 = vmatmul.mubr.f32.gmra.mxu0 %v1714
      %v2012 = vpop.f32.mrf.mxu0
      %v2013 = vadd.f32 0.0, %v2012
      %v2014 = vpop.f32.mrf.mxu0
      %2015 = vdwg.mxu0
      %v2016 = vld [vmem:[%s9] sm:$0xff]
      %v2017 = vld [vmem:[%s9 + $0x8] sm:$0xff]
      %v2018 = vld [vmem:[%s9 + $0x10] sm:$0xff]
      %v2019 = vld [vmem:[%s9 + $0x18] sm:$0xff]
      %v2020 = vld [vmem:[%s9 + $0x20] sm:$0xff]
      %v2021 = vld [vmem:[%s9 + $0x28] sm:$0xff]
      %v2022 = vld [vmem:[%s9 + $0x30] sm:$0xff]
      %v2023 = vld [vmem:[%s9 + $0x38] sm:$0xff]
      %v2024 = vld [vmem:[%s9 + $0x40] sm:$0xff]
      %v2025 = vld [vmem:[%s9 + $0x48] sm:$0xff]
      %v2026 = vld [vmem:[%s9 + $0x50] sm:$0xff]
      %v2027 = vld [vmem:[%s9 + $0x58] sm:$0xff]
      %v2028 = vld [vmem:[%s9 + $0x60] sm:$0xff]
      %v2029 = vld [vmem:[%s9 + $0x68] sm:$0xff]
      %v2030 = vld [vmem:[%s9 + $0x70] sm:$0xff]
      %v2031 = vld [vmem:[%s9 + $0x78] sm:$0xff]
      %v2032 = vld [vmem:[%s9 + $0x80] sm:$0xff]
      %v2033 = vld [vmem:[%s9 + $0x88] sm:$0xff]
      %v2034 = vld [vmem:[%s9 + $0x90] sm:$0xff]
      %v2035 = vld [vmem:[%s9 + $0x98] sm:$0xff]
      %v2036 = vld [vmem:[%s9 + $0xa0] sm:$0xff]
      %v2037 = vld [vmem:[%s9 + $0xa8] sm:$0xff]
      %v2038 = vld [vmem:[%s9 + $0xb0] sm:$0xff]
      %v2039 = vld [vmem:[%s9 + $0xb8] sm:$0xff]
      %v2040 = vld [vmem:[%s9 + $0xc0] sm:$0xff]
      %v2041 = vld [vmem:[%s9 + $0xc8] sm:$0xff]
      %v2042 = vld [vmem:[%s9 + $0xd0] sm:$0xff]
      %v2043 = vld [vmem:[%s9 + $0xd8] sm:$0xff]
      %v2044 = vld [vmem:[%s9 + $0xe0] sm:$0xff]
      %v2045 = vld [vmem:[%s9 + $0xe8] sm:$0xff]
      %v2046 = vld [vmem:[%s9 + $0xf0] sm:$0xff]
      %v2047 = vld [vmem:[%s9 + $0xf8] sm:$0xff]
      %v2048 = vld [vmem:[%s9 + $0x100] sm:$0xff]
      %v2049 = vld [vmem:[%s9 + $0x108] sm:$0xff]
      %v2050 = vld [vmem:[%s9 + $0x110] sm:$0xff]
      %v2051 = vld [vmem:[%s9 + $0x118] sm:$0xff]
      %v2052 = vld [vmem:[%s9 + $0x120] sm:$0xff]
      %v2053 = vld [vmem:[%s9 + $0x128] sm:$0xff]
      %v2054 = vld [vmem:[%s9 + $0x130] sm:$0xff]
      %v2055 = vld [vmem:[%s9 + $0x138] sm:$0xff]
      %v2056 = vld [vmem:[%s9 + $0x140] sm:$0xff]
      %v2057 = vld [vmem:[%s9 + $0x148] sm:$0xff]
      %v2058 = vld [vmem:[%s9 + $0x150] sm:$0xff]
      %v2059 = vld [vmem:[%s9 + $0x158] sm:$0xff]
      %v2060 = vld [vmem:[%s9 + $0x160] sm:$0xff]
      %v2061 = vld [vmem:[%s9 + $0x168] sm:$0xff]
      %v2062 = vld [vmem:[%s9 + $0x170] sm:$0xff]
      %v2063 = vld [vmem:[%s9 + $0x178] sm:$0xff]
      %v2064 = vld [vmem:[%s9 + $0x180] sm:$0xff]
      %v2065 = vld [vmem:[%s9 + $0x188] sm:$0xff]
      %v2066 = vld [vmem:[%s9 + $0x190] sm:$0xff]
      %v2067 = vld [vmem:[%s9 + $0x198] sm:$0xff]
      %v2068 = vld [vmem:[%s9 + $0x1a0] sm:$0xff]
      %v2069 = vld [vmem:[%s9 + $0x1a8] sm:$0xff]
      %v2070 = vld [vmem:[%s9 + $0x1b0] sm:$0xff]
      %v2071 = vld [vmem:[%s9 + $0x1b8] sm:$0xff]
      %v2072 = vld [vmem:[%s9 + $0x1c0] sm:$0xff]
      %v2073 = vld [vmem:[%s9 + $0x1c8] sm:$0xff]
      %v2074 = vld [vmem:[%s9 + $0x1d0] sm:$0xff]
      %v2075 = vld [vmem:[%s9 + $0x1d8] sm:$0xff]
      %v2076 = vld [vmem:[%s9 + $0x1e0] sm:$0xff]
      %v2077 = vld [vmem:[%s9 + $0x1e8] sm:$0xff]
      %v2078 = vld [vmem:[%s9 + $0x1f0] sm:$0xff]
      %v2079 = vld [vmem:[%s9 + $0x1f8] sm:$0xff]
      %v2080 = vld [vmem:[%s9 + $0x200] sm:$0xff]
      %v2081 = vld [vmem:[%s9 + $0x208] sm:$0xff]
      %v2082 = vld [vmem:[%s9 + $0x210] sm:$0xff]
      %v2083 = vld [vmem:[%s9 + $0x218] sm:$0xff]
      %v2084 = vld [vmem:[%s9 + $0x220] sm:$0xff]
      %v2085 = vld [vmem:[%s9 + $0x228] sm:$0xff]
      %v2086 = vld [vmem:[%s9 + $0x230] sm:$0xff]
      %v2087 = vld [vmem:[%s9 + $0x238] sm:$0xff]
      %v2088 = vld [vmem:[%s9 + $0x240] sm:$0xff]
      %v2089 = vld [vmem:[%s9 + $0x248] sm:$0xff]
      %v2090 = vld [vmem:[%s9 + $0x250] sm:$0xff]
      %v2091 = vld [vmem:[%s9 + $0x258] sm:$0xff]
      %v2092 = vld [vmem:[%s9 + $0x260] sm:$0xff]
      %v2093 = vld [vmem:[%s9 + $0x268] sm:$0xff]
      %v2094 = vld [vmem:[%s9 + $0x270] sm:$0xff]
      %v2095 = vld [vmem:[%s9 + $0x278] sm:$0xff]
      %v2096 = vld [vmem:[%s9 + $0x280] sm:$0xff]
      %v2097 = vld [vmem:[%s9 + $0x288] sm:$0xff]
      %v2098 = vld [vmem:[%s9 + $0x290] sm:$0xff]
      %v2099 = vld [vmem:[%s9 + $0x298] sm:$0xff]
      %v2100 = vld [vmem:[%s9 + $0x2a0] sm:$0xff]
      %v2101 = vld [vmem:[%s9 + $0x2a8] sm:$0xff]
      %v2102 = vld [vmem:[%s9 + $0x2b0] sm:$0xff]
      %v2103 = vld [vmem:[%s9 + $0x2b8] sm:$0xff]
      %v2104 = vld [vmem:[%s9 + $0x2c0] sm:$0xff]
      %v2105 = vld [vmem:[%s9 + $0x2c8] sm:$0xff]
      %v2106 = vld [vmem:[%s9 + $0x2d0] sm:$0xff]
      %v2107 = vld [vmem:[%s9 + $0x2d8] sm:$0xff]
      %v2108 = vld [vmem:[%s9 + $0x2e0] sm:$0xff]
      %v2109 = vld [vmem:[%s9 + $0x2e8] sm:$0xff]
      %v2110 = vld [vmem:[%s9 + $0x2f0] sm:$0xff]
      %v2111 = vld [vmem:[%s9 + $0x2f8] sm:$0xff]
      %2112 = vmatprep.subr.mxu0 0.0
      %2113 = vmatpush1.msra.mxu0 %v2031
      %2114 = vmatprep.subr.mxu0 0.0
      %2115 = vmatpush1.msra.mxu0 %v2030
      %2116 = vmatprep.subr.mxu0 0.0
      %2117 = vmatpush1.msra.mxu0 %v2029
      %2118 = vmatprep.subr.mxu0 0.0
      %2119 = vmatpush1.msra.mxu0 %v2028
      %2120 = vmatprep.subr.mxu0 0.0
      %2121 = vmatpush1.msra.mxu0 %v2027
      %2122 = vmatprep.subr.mxu0 0.0
      %2123 = vmatpush1.msra.mxu0 %v2026
      %2124 = vmatprep.subr.mxu0 0.0
      %2125 = vmatpush1.msra.mxu0 %v2025
      %2126 = vmatprep.subr.mxu0 0.0
      %2127 = vmatpush1.msra.mxu0 %v2024
      %2128 = vmatprep.subr.mxu0 0.0
      %2129 = vmatpush1.msra.mxu0 %v2023
      %2130 = vmatprep.subr.mxu0 0.0
      %2131 = vmatpush1.msra.mxu0 %v2022
      %2132 = vmatprep.subr.mxu0 0.0
      %2133 = vmatpush1.msra.mxu0 %v2021
      %2134 = vmatprep.subr.mxu0 0.0
      %2135 = vmatpush1.msra.mxu0 %v2020
      %2136 = vmatprep.subr.mxu0 0.0
      %2137 = vmatpush1.msra.mxu0 %v2019
      %2138 = vmatprep.subr.mxu0 0.0
      %2139 = vmatpush1.msra.mxu0 %v2018
      %2140 = vmatprep.subr.mxu0 0.0
      %2141 = vmatpush1.msra.mxu0 %v2017
      %2142 = vmatprep.subr.mxu0 0.0
      %2143 = vmatpush1.msra.mxu0 %v2016
      %2144 = vmatprep.subr.mxu0 0.0
      %2145 = vmatpush2.msra.mxu0 %v2047
      %2146 = vmatprep.subr.mxu0 0.0
      %2147 = vmatpush2.msra.mxu0 %v2046
      %2148 = vmatprep.subr.mxu0 0.0
      %2149 = vmatpush2.msra.mxu0 %v2045
      %2150 = vmatprep.subr.mxu0 0.0
      %2151 = vmatpush2.msra.mxu0 %v2044
      %2152 = vmatprep.subr.mxu0 0.0
      %2153 = vmatpush2.msra.mxu0 %v2043
      %2154 = vmatprep.subr.mxu0 0.0
      %2155 = vmatpush2.msra.mxu0 %v2042
      %2156 = vmatprep.subr.mxu0 0.0
      %2157 = vmatpush2.msra.mxu0 %v2041
      %2158 = vmatprep.subr.mxu0 0.0
      %2159 = vmatpush2.msra.mxu0 %v2040
      %2160 = vmatprep.subr.mxu0 0.0
      %2161 = vmatpush2.msra.mxu0 %v2039
      %2162 = vmatprep.subr.mxu0 0.0
      %2163 = vmatpush2.msra.mxu0 %v2038
      %2164 = vmatprep.subr.mxu0 0.0
      %2165 = vmatpush2.msra.mxu0 %v2037
      %2166 = vmatprep.subr.mxu0 0.0
      %2167 = vmatpush2.msra.mxu0 %v2036
      %2168 = vmatprep.subr.mxu0 0.0
      %2169 = vmatpush2.msra.mxu0 %v2035
      %2170 = vmatprep.subr.mxu0 0.0
      %2171 = vmatpush2.msra.mxu0 %v2034
      %2172 = vmatprep.subr.mxu0 0.0
      %2173 = vmatpush2.msra.mxu0 %v2033
      %2174 = vmatprep.subr.mxu0 0.0
      %2175 = vmatpush2.msra.mxu0 %v2032
      %2176 = vmatprep.mubr.f32.mxu0 %v1699
      %2177 = vmatmul.mubr.f32.gmra.mxu0 %v1615
      %v2178 = vpop.f32.mrf.mxu0
      %v2179 = vadd.f32 0.0, %v2178
      %v2180 = vpop.f32.mrf.mxu0
      %2181 = vmatprep.mubr.f32.mxu0 %v1704
      %2182 = vmatmul.mubr.f32.gmra.mxu0 %v1620
      %v2183 = vpop.f32.mrf.mxu0
      %v2184 = vadd.f32 0.0, %v2183
      %v2185 = vpop.f32.mrf.mxu0
      %2186 = vdwg.mxu0
      %2187 = vmatprep.subr.mxu0 0.0
      %2188 = vmatpush1.msra.mxu0 %v2063
      %2189 = vmatprep.subr.mxu0 0.0
      %2190 = vmatpush1.msra.mxu0 %v2062
      %2191 = vmatprep.subr.mxu0 0.0
      %2192 = vmatpush1.msra.mxu0 %v2061
      %2193 = vmatprep.subr.mxu0 0.0
      %2194 = vmatpush1.msra.mxu0 %v2060
      %2195 = vmatprep.subr.mxu0 0.0
      %2196 = vmatpush1.msra.mxu0 %v2059
      %2197 = vmatprep.subr.mxu0 0.0
      %2198 = vmatpush1.msra.mxu0 %v2058
      %2199 = vmatprep.subr.mxu0 0.0
      %2200 = vmatpush1.msra.mxu0 %v2057
      %2201 = vmatprep.subr.mxu0 0.0
      %2202 = vmatpush1.msra.mxu0 %v2056
      %2203 = vmatprep.subr.mxu0 0.0
      %2204 = vmatpush1.msra.mxu0 %v2055
      %2205 = vmatprep.subr.mxu0 0.0
      %2206 = vmatpush1.msra.mxu0 %v2054
      %2207 = vmatprep.subr.mxu0 0.0
      %2208 = vmatpush1.msra.mxu0 %v2053
      %2209 = vmatprep.subr.mxu0 0.0
      %2210 = vmatpush1.msra.mxu0 %v2052
      %2211 = vmatprep.subr.mxu0 0.0
      %2212 = vmatpush1.msra.mxu0 %v2051
      %2213 = vmatprep.subr.mxu0 0.0
      %2214 = vmatpush1.msra.mxu0 %v2050
      %2215 = vmatprep.subr.mxu0 0.0
      %2216 = vmatpush1.msra.mxu0 %v2049
      %2217 = vmatprep.subr.mxu0 0.0
      %2218 = vmatpush1.msra.mxu0 %v2048
      %2219 = vmatprep.subr.mxu0 0.0
      %2220 = vmatpush2.msra.mxu0 %v2079
      %2221 = vmatprep.subr.mxu0 0.0
      %2222 = vmatpush2.msra.mxu0 %v2078
      %2223 = vmatprep.subr.mxu0 0.0
      %2224 = vmatpush2.msra.mxu0 %v2077
      %2225 = vmatprep.subr.mxu0 0.0
      %2226 = vmatpush2.msra.mxu0 %v2076
      %2227 = vmatprep.subr.mxu0 0.0
      %2228 = vmatpush2.msra.mxu0 %v2075
      %2229 = vmatprep.subr.mxu0 0.0
      %2230 = vmatpush2.msra.mxu0 %v2074
      %2231 = vmatprep.subr.mxu0 0.0
      %2232 = vmatpush2.msra.mxu0 %v2073
      %2233 = vmatprep.subr.mxu0 0.0
      %2234 = vmatpush2.msra.mxu0 %v2072
      %2235 = vmatprep.subr.mxu0 0.0
      %2236 = vmatpush2.msra.mxu0 %v2071
      %2237 = vmatprep.subr.mxu0 0.0
      %2238 = vmatpush2.msra.mxu0 %v2070
      %2239 = vmatprep.subr.mxu0 0.0
      %2240 = vmatpush2.msra.mxu0 %v2069
      %2241 = vmatprep.subr.mxu0 0.0
      %2242 = vmatpush2.msra.mxu0 %v2068
      %2243 = vmatprep.subr.mxu0 0.0
      %2244 = vmatpush2.msra.mxu0 %v2067
      %2245 = vmatprep.subr.mxu0 0.0
      %2246 = vmatpush2.msra.mxu0 %v2066
      %2247 = vmatprep.subr.mxu0 0.0
      %2248 = vmatpush2.msra.mxu0 %v2065
      %2249 = vmatprep.subr.mxu0 0.0
      %2250 = vmatpush2.msra.mxu0 %v2064
      %2251 = vmatprep.mubr.f32.mxu0 %v1858
      %2252 = vmatmul.mubr.f32.gmra.mxu0 %v1783
      %v2253 = vpop.f32.mrf.mxu0
      %v2254 = vadd.f32 %v2179, %v2253
      %v2255 = vpop.f32.mrf.mxu0
      %2256 = vmatprep.mubr.f32.mxu0 %v1863
      %2257 = vmatmul.mubr.f32.gmra.mxu0 %v1788
      %v2258 = vpop.f32.mrf.mxu0
      %v2259 = vadd.f32 %v2184, %v2258
      %v2260 = vpop.f32.mrf.mxu0
      %2261 = vdwg.mxu0
      %2262 = vmatprep.subr.mxu0 0.0
      %2263 = vmatpush1.msra.mxu0 %v2095
      %2264 = vmatprep.subr.mxu0 0.0
      %2265 = vmatpush1.msra.mxu0 %v2094
      %2266 = vmatprep.subr.mxu0 0.0
      %2267 = vmatpush1.msra.mxu0 %v2093
      %2268 = vmatprep.subr.mxu0 0.0
      %2269 = vmatpush1.msra.mxu0 %v2092
      %2270 = vmatprep.subr.mxu0 0.0
      %2271 = vmatpush1.msra.mxu0 %v2091
      %2272 = vmatprep.subr.mxu0 0.0
      %2273 = vmatpush1.msra.mxu0 %v2090
      %2274 = vmatprep.subr.mxu0 0.0
      %2275 = vmatpush1.msra.mxu0 %v2089
      %2276 = vmatprep.subr.mxu0 0.0
      %2277 = vmatpush1.msra.mxu0 %v2088
      %2278 = vmatprep.subr.mxu0 0.0
      %2279 = vmatpush1.msra.mxu0 %v2087
      %2280 = vmatprep.subr.mxu0 0.0
      %2281 = vmatpush1.msra.mxu0 %v2086
      %2282 = vmatprep.subr.mxu0 0.0
      %2283 = vmatpush1.msra.mxu0 %v2085
      %2284 = vmatprep.subr.mxu0 0.0
      %2285 = vmatpush1.msra.mxu0 %v2084
      %2286 = vmatprep.subr.mxu0 0.0
      %2287 = vmatpush1.msra.mxu0 %v2083
      %2288 = vmatprep.subr.mxu0 0.0
      %2289 = vmatpush1.msra.mxu0 %v2082
      %2290 = vmatprep.subr.mxu0 0.0
      %2291 = vmatpush1.msra.mxu0 %v2081
      %2292 = vmatprep.subr.mxu0 0.0
      %2293 = vmatpush1.msra.mxu0 %v2080
      %2294 = vmatprep.subr.mxu0 0.0
      %2295 = vmatpush2.msra.mxu0 %v2111
      %2296 = vmatprep.subr.mxu0 0.0
      %2297 = vmatpush2.msra.mxu0 %v2110
      %2298 = vmatprep.subr.mxu0 0.0
      %2299 = vmatpush2.msra.mxu0 %v2109
      %2300 = vmatprep.subr.mxu0 0.0
      %2301 = vmatpush2.msra.mxu0 %v2108
      %2302 = vmatprep.subr.mxu0 0.0
      %2303 = vmatpush2.msra.mxu0 %v2107
      %2304 = vmatprep.subr.mxu0 0.0
      %2305 = vmatpush2.msra.mxu0 %v2106
      %2306 = vmatprep.subr.mxu0 0.0
      %2307 = vmatpush2.msra.mxu0 %v2105
      %2308 = vmatprep.subr.mxu0 0.0
      %2309 = vmatpush2.msra.mxu0 %v2104
      %2310 = vmatprep.subr.mxu0 0.0
      %2311 = vmatpush2.msra.mxu0 %v2103
      %2312 = vmatprep.subr.mxu0 0.0
      %2313 = vmatpush2.msra.mxu0 %v2102
      %2314 = vmatprep.subr.mxu0 0.0
      %2315 = vmatpush2.msra.mxu0 %v2101
      %2316 = vmatprep.subr.mxu0 0.0
      %2317 = vmatpush2.msra.mxu0 %v2100
      %2318 = vmatprep.subr.mxu0 0.0
      %2319 = vmatpush2.msra.mxu0 %v2099
      %2320 = vmatprep.subr.mxu0 0.0
      %2321 = vmatpush2.msra.mxu0 %v2098
      %2322 = vmatprep.subr.mxu0 0.0
      %2323 = vmatpush2.msra.mxu0 %v2097
      %2324 = vmatprep.subr.mxu0 0.0
      %2325 = vmatpush2.msra.mxu0 %v2096
      %2326 = vmatprep.mubr.f32.mxu0 %v2008
      %2327 = vmatmul.mubr.f32.gmra.mxu0 %v1933
      %v2328 = vpop.f32.mrf.mxu0
      %v2329 = vadd.f32 %v2254, %v2328
      %v2330 = vpop.f32.mrf.mxu0
      %2331 = vmatprep.mubr.f32.mxu0 %v2013
      %2332 = vmatmul.mubr.f32.gmra.mxu0 %v1938
      %v2333 = vpop.f32.mrf.mxu0
      %v2334 = vadd.f32 %v2259, %v2333
      %v2335 = vpop.f32.mrf.mxu0
      %2336 = vdwg.mxu0
      %v2337 = vld [vmem:[%s11] sm:$0x1]
      %v2338 = vlaneseq
      %v2339 = vshrl.u32 %v2338, 7
      %v2340 = vsub.s32 0, %v2339
      %v2341 = vrot.slane %v2337, %v2340
      %v2342 = vmul.f32 %v2329, %v2341
      %v2343 = vmul.f32 %v2334, %v2341
      %v2344 = vld [vmem:[%s11 + $0x1] sm:$0x1]
      %v2345 = vlaneseq
      %v2346 = vshrl.u32 %v2345, 7
      %v2347 = vsub.s32 0, %v2346
      %v2348 = vrot.slane %v2344, %v2347
      %v2349 = vadd.f32 %v2342, %v2348
      %v2350 = vadd.f32 %v2343, %v2348
      %v2351 = vmax.f32 %v2349, 0.0
      %v2352 = vmax.f32 %v2350, 0.0
      %2353 = vmatprep.subr.mxu0 0.0
      %2354 = vmatpush1.msra.mxu0 0.0
      %2355 = vmatprep.subr.mxu0 0.0
      %2356 = vmatpush1.msra.mxu0 0.0
      %2357 = vmatprep.subr.mxu0 0.0
      %2358 = vmatpush1.msra.mxu0 0.0
      %2359 = vmatprep.subr.mxu0 0.0
      %2360 = vmatpush1.msra.mxu0 0.0
      %2361 = vmatprep.subr.mxu0 0.0
      %2362 = vmatpush1.msra.mxu0 0.0
      %2363 = vmatprep.subr.mxu0 0.0
      %2364 = vmatpush1.msra.mxu0 0.0
      %2365 = vmatprep.subr.mxu0 0.0
      %2366 = vmatpush1.msra.mxu0 0.0
      %2367 = vmatprep.subr.mxu0 0.0
      %2368 = vmatpush1.msra.mxu0 0.0
      %2369 = vmatprep.subr.mxu0 0.0
      %2370 = vmatpush1.msra.mxu0 0.0
      %2371 = vmatprep.subr.mxu0 0.0
      %2372 = vmatpush1.msra.mxu0 0.0
      %2373 = vmatprep.subr.mxu0 0.0
      %2374 = vmatpush1.msra.mxu0 0.0
      %2375 = vmatprep.subr.mxu0 0.0
      %2376 = vmatpush1.msra.mxu0 0.0
      %2377 = vmatprep.subr.mxu0 0.0
      %2378 = vmatpush1.msra.mxu0 0.0
      %2379 = vmatprep.subr.mxu0 0.0
      %2380 = vmatpush1.msra.mxu0 0.0
      %2381 = vmatprep.subr.mxu0 0.0
      %2382 = vmatpush1.msra.mxu0 %v2352
      %2383 = vmatprep.subr.mxu0 0.0
      %2384 = vmatpush1.msra.mxu0 %v2351
      %2385 = vmatprep.subr.mxu0 0.0
      %2386 = vmatpush2.msra.mxu0 0.0
      %2387 = vmatprep.subr.mxu0 0.0
      %2388 = vmatpush2.msra.mxu0 0.0
      %2389 = vmatprep.subr.mxu0 0.0
      %2390 = vmatpush2.msra.mxu0 0.0
      %2391 = vmatprep.subr.mxu0 0.0
      %2392 = vmatpush2.msra.mxu0 0.0
      %2393 = vmatprep.subr.mxu0 0.0
      %2394 = vmatpush2.msra.mxu0 0.0
      %2395 = vmatprep.subr.mxu0 0.0
      %2396 = vmatpush2.msra.mxu0 0.0
      %2397 = vmatprep.subr.mxu0 0.0
      %2398 = vmatpush2.msra.mxu0 0.0
      %2399 = vmatprep.subr.mxu0 0.0
      %2400 = vmatpush2.msra.mxu0 0.0
      %2401 = vmatprep.subr.mxu0 0.0
      %2402 = vmatpush2.msra.mxu0 0.0
      %2403 = vmatprep.subr.mxu0 0.0
      %2404 = vmatpush2.msra.mxu0 0.0
      %2405 = vmatprep.subr.mxu0 0.0
      %2406 = vmatpush2.msra.mxu0 0.0
      %2407 = vmatprep.subr.mxu0 0.0
      %2408 = vmatpush2.msra.mxu0 0.0
      %2409 = vmatprep.subr.mxu0 0.0
      %2410 = vmatpush2.msra.mxu0 0.0
      %2411 = vmatprep.subr.mxu0 0.0
      %2412 = vmatpush2.msra.mxu0 0.0
      %2413 = vmatprep.subr.mxu0 0.0
      %2414 = vmatpush2.msra.mxu0 0.0
      %2415 = vmatprep.subr.mxu0 0.0
      %2416 = vmatpush2.msra.mxu0 0.0
      %2417 = vmatprep.mubr.f32.mxu0 0.0
      %2418 = vmatmul.mubr.f32.gmra.mxu0 %v1543
      %v2419 = vpop.f32.mrf.mxu0
      %v2420 = vadd.f32 0.0, %v2419
      %v2421 = vpop.f32.mrf.mxu0
      %2422 = vmatprep.mubr.f32.mxu0 0.0
      %2423 = vmatmul.mubr.f32.gmra.mxu0 %v1546
      %v2424 = vpop.f32.mrf.mxu0
      %v2425 = vadd.f32 0.0, %v2424
      %v2426 = vpop.f32.mrf.mxu0
      %2427 = vdwg.mxu0
      %2428 = vmatprep.subr.mxu0 0.0
      %2429 = vmatpush1.msra.mxu0 0.0
      %2430 = vmatprep.subr.mxu0 0.0
      %2431 = vmatpush1.msra.mxu0 0.0
      %2432 = vmatprep.subr.mxu0 0.0
      %2433 = vmatpush1.msra.mxu0 0.0
      %2434 = vmatprep.subr.mxu0 0.0
      %2435 = vmatpush1.msra.mxu0 0.0
      %2436 = vmatprep.subr.mxu0 0.0
      %2437 = vmatpush1.msra.mxu0 0.0
      %2438 = vmatprep.subr.mxu0 0.0
      %2439 = vmatpush1.msra.mxu0 0.0
      %2440 = vmatprep.subr.mxu0 0.0
      %2441 = vmatpush1.msra.mxu0 0.0
      %2442 = vmatprep.subr.mxu0 0.0
      %2443 = vmatpush1.msra.mxu0 0.0
      %2444 = vmatprep.subr.mxu0 0.0
      %2445 = vmatpush1.msra.mxu0 0.0
      %2446 = vmatprep.subr.mxu0 0.0
      %2447 = vmatpush1.msra.mxu0 0.0
      %2448 = vmatprep.subr.mxu0 0.0
      %2449 = vmatpush1.msra.mxu0 0.0
      %2450 = vmatprep.subr.mxu0 0.0
      %2451 = vmatpush1.msra.mxu0 0.0
      %2452 = vmatprep.subr.mxu0 0.0
      %2453 = vmatpush1.msra.mxu0 0.0
      %2454 = vmatprep.subr.mxu0 0.0
      %2455 = vmatpush1.msra.mxu0 0.0
      %2456 = vmatprep.subr.mxu0 0.0
      %2457 = vmatpush1.msra.mxu0 %v2352
      %2458 = vmatprep.subr.mxu0 0.0
      %2459 = vmatpush1.msra.mxu0 %v2351
      %2460 = vmatprep.subr.mxu0 0.0
      %2461 = vmatpush2.msra.mxu0 0.0
      %2462 = vmatprep.subr.mxu0 0.0
      %2463 = vmatpush2.msra.mxu0 0.0
      %2464 = vmatprep.subr.mxu0 0.0
      %2465 = vmatpush2.msra.mxu0 0.0
      %2466 = vmatprep.subr.mxu0 0.0
      %2467 = vmatpush2.msra.mxu0 0.0
      %2468 = vmatprep.subr.mxu0 0.0
      %2469 = vmatpush2.msra.mxu0 0.0
      %2470 = vmatprep.subr.mxu0 0.0
      %2471 = vmatpush2.msra.mxu0 0.0
      %2472 = vmatprep.subr.mxu0 0.0
      %2473 = vmatpush2.msra.mxu0 0.0
      %2474 = vmatprep.subr.mxu0 0.0
      %2475 = vmatpush2.msra.mxu0 0.0
      %2476 = vmatprep.subr.mxu0 0.0
      %2477 = vmatpush2.msra.mxu0 0.0
      %2478 = vmatprep.subr.mxu0 0.0
      %2479 = vmatpush2.msra.mxu0 0.0
      %2480 = vmatprep.subr.mxu0 0.0
      %2481 = vmatpush2.msra.mxu0 0.0
      %2482 = vmatprep.subr.mxu0 0.0
      %2483 = vmatpush2.msra.mxu0 0.0
      %2484 = vmatprep.subr.mxu0 0.0
      %2485 = vmatpush2.msra.mxu0 0.0
      %2486 = vmatprep.subr.mxu0 0.0
      %2487 = vmatpush2.msra.mxu0 0.0
      %2488 = vmatprep.subr.mxu0 0.0
      %2489 = vmatpush2.msra.mxu0 0.0
      %2490 = vmatprep.subr.mxu0 0.0
      %2491 = vmatpush2.msra.mxu0 0.0
      %2492 = vmatprep.mubr.f32.mxu0 0.0
      %2493 = vmatmul.mubr.f32.gmra.mxu0 %v1627
      %v2494 = vpop.f32.mrf.mxu0
      %v2495 = vadd.f32 0.0, %v2494
      %v2496 = vpop.f32.mrf.mxu0
      %2497 = vmatprep.mubr.f32.mxu0 0.0
      %2498 = vmatmul.mubr.f32.gmra.mxu0 %v1630
      %v2499 = vpop.f32.mrf.mxu0
      %v2500 = vadd.f32 0.0, %v2499
      %v2501 = vpop.f32.mrf.mxu0
      %2502 = vdwg.mxu0
      %2503 = vmatprep.subr.mxu0 0.0
      %2504 = vmatpush1.msra.mxu0 0.0
      %2505 = vmatprep.subr.mxu0 0.0
      %2506 = vmatpush1.msra.mxu0 0.0
      %2507 = vmatprep.subr.mxu0 0.0
      %2508 = vmatpush1.msra.mxu0 0.0
      %2509 = vmatprep.subr.mxu0 0.0
      %2510 = vmatpush1.msra.mxu0 0.0
      %2511 = vmatprep.subr.mxu0 0.0
      %2512 = vmatpush1.msra.mxu0 0.0
      %2513 = vmatprep.subr.mxu0 0.0
      %2514 = vmatpush1.msra.mxu0 0.0
      %2515 = vmatprep.subr.mxu0 0.0
      %2516 = vmatpush1.msra.mxu0 0.0
      %2517 = vmatprep.subr.mxu0 0.0
      %2518 = vmatpush1.msra.mxu0 0.0
      %2519 = vmatprep.subr.mxu0 0.0
      %2520 = vmatpush1.msra.mxu0 0.0
      %2521 = vmatprep.subr.mxu0 0.0
      %2522 = vmatpush1.msra.mxu0 0.0
      %2523 = vmatprep.subr.mxu0 0.0
      %2524 = vmatpush1.msra.mxu0 0.0
      %2525 = vmatprep.subr.mxu0 0.0
      %2526 = vmatpush1.msra.mxu0 0.0
      %2527 = vmatprep.subr.mxu0 0.0
      %2528 = vmatpush1.msra.mxu0 0.0
      %2529 = vmatprep.subr.mxu0 0.0
      %2530 = vmatpush1.msra.mxu0 0.0
      %2531 = vmatprep.subr.mxu0 0.0
      %2532 = vmatpush1.msra.mxu0 %v2352
      %2533 = vmatprep.subr.mxu0 0.0
      %2534 = vmatpush1.msra.mxu0 %v2351
      %2535 = vmatprep.subr.mxu0 0.0
      %2536 = vmatpush2.msra.mxu0 0.0
      %2537 = vmatprep.subr.mxu0 0.0
      %2538 = vmatpush2.msra.mxu0 0.0
      %2539 = vmatprep.subr.mxu0 0.0
      %2540 = vmatpush2.msra.mxu0 0.0
      %2541 = vmatprep.subr.mxu0 0.0
      %2542 = vmatpush2.msra.mxu0 0.0
      %2543 = vmatprep.subr.mxu0 0.0
      %2544 = vmatpush2.msra.mxu0 0.0
      %2545 = vmatprep.subr.mxu0 0.0
      %2546 = vmatpush2.msra.mxu0 0.0
      %2547 = vmatprep.subr.mxu0 0.0
      %2548 = vmatpush2.msra.mxu0 0.0
      %2549 = vmatprep.subr.mxu0 0.0
      %2550 = vmatpush2.msra.mxu0 0.0
      %2551 = vmatprep.subr.mxu0 0.0
      %2552 = vmatpush2.msra.mxu0 0.0
      %2553 = vmatprep.subr.mxu0 0.0
      %2554 = vmatpush2.msra.mxu0 0.0
      %2555 = vmatprep.subr.mxu0 0.0
      %2556 = vmatpush2.msra.mxu0 0.0
      %2557 = vmatprep.subr.mxu0 0.0
      %2558 = vmatpush2.msra.mxu0 0.0
      %2559 = vmatprep.subr.mxu0 0.0
      %2560 = vmatpush2.msra.mxu0 0.0
      %2561 = vmatprep.subr.mxu0 0.0
      %2562 = vmatpush2.msra.mxu0 0.0
      %2563 = vmatprep.subr.mxu0 0.0
      %2564 = vmatpush2.msra.mxu0 0.0
      %2565 = vmatprep.subr.mxu0 0.0
      %2566 = vmatpush2.msra.mxu0 0.0
      %2567 = vmatprep.mubr.f32.mxu0 0.0
      %2568 = vmatmul.mubr.f32.gmra.mxu0 %v1711
      %v2569 = vpop.f32.mrf.mxu0
      %v2570 = vadd.f32 0.0, %v2569
      %v2571 = vpop.f32.mrf.mxu0
      %2572 = vmatprep.mubr.f32.mxu0 0.0
      %2573 = vmatmul.mubr.f32.gmra.mxu0 %v1714
      %v2574 = vpop.f32.mrf.mxu0
      %v2575 = vadd.f32 0.0, %v2574
      %v2576 = vpop.f32.mrf.mxu0
      %2577 = vdwg.mxu0
      %v2578 = vld [vmem:[%s10] sm:$0xff]
      %v2579 = vld [vmem:[%s10 + $0x8] sm:$0xff]
      %v2580 = vld [vmem:[%s10 + $0x10] sm:$0xff]
      %v2581 = vld [vmem:[%s10 + $0x18] sm:$0xff]
      %v2582 = vld [vmem:[%s10 + $0x20] sm:$0xff]
      %v2583 = vld [vmem:[%s10 + $0x28] sm:$0xff]
      %v2584 = vld [vmem:[%s10 + $0x30] sm:$0xff]
      %v2585 = vld [vmem:[%s10 + $0x38] sm:$0xff]
      %v2586 = vld [vmem:[%s10 + $0x40] sm:$0xff]
      %v2587 = vld [vmem:[%s10 + $0x48] sm:$0xff]
      %v2588 = vld [vmem:[%s10 + $0x50] sm:$0xff]
      %v2589 = vld [vmem:[%s10 + $0x58] sm:$0xff]
      %v2590 = vld [vmem:[%s10 + $0x60] sm:$0xff]
      %v2591 = vld [vmem:[%s10 + $0x68] sm:$0xff]
      %v2592 = vld [vmem:[%s10 + $0x70] sm:$0xff]
      %v2593 = vld [vmem:[%s10 + $0x78] sm:$0xff]
      %v2594 = vld [vmem:[%s10 + $0x80] sm:$0xff]
      %v2595 = vld [vmem:[%s10 + $0x88] sm:$0xff]
      %v2596 = vld [vmem:[%s10 + $0x90] sm:$0xff]
      %v2597 = vld [vmem:[%s10 + $0x98] sm:$0xff]
      %v2598 = vld [vmem:[%s10 + $0xa0] sm:$0xff]
      %v2599 = vld [vmem:[%s10 + $0xa8] sm:$0xff]
      %v2600 = vld [vmem:[%s10 + $0xb0] sm:$0xff]
      %v2601 = vld [vmem:[%s10 + $0xb8] sm:$0xff]
      %v2602 = vld [vmem:[%s10 + $0xc0] sm:$0xff]
      %v2603 = vld [vmem:[%s10 + $0xc8] sm:$0xff]
      %v2604 = vld [vmem:[%s10 + $0xd0] sm:$0xff]
      %v2605 = vld [vmem:[%s10 + $0xd8] sm:$0xff]
      %v2606 = vld [vmem:[%s10 + $0xe0] sm:$0xff]
      %v2607 = vld [vmem:[%s10 + $0xe8] sm:$0xff]
      %v2608 = vld [vmem:[%s10 + $0xf0] sm:$0xff]
      %v2609 = vld [vmem:[%s10 + $0xf8] sm:$0xff]
      %v2610 = vld [vmem:[%s10 + $0x100] sm:$0xff]
      %v2611 = vld [vmem:[%s10 + $0x108] sm:$0xff]
      %v2612 = vld [vmem:[%s10 + $0x110] sm:$0xff]
      %v2613 = vld [vmem:[%s10 + $0x118] sm:$0xff]
      %v2614 = vld [vmem:[%s10 + $0x120] sm:$0xff]
      %v2615 = vld [vmem:[%s10 + $0x128] sm:$0xff]
      %v2616 = vld [vmem:[%s10 + $0x130] sm:$0xff]
      %v2617 = vld [vmem:[%s10 + $0x138] sm:$0xff]
      %v2618 = vld [vmem:[%s10 + $0x140] sm:$0xff]
      %v2619 = vld [vmem:[%s10 + $0x148] sm:$0xff]
      %v2620 = vld [vmem:[%s10 + $0x150] sm:$0xff]
      %v2621 = vld [vmem:[%s10 + $0x158] sm:$0xff]
      %v2622 = vld [vmem:[%s10 + $0x160] sm:$0xff]
      %v2623 = vld [vmem:[%s10 + $0x168] sm:$0xff]
      %v2624 = vld [vmem:[%s10 + $0x170] sm:$0xff]
      %v2625 = vld [vmem:[%s10 + $0x178] sm:$0xff]
      %2626 = vmatprep.subr.mxu0 0.0
      %2627 = vmatpush1.msra.mxu0 %v2593
      %2628 = vmatprep.subr.mxu0 0.0
      %2629 = vmatpush1.msra.mxu0 %v2592
      %2630 = vmatprep.subr.mxu0 0.0
      %2631 = vmatpush1.msra.mxu0 %v2591
      %2632 = vmatprep.subr.mxu0 0.0
      %2633 = vmatpush1.msra.mxu0 %v2590
      %2634 = vmatprep.subr.mxu0 0.0
      %2635 = vmatpush1.msra.mxu0 %v2589
      %2636 = vmatprep.subr.mxu0 0.0
      %2637 = vmatpush1.msra.mxu0 %v2588
      %2638 = vmatprep.subr.mxu0 0.0
      %2639 = vmatpush1.msra.mxu0 %v2587
      %2640 = vmatprep.subr.mxu0 0.0
      %2641 = vmatpush1.msra.mxu0 %v2586
      %2642 = vmatprep.subr.mxu0 0.0
      %2643 = vmatpush1.msra.mxu0 %v2585
      %2644 = vmatprep.subr.mxu0 0.0
      %2645 = vmatpush1.msra.mxu0 %v2584
      %2646 = vmatprep.subr.mxu0 0.0
      %2647 = vmatpush1.msra.mxu0 %v2583
      %2648 = vmatprep.subr.mxu0 0.0
      %2649 = vmatpush1.msra.mxu0 %v2582
      %2650 = vmatprep.subr.mxu0 0.0
      %2651 = vmatpush1.msra.mxu0 %v2581
      %2652 = vmatprep.subr.mxu0 0.0
      %2653 = vmatpush1.msra.mxu0 %v2580
      %2654 = vmatprep.subr.mxu0 0.0
      %2655 = vmatpush1.msra.mxu0 %v2579
      %2656 = vmatprep.subr.mxu0 0.0
      %2657 = vmatpush1.msra.mxu0 %v2578
      %2658 = vmatprep.subr.mxu0 0.0
      %2659 = vmatpush2.msra.mxu0 %v2609
      %2660 = vmatprep.subr.mxu0 0.0
      %2661 = vmatpush2.msra.mxu0 %v2608
      %2662 = vmatprep.subr.mxu0 0.0
      %2663 = vmatpush2.msra.mxu0 %v2607
      %2664 = vmatprep.subr.mxu0 0.0
      %2665 = vmatpush2.msra.mxu0 %v2606
      %2666 = vmatprep.subr.mxu0 0.0
      %2667 = vmatpush2.msra.mxu0 %v2605
      %2668 = vmatprep.subr.mxu0 0.0
      %2669 = vmatpush2.msra.mxu0 %v2604
      %2670 = vmatprep.subr.mxu0 0.0
      %2671 = vmatpush2.msra.mxu0 %v2603
      %2672 = vmatprep.subr.mxu0 0.0
      %2673 = vmatpush2.msra.mxu0 %v2602
      %2674 = vmatprep.subr.mxu0 0.0
      %2675 = vmatpush2.msra.mxu0 %v2601
      %2676 = vmatprep.subr.mxu0 0.0
      %2677 = vmatpush2.msra.mxu0 %v2600
      %2678 = vmatprep.subr.mxu0 0.0
      %2679 = vmatpush2.msra.mxu0 %v2599
      %2680 = vmatprep.subr.mxu0 0.0
      %2681 = vmatpush2.msra.mxu0 %v2598
      %2682 = vmatprep.subr.mxu0 0.0
      %2683 = vmatpush2.msra.mxu0 %v2597
      %2684 = vmatprep.subr.mxu0 0.0
      %2685 = vmatpush2.msra.mxu0 %v2596
      %2686 = vmatprep.subr.mxu0 0.0
      %2687 = vmatpush2.msra.mxu0 %v2595
      %2688 = vmatprep.subr.mxu0 0.0
      %2689 = vmatpush2.msra.mxu0 %v2594
      %2690 = vmatprep.mubr.f32.mxu0 %v2495
      %2691 = vmatmul.mubr.f32.gmra.mxu0 %v2420
      %v2692 = vpop.f32.mrf.mxu0
      %v2693 = vadd.f32 0.0, %v2692
      %v2694 = vpop.f32.mrf.mxu0
      %2695 = vmatprep.mubr.f32.mxu0 %v2500
      %2696 = vmatmul.mubr.f32.gmra.mxu0 %v2425
      %v2697 = vpop.f32.mrf.mxu0
      %v2698 = vadd.f32 0.0, %v2697
      %v2699 = vpop.f32.mrf.mxu0
      %2700 = vdwg.mxu0
      %2701 = vmatprep.subr.mxu0 0.0
      %2702 = vmatpush1.msra.mxu0 %v2625
      %2703 = vmatprep.subr.mxu0 0.0
      %2704 = vmatpush1.msra.mxu0 %v2624
      %2705 = vmatprep.subr.mxu0 0.0
      %2706 = vmatpush1.msra.mxu0 %v2623
      %2707 = vmatprep.subr.mxu0 0.0
      %2708 = vmatpush1.msra.mxu0 %v2622
      %2709 = vmatprep.subr.mxu0 0.0
      %2710 = vmatpush1.msra.mxu0 %v2621
      %2711 = vmatprep.subr.mxu0 0.0
      %2712 = vmatpush1.msra.mxu0 %v2620
      %2713 = vmatprep.subr.mxu0 0.0
      %2714 = vmatpush1.msra.mxu0 %v2619
      %2715 = vmatprep.subr.mxu0 0.0
      %2716 = vmatpush1.msra.mxu0 %v2618
      %2717 = vmatprep.subr.mxu0 0.0
      %2718 = vmatpush1.msra.mxu0 %v2617
      %2719 = vmatprep.subr.mxu0 0.0
      %2720 = vmatpush1.msra.mxu0 %v2616
      %2721 = vmatprep.subr.mxu0 0.0
      %2722 = vmatpush1.msra.mxu0 %v2615
      %2723 = vmatprep.subr.mxu0 0.0
      %2724 = vmatpush1.msra.mxu0 %v2614
      %2725 = vmatprep.subr.mxu0 0.0
      %2726 = vmatpush1.msra.mxu0 %v2613
      %2727 = vmatprep.subr.mxu0 0.0
      %2728 = vmatpush1.msra.mxu0 %v2612
      %2729 = vmatprep.subr.mxu0 0.0
      %2730 = vmatpush1.msra.mxu0 %v2611
      %2731 = vmatprep.subr.mxu0 0.0
      %2732 = vmatpush1.msra.mxu0 %v2610
      %2733 = vmatprep.subr.mxu0 0.0
      %2734 = vmatpush2.msra.mxu0 0.0
      %2735 = vmatprep.subr.mxu0 0.0
      %2736 = vmatpush2.msra.mxu0 0.0
      %2737 = vmatprep.subr.mxu0 0.0
      %2738 = vmatpush2.msra.mxu0 0.0
      %2739 = vmatprep.subr.mxu0 0.0
      %2740 = vmatpush2.msra.mxu0 0.0
      %2741 = vmatprep.subr.mxu0 0.0
      %2742 = vmatpush2.msra.mxu0 0.0
      %2743 = vmatprep.subr.mxu0 0.0
      %2744 = vmatpush2.msra.mxu0 0.0
      %2745 = vmatprep.subr.mxu0 0.0
      %2746 = vmatpush2.msra.mxu0 0.0
      %2747 = vmatprep.subr.mxu0 0.0
      %2748 = vmatpush2.msra.mxu0 0.0
      %2749 = vmatprep.subr.mxu0 0.0
      %2750 = vmatpush2.msra.mxu0 0.0
      %2751 = vmatprep.subr.mxu0 0.0
      %2752 = vmatpush2.msra.mxu0 0.0
      %2753 = vmatprep.subr.mxu0 0.0
      %2754 = vmatpush2.msra.mxu0 0.0
      %2755 = vmatprep.subr.mxu0 0.0
      %2756 = vmatpush2.msra.mxu0 0.0
      %2757 = vmatprep.subr.mxu0 0.0
      %2758 = vmatpush2.msra.mxu0 0.0
      %2759 = vmatprep.subr.mxu0 0.0
      %2760 = vmatpush2.msra.mxu0 0.0
      %2761 = vmatprep.subr.mxu0 0.0
      %2762 = vmatpush2.msra.mxu0 0.0
      %2763 = vmatprep.subr.mxu0 0.0
      %2764 = vmatpush2.msra.mxu0 0.0
      %2765 = vmatprep.mubr.f32.mxu0 0.0
      %2766 = vmatmul.mubr.f32.gmra.mxu0 %v2570
      %v2767 = vpop.f32.mrf.mxu0
      %v2768 = vadd.f32 %v2693, %v2767
      %v2769 = vpop.f32.mrf.mxu0
      %2770 = vmatprep.mubr.f32.mxu0 0.0
      %2771 = vmatmul.mubr.f32.gmra.mxu0 %v2575
      %v2772 = vpop.f32.mrf.mxu0
      %v2773 = vadd.f32 %v2698, %v2772
      %v2774 = vpop.f32.mrf.mxu0
      %2775 = vdwg.mxu0
      %v2776 = vld [vmem:[%s11 + $0x2] sm:$0x1]
      %v2777 = vlaneseq
      %v2778 = vshrl.u32 %v2777, 7
      %v2779 = vsub.s32 0, %v2778
      %v2780 = vrot.slane %v2776, %v2779
      %v2781 = vmul.f32 %v2768, %v2780
      %v2782 = vmul.f32 %v2773, %v2780
      %v2783 = vld [vmem:[%s11 + $0x3] sm:$0x1]
      %v2784 = vlaneseq
      %v2785 = vshrl.u32 %v2784, 7
      %v2786 = vsub.s32 0, %v2785
      %v2787 = vrot.slane %v2783, %v2786
      %v2788 = vadd.f32 %v2781, %v2787
      %v2789 = vadd.f32 %v2782, %v2787
      %v2790 = vmax.f32 %v2788, 0.0
      %v2791 = vmax.f32 %v2789, 0.0
      %2792 = vmatprep.subr.mxu0 0.0
      %2793 = vmatpush1.msra.mxu0 0.0
      %2794 = vmatprep.subr.mxu0 0.0
      %2795 = vmatpush1.msra.mxu0 0.0
      %2796 = vmatprep.subr.mxu0 0.0
      %2797 = vmatpush1.msra.mxu0 0.0
      %2798 = vmatprep.subr.mxu0 0.0
      %2799 = vmatpush1.msra.mxu0 0.0
      %2800 = vmatprep.subr.mxu0 0.0
      %2801 = vmatpush1.msra.mxu0 0.0
      %2802 = vmatprep.subr.mxu0 0.0
      %2803 = vmatpush1.msra.mxu0 0.0
      %2804 = vmatprep.subr.mxu0 0.0
      %2805 = vmatpush1.msra.mxu0 0.0
      %2806 = vmatprep.subr.mxu0 0.0
      %2807 = vmatpush1.msra.mxu0 0.0
      %2808 = vmatprep.subr.mxu0 0.0
      %2809 = vmatpush1.msra.mxu0 0.0
      %2810 = vmatprep.subr.mxu0 0.0
      %2811 = vmatpush1.msra.mxu0 0.0
      %2812 = vmatprep.subr.mxu0 0.0
      %2813 = vmatpush1.msra.mxu0 0.0
      %2814 = vmatprep.subr.mxu0 0.0
      %2815 = vmatpush1.msra.mxu0 0.0
      %2816 = vmatprep.subr.mxu0 0.0
      %2817 = vmatpush1.msra.mxu0 0.0
      %2818 = vmatprep.subr.mxu0 0.0
      %2819 = vmatpush1.msra.mxu0 0.0
      %2820 = vmatprep.subr.mxu0 0.0
      %2821 = vmatpush1.msra.mxu0 %v2791
      %2822 = vmatprep.subr.mxu0 0.0
      %2823 = vmatpush1.msra.mxu0 %v2790
      %2824 = vmatprep.subr.mxu0 0.0
      %2825 = vmatpush2.msra.mxu0 0.0
      %2826 = vmatprep.subr.mxu0 0.0
      %2827 = vmatpush2.msra.mxu0 0.0
      %2828 = vmatprep.subr.mxu0 0.0
      %2829 = vmatpush2.msra.mxu0 0.0
      %2830 = vmatprep.subr.mxu0 0.0
      %2831 = vmatpush2.msra.mxu0 0.0
      %2832 = vmatprep.subr.mxu0 0.0
      %2833 = vmatpush2.msra.mxu0 0.0
      %2834 = vmatprep.subr.mxu0 0.0
      %2835 = vmatpush2.msra.mxu0 0.0
      %2836 = vmatprep.subr.mxu0 0.0
      %2837 = vmatpush2.msra.mxu0 0.0
      %2838 = vmatprep.subr.mxu0 0.0
      %2839 = vmatpush2.msra.mxu0 0.0
      %2840 = vmatprep.subr.mxu0 0.0
      %2841 = vmatpush2.msra.mxu0 0.0
      %2842 = vmatprep.subr.mxu0 0.0
      %2843 = vmatpush2.msra.mxu0 0.0
      %2844 = vmatprep.subr.mxu0 0.0
      %2845 = vmatpush2.msra.mxu0 0.0
      %2846 = vmatprep.subr.mxu0 0.0
      %2847 = vmatpush2.msra.mxu0 0.0
      %2848 = vmatprep.subr.mxu0 0.0
      %2849 = vmatpush2.msra.mxu0 0.0
      %2850 = vmatprep.subr.mxu0 0.0
      %2851 = vmatpush2.msra.mxu0 0.0
      %2852 = vmatprep.subr.mxu0 0.0
      %2853 = vmatpush2.msra.mxu0 0.0
      %2854 = vmatprep.subr.mxu0 0.0
      %2855 = vmatpush2.msra.mxu0 0.0
      %2856 = vmatprep.mubr.f32.mxu0 0.0
      %2857 = vmatmul.mubr.f32.gmra.mxu0 %v1543
      %v2858 = vpop.f32.mrf.mxu0
      %v2859 = vadd.f32 0.0, %v2858
      %v2860 = vpop.f32.mrf.mxu0
      %2861 = vmatprep.mubr.f32.mxu0 0.0
      %2862 = vmatmul.mubr.f32.gmra.mxu0 %v1546
      %v2863 = vpop.f32.mrf.mxu0
      %v2864 = vadd.f32 0.0, %v2863
      %v2865 = vpop.f32.mrf.mxu0
      %2866 = vdwg.mxu0
      %2867 = vmatprep.subr.mxu0 0.0
      %2868 = vmatpush1.msra.mxu0 0.0
      %2869 = vmatprep.subr.mxu0 0.0
      %2870 = vmatpush1.msra.mxu0 0.0
      %2871 = vmatprep.subr.mxu0 0.0
      %2872 = vmatpush1.msra.mxu0 0.0
      %2873 = vmatprep.subr.mxu0 0.0
      %2874 = vmatpush1.msra.mxu0 0.0
      %2875 = vmatprep.subr.mxu0 0.0
      %2876 = vmatpush1.msra.mxu0 0.0
      %2877 = vmatprep.subr.mxu0 0.0
      %2878 = vmatpush1.msra.mxu0 0.0
      %2879 = vmatprep.subr.mxu0 0.0
      %2880 = vmatpush1.msra.mxu0 0.0
      %2881 = vmatprep.subr.mxu0 0.0
      %2882 = vmatpush1.msra.mxu0 0.0
      %2883 = vmatprep.subr.mxu0 0.0
      %2884 = vmatpush1.msra.mxu0 0.0
      %2885 = vmatprep.subr.mxu0 0.0
      %2886 = vmatpush1.msra.mxu0 0.0
      %2887 = vmatprep.subr.mxu0 0.0
      %2888 = vmatpush1.msra.mxu0 0.0
      %2889 = vmatprep.subr.mxu0 0.0
      %2890 = vmatpush1.msra.mxu0 0.0
      %2891 = vmatprep.subr.mxu0 0.0
      %2892 = vmatpush1.msra.mxu0 0.0
      %2893 = vmatprep.subr.mxu0 0.0
      %2894 = vmatpush1.msra.mxu0 0.0
      %2895 = vmatprep.subr.mxu0 0.0
      %2896 = vmatpush1.msra.mxu0 %v2791
      %2897 = vmatprep.subr.mxu0 0.0
      %2898 = vmatpush1.msra.mxu0 %v2790
      %2899 = vmatprep.subr.mxu0 0.0
      %2900 = vmatpush2.msra.mxu0 0.0
      %2901 = vmatprep.subr.mxu0 0.0
      %2902 = vmatpush2.msra.mxu0 0.0
      %2903 = vmatprep.subr.mxu0 0.0
      %2904 = vmatpush2.msra.mxu0 0.0
      %2905 = vmatprep.subr.mxu0 0.0
      %2906 = vmatpush2.msra.mxu0 0.0
      %2907 = vmatprep.subr.mxu0 0.0
      %2908 = vmatpush2.msra.mxu0 0.0
      %2909 = vmatprep.subr.mxu0 0.0
      %2910 = vmatpush2.msra.mxu0 0.0
      %2911 = vmatprep.subr.mxu0 0.0
      %2912 = vmatpush2.msra.mxu0 0.0
      %2913 = vmatprep.subr.mxu0 0.0
      %2914 = vmatpush2.msra.mxu0 0.0
      %2915 = vmatprep.subr.mxu0 0.0
      %2916 = vmatpush2.msra.mxu0 0.0
      %2917 = vmatprep.subr.mxu0 0.0
      %2918 = vmatpush2.msra.mxu0 0.0
      %2919 = vmatprep.subr.mxu0 0.0
      %2920 = vmatpush2.msra.mxu0 0.0
      %2921 = vmatprep.subr.mxu0 0.0
      %2922 = vmatpush2.msra.mxu0 0.0
      %2923 = vmatprep.subr.mxu0 0.0
      %2924 = vmatpush2.msra.mxu0 0.0
      %2925 = vmatprep.subr.mxu0 0.0
      %2926 = vmatpush2.msra.mxu0 0.0
      %2927 = vmatprep.subr.mxu0 0.0
      %2928 = vmatpush2.msra.mxu0 0.0
      %2929 = vmatprep.subr.mxu0 0.0
      %2930 = vmatpush2.msra.mxu0 0.0
      %2931 = vmatprep.mubr.f32.mxu0 0.0
      %2932 = vmatmul.mubr.f32.gmra.mxu0 %v1627
      %v2933 = vpop.f32.mrf.mxu0
      %v2934 = vadd.f32 0.0, %v2933
      %v2935 = vpop.f32.mrf.mxu0
      %2936 = vmatprep.mubr.f32.mxu0 0.0
      %2937 = vmatmul.mubr.f32.gmra.mxu0 %v1630
      %v2938 = vpop.f32.mrf.mxu0
      %v2939 = vadd.f32 0.0, %v2938
      %v2940 = vpop.f32.mrf.mxu0
      %2941 = vdwg.mxu0
      %2942 = vmatprep.subr.mxu0 0.0
      %2943 = vmatpush1.msra.mxu0 0.0
      %2944 = vmatprep.subr.mxu0 0.0
      %2945 = vmatpush1.msra.mxu0 0.0
      %2946 = vmatprep.subr.mxu0 0.0
      %2947 = vmatpush1.msra.mxu0 0.0
      %2948 = vmatprep.subr.mxu0 0.0
      %2949 = vmatpush1.msra.mxu0 0.0
      %2950 = vmatprep.subr.mxu0 0.0
      %2951 = vmatpush1.msra.mxu0 0.0
      %2952 = vmatprep.subr.mxu0 0.0
      %2953 = vmatpush1.msra.mxu0 0.0
      %2954 = vmatprep.subr.mxu0 0.0
      %2955 = vmatpush1.msra.mxu0 0.0
      %2956 = vmatprep.subr.mxu0 0.0
      %2957 = vmatpush1.msra.mxu0 0.0
      %2958 = vmatprep.subr.mxu0 0.0
      %2959 = vmatpush1.msra.mxu0 0.0
      %2960 = vmatprep.subr.mxu0 0.0
      %2961 = vmatpush1.msra.mxu0 0.0
      %2962 = vmatprep.subr.mxu0 0.0
      %2963 = vmatpush1.msra.mxu0 0.0
      %2964 = vmatprep.subr.mxu0 0.0
      %2965 = vmatpush1.msra.mxu0 0.0
      %2966 = vmatprep.subr.mxu0 0.0
      %2967 = vmatpush1.msra.mxu0 0.0
      %2968 = vmatprep.subr.mxu0 0.0
      %2969 = vmatpush1.msra.mxu0 0.0
      %2970 = vmatprep.subr.mxu0 0.0
      %2971 = vmatpush1.msra.mxu0 %v2791
      %2972 = vmatprep.subr.mxu0 0.0
      %2973 = vmatpush1.msra.mxu0 %v2790
      %2974 = vmatprep.subr.mxu0 0.0
      %2975 = vmatpush2.msra.mxu0 0.0
      %2976 = vmatprep.subr.mxu0 0.0
      %2977 = vmatpush2.msra.mxu0 0.0
      %2978 = vmatprep.subr.mxu0 0.0
      %2979 = vmatpush2.msra.mxu0 0.0
      %2980 = vmatprep.subr.mxu0 0.0
      %2981 = vmatpush2.msra.mxu0 0.0
      %2982 = vmatprep.subr.mxu0 0.0
      %2983 = vmatpush2.msra.mxu0 0.0
      %2984 = vmatprep.subr.mxu0 0.0
      %2985 = vmatpush2.msra.mxu0 0.0
      %2986 = vmatprep.subr.mxu0 0.0
      %2987 = vmatpush2.msra.mxu0 0.0
      %2988 = vmatprep.subr.mxu0 0.0
      %2989 = vmatpush2.msra.mxu0 0.0
      %2990 = vmatprep.subr.mxu0 0.0
      %2991 = vmatpush2.msra.mxu0 0.0
      %2992 = vmatprep.subr.mxu0 0.0
      %2993 = vmatpush2.msra.mxu0 0.0
      %2994 = vmatprep.subr.mxu0 0.0
      %2995 = vmatpush2.msra.mxu0 0.0
      %2996 = vmatprep.subr.mxu0 0.0
      %2997 = vmatpush2.msra.mxu0 0.0
      %2998 = vmatprep.subr.mxu0 0.0
      %2999 = vmatpush2.msra.mxu0 0.0
      %3000 = vmatprep.subr.mxu0 0.0
      %3001 = vmatpush2.msra.mxu0 0.0
      %3002 = vmatprep.subr.mxu0 0.0
      %3003 = vmatpush2.msra.mxu0 0.0
      %3004 = vmatprep.subr.mxu0 0.0
      %3005 = vmatpush2.msra.mxu0 0.0
      %3006 = vmatprep.mubr.f32.mxu0 0.0
      %3007 = vmatmul.mubr.f32.gmra.mxu0 %v1711
      %v3008 = vpop.f32.mrf.mxu0
      %v3009 = vadd.f32 0.0, %v3008
      %v3010 = vpop.f32.mrf.mxu0
      %3011 = vmatprep.mubr.f32.mxu0 0.0
      %3012 = vmatmul.mubr.f32.gmra.mxu0 %v1714
      %v3013 = vpop.f32.mrf.mxu0
      %v3014 = vadd.f32 0.0, %v3013
      %v3015 = vpop.f32.mrf.mxu0
      %3016 = vdwg.mxu0
      %s3017 = scalar_lea.vmem %s10, 384
      %v3018 = vld [vmem:[%s3017] sm:$0xff]
      %v3019 = vld [vmem:[%s3017 + $0x8] sm:$0xff]
      %v3020 = vld [vmem:[%s3017 + $0x10] sm:$0xff]
      %v3021 = vld [vmem:[%s3017 + $0x18] sm:$0xff]
      %v3022 = vld [vmem:[%s3017 + $0x20] sm:$0xff]
      %v3023 = vld [vmem:[%s3017 + $0x28] sm:$0xff]
      %v3024 = vld [vmem:[%s3017 + $0x30] sm:$0xff]
      %v3025 = vld [vmem:[%s3017 + $0x38] sm:$0xff]
      %v3026 = vld [vmem:[%s3017 + $0x40] sm:$0xff]
      %v3027 = vld [vmem:[%s3017 + $0x48] sm:$0xff]
      %v3028 = vld [vmem:[%s3017 + $0x50] sm:$0xff]
      %v3029 = vld [vmem:[%s3017 + $0x58] sm:$0xff]
      %v3030 = vld [vmem:[%s3017 + $0x60] sm:$0xff]
      %v3031 = vld [vmem:[%s3017 + $0x68] sm:$0xff]
      %v3032 = vld [vmem:[%s3017 + $0x70] sm:$0xff]
      %v3033 = vld [vmem:[%s3017 + $0x78] sm:$0xff]
      %v3034 = vld [vmem:[%s3017 + $0x80] sm:$0xff]
      %v3035 = vld [vmem:[%s3017 + $0x88] sm:$0xff]
      %v3036 = vld [vmem:[%s3017 + $0x90] sm:$0xff]
      %v3037 = vld [vmem:[%s3017 + $0x98] sm:$0xff]
      %v3038 = vld [vmem:[%s3017 + $0xa0] sm:$0xff]
      %v3039 = vld [vmem:[%s3017 + $0xa8] sm:$0xff]
      %v3040 = vld [vmem:[%s3017 + $0xb0] sm:$0xff]
      %v3041 = vld [vmem:[%s3017 + $0xb8] sm:$0xff]
      %v3042 = vld [vmem:[%s3017 + $0xc0] sm:$0xff]
      %v3043 = vld [vmem:[%s3017 + $0xc8] sm:$0xff]
      %v3044 = vld [vmem:[%s3017 + $0xd0] sm:$0xff]
      %v3045 = vld [vmem:[%s3017 + $0xd8] sm:$0xff]
      %v3046 = vld [vmem:[%s3017 + $0xe0] sm:$0xff]
      %v3047 = vld [vmem:[%s3017 + $0xe8] sm:$0xff]
      %v3048 = vld [vmem:[%s3017 + $0xf0] sm:$0xff]
      %v3049 = vld [vmem:[%s3017 + $0xf8] sm:$0xff]
      %v3050 = vld [vmem:[%s3017 + $0x100] sm:$0xff]
      %v3051 = vld [vmem:[%s3017 + $0x108] sm:$0xff]
      %v3052 = vld [vmem:[%s3017 + $0x110] sm:$0xff]
      %v3053 = vld [vmem:[%s3017 + $0x118] sm:$0xff]
      %v3054 = vld [vmem:[%s3017 + $0x120] sm:$0xff]
      %v3055 = vld [vmem:[%s3017 + $0x128] sm:$0xff]
      %v3056 = vld [vmem:[%s3017 + $0x130] sm:$0xff]
      %v3057 = vld [vmem:[%s3017 + $0x138] sm:$0xff]
      %v3058 = vld [vmem:[%s3017 + $0x140] sm:$0xff]
      %v3059 = vld [vmem:[%s3017 + $0x148] sm:$0xff]
      %v3060 = vld [vmem:[%s3017 + $0x150] sm:$0xff]
      %v3061 = vld [vmem:[%s3017 + $0x158] sm:$0xff]
      %v3062 = vld [vmem:[%s3017 + $0x160] sm:$0xff]
      %v3063 = vld [vmem:[%s3017 + $0x168] sm:$0xff]
      %v3064 = vld [vmem:[%s3017 + $0x170] sm:$0xff]
      %v3065 = vld [vmem:[%s3017 + $0x178] sm:$0xff]
      %3066 = vmatprep.subr.mxu0 0.0
      %3067 = vmatpush1.msra.mxu0 %v3033
      %3068 = vmatprep.subr.mxu0 0.0
      %3069 = vmatpush1.msra.mxu0 %v3032
      %3070 = vmatprep.subr.mxu0 0.0
      %3071 = vmatpush1.msra.mxu0 %v3031
      %3072 = vmatprep.subr.mxu0 0.0
      %3073 = vmatpush1.msra.mxu0 %v3030
      %3074 = vmatprep.subr.mxu0 0.0
      %3075 = vmatpush1.msra.mxu0 %v3029
      %3076 = vmatprep.subr.mxu0 0.0
      %3077 = vmatpush1.msra.mxu0 %v3028
      %3078 = vmatprep.subr.mxu0 0.0
      %3079 = vmatpush1.msra.mxu0 %v3027
      %3080 = vmatprep.subr.mxu0 0.0
      %3081 = vmatpush1.msra.mxu0 %v3026
      %3082 = vmatprep.subr.mxu0 0.0
      %3083 = vmatpush1.msra.mxu0 %v3025
      %3084 = vmatprep.subr.mxu0 0.0
      %3085 = vmatpush1.msra.mxu0 %v3024
      %3086 = vmatprep.subr.mxu0 0.0
      %3087 = vmatpush1.msra.mxu0 %v3023
      %3088 = vmatprep.subr.mxu0 0.0
      %3089 = vmatpush1.msra.mxu0 %v3022
      %3090 = vmatprep.subr.mxu0 0.0
      %3091 = vmatpush1.msra.mxu0 %v3021
      %3092 = vmatprep.subr.mxu0 0.0
      %3093 = vmatpush1.msra.mxu0 %v3020
      %3094 = vmatprep.subr.mxu0 0.0
      %3095 = vmatpush1.msra.mxu0 %v3019
      %3096 = vmatprep.subr.mxu0 0.0
      %3097 = vmatpush1.msra.mxu0 %v3018
      %3098 = vmatprep.subr.mxu0 0.0
      %3099 = vmatpush2.msra.mxu0 %v3049
      %3100 = vmatprep.subr.mxu0 0.0
      %3101 = vmatpush2.msra.mxu0 %v3048
      %3102 = vmatprep.subr.mxu0 0.0
      %3103 = vmatpush2.msra.mxu0 %v3047
      %3104 = vmatprep.subr.mxu0 0.0
      %3105 = vmatpush2.msra.mxu0 %v3046
      %3106 = vmatprep.subr.mxu0 0.0
      %3107 = vmatpush2.msra.mxu0 %v3045
      %3108 = vmatprep.subr.mxu0 0.0
      %3109 = vmatpush2.msra.mxu0 %v3044
      %3110 = vmatprep.subr.mxu0 0.0
      %3111 = vmatpush2.msra.mxu0 %v3043
      %3112 = vmatprep.subr.mxu0 0.0
      %3113 = vmatpush2.msra.mxu0 %v3042
      %3114 = vmatprep.subr.mxu0 0.0
      %3115 = vmatpush2.msra.mxu0 %v3041
      %3116 = vmatprep.subr.mxu0 0.0
      %3117 = vmatpush2.msra.mxu0 %v3040
      %3118 = vmatprep.subr.mxu0 0.0
      %3119 = vmatpush2.msra.mxu0 %v3039
      %3120 = vmatprep.subr.mxu0 0.0
      %3121 = vmatpush2.msra.mxu0 %v3038
      %3122 = vmatprep.subr.mxu0 0.0
      %3123 = vmatpush2.msra.mxu0 %v3037
      %3124 = vmatprep.subr.mxu0 0.0
      %3125 = vmatpush2.msra.mxu0 %v3036
      %3126 = vmatprep.subr.mxu0 0.0
      %3127 = vmatpush2.msra.mxu0 %v3035
      %3128 = vmatprep.subr.mxu0 0.0
      %3129 = vmatpush2.msra.mxu0 %v3034
      %3130 = vmatprep.mubr.f32.mxu0 %v2934
      %3131 = vmatmul.mubr.f32.gmra.mxu0 %v2859
      %v3132 = vpop.f32.mrf.mxu0
      %v3133 = vadd.f32 0.0, %v3132
      %v3134 = vpop.f32.mrf.mxu0
      %3135 = vmatprep.mubr.f32.mxu0 %v2939
      %3136 = vmatmul.mubr.f32.gmra.mxu0 %v2864
      %v3137 = vpop.f32.mrf.mxu0
      %v3138 = vadd.f32 0.0, %v3137
      %v3139 = vpop.f32.mrf.mxu0
      %3140 = vdwg.mxu0
      %3141 = vmatprep.subr.mxu0 0.0
      %3142 = vmatpush1.msra.mxu0 %v3065
      %3143 = vmatprep.subr.mxu0 0.0
      %3144 = vmatpush1.msra.mxu0 %v3064
      %3145 = vmatprep.subr.mxu0 0.0
      %3146 = vmatpush1.msra.mxu0 %v3063
      %3147 = vmatprep.subr.mxu0 0.0
      %3148 = vmatpush1.msra.mxu0 %v3062
      %3149 = vmatprep.subr.mxu0 0.0
      %3150 = vmatpush1.msra.mxu0 %v3061
      %3151 = vmatprep.subr.mxu0 0.0
      %3152 = vmatpush1.msra.mxu0 %v3060
      %3153 = vmatprep.subr.mxu0 0.0
      %3154 = vmatpush1.msra.mxu0 %v3059
      %3155 = vmatprep.subr.mxu0 0.0
      %3156 = vmatpush1.msra.mxu0 %v3058
      %3157 = vmatprep.subr.mxu0 0.0
      %3158 = vmatpush1.msra.mxu0 %v3057
      %3159 = vmatprep.subr.mxu0 0.0
      %3160 = vmatpush1.msra.mxu0 %v3056
      %3161 = vmatprep.subr.mxu0 0.0
      %3162 = vmatpush1.msra.mxu0 %v3055
      %3163 = vmatprep.subr.mxu0 0.0
      %3164 = vmatpush1.msra.mxu0 %v3054
      %3165 = vmatprep.subr.mxu0 0.0
      %3166 = vmatpush1.msra.mxu0 %v3053
      %3167 = vmatprep.subr.mxu0 0.0
      %3168 = vmatpush1.msra.mxu0 %v3052
      %3169 = vmatprep.subr.mxu0 0.0
      %3170 = vmatpush1.msra.mxu0 %v3051
      %3171 = vmatprep.subr.mxu0 0.0
      %3172 = vmatpush1.msra.mxu0 %v3050
      %3173 = vmatprep.subr.mxu0 0.0
      %3174 = vmatpush2.msra.mxu0 0.0
      %3175 = vmatprep.subr.mxu0 0.0
      %3176 = vmatpush2.msra.mxu0 0.0
      %3177 = vmatprep.subr.mxu0 0.0
      %3178 = vmatpush2.msra.mxu0 0.0
      %3179 = vmatprep.subr.mxu0 0.0
      %3180 = vmatpush2.msra.mxu0 0.0
      %3181 = vmatprep.subr.mxu0 0.0
      %3182 = vmatpush2.msra.mxu0 0.0
      %3183 = vmatprep.subr.mxu0 0.0
      %3184 = vmatpush2.msra.mxu0 0.0
      %3185 = vmatprep.subr.mxu0 0.0
      %3186 = vmatpush2.msra.mxu0 0.0
      %3187 = vmatprep.subr.mxu0 0.0
      %3188 = vmatpush2.msra.mxu0 0.0
      %3189 = vmatprep.subr.mxu0 0.0
      %3190 = vmatpush2.msra.mxu0 0.0
      %3191 = vmatprep.subr.mxu0 0.0
      %3192 = vmatpush2.msra.mxu0 0.0
      %3193 = vmatprep.subr.mxu0 0.0
      %3194 = vmatpush2.msra.mxu0 0.0
      %3195 = vmatprep.subr.mxu0 0.0
      %3196 = vmatpush2.msra.mxu0 0.0
      %3197 = vmatprep.subr.mxu0 0.0
      %3198 = vmatpush2.msra.mxu0 0.0
      %3199 = vmatprep.subr.mxu0 0.0
      %3200 = vmatpush2.msra.mxu0 0.0
      %3201 = vmatprep.subr.mxu0 0.0
      %3202 = vmatpush2.msra.mxu0 0.0
      %3203 = vmatprep.subr.mxu0 0.0
      %3204 = vmatpush2.msra.mxu0 0.0
      %3205 = vmatprep.mubr.f32.mxu0 0.0
      %3206 = vmatmul.mubr.f32.gmra.mxu0 %v3009
      %v3207 = vpop.f32.mrf.mxu0
      %v3208 = vadd.f32 %v3133, %v3207
      %v3209 = vpop.f32.mrf.mxu0
      %3210 = vmatprep.mubr.f32.mxu0 0.0
      %3211 = vmatmul.mubr.f32.gmra.mxu0 %v3014
      %v3212 = vpop.f32.mrf.mxu0
      %v3213 = vadd.f32 %v3138, %v3212
      %v3214 = vpop.f32.mrf.mxu0
      %3215 = vdwg.mxu0
      %v3216 = vld [vmem:[%s11 + $0x4] sm:$0x1]
      %v3217 = vlaneseq
      %v3218 = vshrl.u32 %v3217, 7
      %v3219 = vsub.s32 0, %v3218
      %v3220 = vrot.slane %v3216, %v3219
      %v3221 = vmul.f32 %v3208, %v3220
      %v3222 = vmul.f32 %v3213, %v3220
      %v3223 = vld [vmem:[%s11 + $0x5] sm:$0x1]
      %v3224 = vlaneseq
      %v3225 = vshrl.u32 %v3224, 7
      %v3226 = vsub.s32 0, %v3225
      %v3227 = vrot.slane %v3223, %v3226
      %v3228 = vadd.f32 %v3221, %v3227
      %v3229 = vadd.f32 %v3222, %v3227
      %v3230 = vadd.f32 %v3228, %v2351
      %v3231 = vadd.f32 %v3229, %v2352
      %v3232 = vmax.f32 %v3230, 0.0
      %v3233 = vmax.f32 %v3231, 0.0
      %v3234 = vadd.f32 %v3232, %v1376
      %v3235 = vadd.f32 %v3233, %v1381
      %v3236 = vld [vmem:[%s11 + $0x6] sm:$0x1]
      %v3237 = vlaneseq
      %v3238 = vshrl.u32 %v3237, 7
      %v3239 = vsub.s32 0, %v3238
      %v3240 = vrot.slane %v3236, %v3239
      %v3241 = vmul.f32 %v3234, %v3240
      %v3242 = vmul.f32 %v3235, %v3240
      %v3243 = vld [vmem:[%s11 + $0x7] sm:$0x1]
      %v3244 = vlaneseq
      %v3245 = vshrl.u32 %v3244, 7
      %v3246 = vsub.s32 0, %v3245
      %v3247 = vrot.slane %v3243, %v3246
      %v3248 = vadd.f32 %v3241, %v3247
      %v3249 = vadd.f32 %v3242, %v3247
      %v3250 = vmax.f32 %v3248, 0.0
      %v3251 = vmax.f32 %v3249, 0.0
      %3252 = vmatprep.subr.mxu0 0.0
      %3253 = vmatpush1.msra.mxu0 0.0
      %3254 = vmatprep.subr.mxu0 0.0
      %3255 = vmatpush1.msra.mxu0 0.0
      %3256 = vmatprep.subr.mxu0 0.0
      %3257 = vmatpush1.msra.mxu0 0.0
      %3258 = vmatprep.subr.mxu0 0.0
      %3259 = vmatpush1.msra.mxu0 0.0
      %3260 = vmatprep.subr.mxu0 0.0
      %3261 = vmatpush1.msra.mxu0 0.0
      %3262 = vmatprep.subr.mxu0 0.0
      %3263 = vmatpush1.msra.mxu0 0.0
      %3264 = vmatprep.subr.mxu0 0.0
      %3265 = vmatpush1.msra.mxu0 0.0
      %3266 = vmatprep.subr.mxu0 0.0
      %3267 = vmatpush1.msra.mxu0 0.0
      %3268 = vmatprep.subr.mxu0 0.0
      %3269 = vmatpush1.msra.mxu0 0.0
      %3270 = vmatprep.subr.mxu0 0.0
      %3271 = vmatpush1.msra.mxu0 0.0
      %3272 = vmatprep.subr.mxu0 0.0
      %3273 = vmatpush1.msra.mxu0 0.0
      %3274 = vmatprep.subr.mxu0 0.0
      %3275 = vmatpush1.msra.mxu0 0.0
      %3276 = vmatprep.subr.mxu0 0.0
      %3277 = vmatpush1.msra.mxu0 0.0
      %3278 = vmatprep.subr.mxu0 0.0
      %3279 = vmatpush1.msra.mxu0 0.0
      %3280 = vmatprep.subr.mxu0 0.0
      %3281 = vmatpush1.msra.mxu0 %v3251
      %3282 = vmatprep.subr.mxu0 0.0
      %3283 = vmatpush1.msra.mxu0 %v3250
      %3284 = vmatprep.subr.mxu0 0.0
      %3285 = vmatpush2.msra.mxu0 0.0
      %3286 = vmatprep.subr.mxu0 0.0
      %3287 = vmatpush2.msra.mxu0 0.0
      %3288 = vmatprep.subr.mxu0 0.0
      %3289 = vmatpush2.msra.mxu0 0.0
      %3290 = vmatprep.subr.mxu0 0.0
      %3291 = vmatpush2.msra.mxu0 0.0
      %3292 = vmatprep.subr.mxu0 0.0
      %3293 = vmatpush2.msra.mxu0 0.0
      %3294 = vmatprep.subr.mxu0 0.0
      %3295 = vmatpush2.msra.mxu0 0.0
      %3296 = vmatprep.subr.mxu0 0.0
      %3297 = vmatpush2.msra.mxu0 0.0
      %3298 = vmatprep.subr.mxu0 0.0
      %3299 = vmatpush2.msra.mxu0 0.0
      %3300 = vmatprep.subr.mxu0 0.0
      %3301 = vmatpush2.msra.mxu0 0.0
      %3302 = vmatprep.subr.mxu0 0.0
      %3303 = vmatpush2.msra.mxu0 0.0
      %3304 = vmatprep.subr.mxu0 0.0
      %3305 = vmatpush2.msra.mxu0 0.0
      %3306 = vmatprep.subr.mxu0 0.0
      %3307 = vmatpush2.msra.mxu0 0.0
      %3308 = vmatprep.subr.mxu0 0.0
      %3309 = vmatpush2.msra.mxu0 0.0
      %3310 = vmatprep.subr.mxu0 0.0
      %3311 = vmatpush2.msra.mxu0 0.0
      %3312 = vmatprep.subr.mxu0 0.0
      %3313 = vmatpush2.msra.mxu0 0.0
      %3314 = vmatprep.subr.mxu0 0.0
      %3315 = vmatpush2.msra.mxu0 0.0
      %3316 = vmatprep.mubr.f32.mxu0 0.0
      %3317 = vmatmul.mubr.f32.gmra.mxu0 %v1543
      %v3318 = vpop.f32.mrf.mxu0
      %v3319 = vadd.f32 0.0, %v3318
      %v3320 = vpop.f32.mrf.mxu0
      %3321 = vmatprep.mubr.f32.mxu0 0.0
      %3322 = vmatmul.mubr.f32.gmra.mxu0 %v1546
      %v3323 = vpop.f32.mrf.mxu0
      %v3324 = vadd.f32 0.0, %v3323
      %v3325 = vpop.f32.mrf.mxu0
      %3326 = vdwg.mxu0
      %3327 = vmatprep.subr.mxu0 0.0
      %3328 = vmatpush1.msra.mxu0 0.0
      %3329 = vmatprep.subr.mxu0 0.0
      %3330 = vmatpush1.msra.mxu0 0.0
      %3331 = vmatprep.subr.mxu0 0.0
      %3332 = vmatpush1.msra.mxu0 0.0
      %3333 = vmatprep.subr.mxu0 0.0
      %3334 = vmatpush1.msra.mxu0 0.0
      %3335 = vmatprep.subr.mxu0 0.0
      %3336 = vmatpush1.msra.mxu0 0.0
      %3337 = vmatprep.subr.mxu0 0.0
      %3338 = vmatpush1.msra.mxu0 0.0
      %3339 = vmatprep.subr.mxu0 0.0
      %3340 = vmatpush1.msra.mxu0 0.0
      %3341 = vmatprep.subr.mxu0 0.0
      %3342 = vmatpush1.msra.mxu0 0.0
      %3343 = vmatprep.subr.mxu0 0.0
      %3344 = vmatpush1.msra.mxu0 0.0
      %3345 = vmatprep.subr.mxu0 0.0
      %3346 = vmatpush1.msra.mxu0 0.0
      %3347 = vmatprep.subr.mxu0 0.0
      %3348 = vmatpush1.msra.mxu0 0.0
      %3349 = vmatprep.subr.mxu0 0.0
      %3350 = vmatpush1.msra.mxu0 0.0
      %3351 = vmatprep.subr.mxu0 0.0
      %3352 = vmatpush1.msra.mxu0 0.0
      %3353 = vmatprep.subr.mxu0 0.0
      %3354 = vmatpush1.msra.mxu0 0.0
      %3355 = vmatprep.subr.mxu0 0.0
      %3356 = vmatpush1.msra.mxu0 %v3251
      %3357 = vmatprep.subr.mxu0 0.0
      %3358 = vmatpush1.msra.mxu0 %v3250
      %3359 = vmatprep.subr.mxu0 0.0
      %3360 = vmatpush2.msra.mxu0 0.0
      %3361 = vmatprep.subr.mxu0 0.0
      %3362 = vmatpush2.msra.mxu0 0.0
      %3363 = vmatprep.subr.mxu0 0.0
      %3364 = vmatpush2.msra.mxu0 0.0
      %3365 = vmatprep.subr.mxu0 0.0
      %3366 = vmatpush2.msra.mxu0 0.0
      %3367 = vmatprep.subr.mxu0 0.0
      %3368 = vmatpush2.msra.mxu0 0.0
      %3369 = vmatprep.subr.mxu0 0.0
      %3370 = vmatpush2.msra.mxu0 0.0
      %3371 = vmatprep.subr.mxu0 0.0
      %3372 = vmatpush2.msra.mxu0 0.0
      %3373 = vmatprep.subr.mxu0 0.0
      %3374 = vmatpush2.msra.mxu0 0.0
      %3375 = vmatprep.subr.mxu0 0.0
      %3376 = vmatpush2.msra.mxu0 0.0
      %3377 = vmatprep.subr.mxu0 0.0
      %3378 = vmatpush2.msra.mxu0 0.0
      %3379 = vmatprep.subr.mxu0 0.0
      %3380 = vmatpush2.msra.mxu0 0.0
      %3381 = vmatprep.subr.mxu0 0.0
      %3382 = vmatpush2.msra.mxu0 0.0
      %3383 = vmatprep.subr.mxu0 0.0
      %3384 = vmatpush2.msra.mxu0 0.0
      %3385 = vmatprep.subr.mxu0 0.0
      %3386 = vmatpush2.msra.mxu0 0.0
      %3387 = vmatprep.subr.mxu0 0.0
      %3388 = vmatpush2.msra.mxu0 0.0
      %3389 = vmatprep.subr.mxu0 0.0
      %3390 = vmatpush2.msra.mxu0 0.0
      %3391 = vmatprep.mubr.f32.mxu0 0.0
      %3392 = vmatmul.mubr.f32.gmra.mxu0 %v1627
      %v3393 = vpop.f32.mrf.mxu0
      %v3394 = vadd.f32 0.0, %v3393
      %v3395 = vpop.f32.mrf.mxu0
      %3396 = vmatprep.mubr.f32.mxu0 0.0
      %3397 = vmatmul.mubr.f32.gmra.mxu0 %v1630
      %v3398 = vpop.f32.mrf.mxu0
      %v3399 = vadd.f32 0.0, %v3398
      %v3400 = vpop.f32.mrf.mxu0
      %3401 = vdwg.mxu0
      %3402 = vmatprep.subr.mxu0 0.0
      %3403 = vmatpush1.msra.mxu0 0.0
      %3404 = vmatprep.subr.mxu0 0.0
      %3405 = vmatpush1.msra.mxu0 0.0
      %3406 = vmatprep.subr.mxu0 0.0
      %3407 = vmatpush1.msra.mxu0 0.0
      %3408 = vmatprep.subr.mxu0 0.0
      %3409 = vmatpush1.msra.mxu0 0.0
      %3410 = vmatprep.subr.mxu0 0.0
      %3411 = vmatpush1.msra.mxu0 0.0
      %3412 = vmatprep.subr.mxu0 0.0
      %3413 = vmatpush1.msra.mxu0 0.0
      %3414 = vmatprep.subr.mxu0 0.0
      %3415 = vmatpush1.msra.mxu0 0.0
      %3416 = vmatprep.subr.mxu0 0.0
      %3417 = vmatpush1.msra.mxu0 0.0
      %3418 = vmatprep.subr.mxu0 0.0
      %3419 = vmatpush1.msra.mxu0 0.0
      %3420 = vmatprep.subr.mxu0 0.0
      %3421 = vmatpush1.msra.mxu0 0.0
      %3422 = vmatprep.subr.mxu0 0.0
      %3423 = vmatpush1.msra.mxu0 0.0
      %3424 = vmatprep.subr.mxu0 0.0
      %3425 = vmatpush1.msra.mxu0 0.0
      %3426 = vmatprep.subr.mxu0 0.0
      %3427 = vmatpush1.msra.mxu0 0.0
      %3428 = vmatprep.subr.mxu0 0.0
      %3429 = vmatpush1.msra.mxu0 0.0
      %3430 = vmatprep.subr.mxu0 0.0
      %3431 = vmatpush1.msra.mxu0 %v3251
      %3432 = vmatprep.subr.mxu0 0.0
      %3433 = vmatpush1.msra.mxu0 %v3250
      %3434 = vmatprep.subr.mxu0 0.0
      %3435 = vmatpush2.msra.mxu0 0.0
      %3436 = vmatprep.subr.mxu0 0.0
      %3437 = vmatpush2.msra.mxu0 0.0
      %3438 = vmatprep.subr.mxu0 0.0
      %3439 = vmatpush2.msra.mxu0 0.0
      %3440 = vmatprep.subr.mxu0 0.0
      %3441 = vmatpush2.msra.mxu0 0.0
      %3442 = vmatprep.subr.mxu0 0.0
      %3443 = vmatpush2.msra.mxu0 0.0
      %3444 = vmatprep.subr.mxu0 0.0
      %3445 = vmatpush2.msra.mxu0 0.0
      %3446 = vmatprep.subr.mxu0 0.0
      %3447 = vmatpush2.msra.mxu0 0.0
      %3448 = vmatprep.subr.mxu0 0.0
      %3449 = vmatpush2.msra.mxu0 0.0
      %3450 = vmatprep.subr.mxu0 0.0
      %3451 = vmatpush2.msra.mxu0 0.0
      %3452 = vmatprep.subr.mxu0 0.0
      %3453 = vmatpush2.msra.mxu0 0.0
      %3454 = vmatprep.subr.mxu0 0.0
      %3455 = vmatpush2.msra.mxu0 0.0
      %3456 = vmatprep.subr.mxu0 0.0
      %3457 = vmatpush2.msra.mxu0 0.0
      %3458 = vmatprep.subr.mxu0 0.0
      %3459 = vmatpush2.msra.mxu0 0.0
      %3460 = vmatprep.subr.mxu0 0.0
      %3461 = vmatpush2.msra.mxu0 0.0
      %3462 = vmatprep.subr.mxu0 0.0
      %3463 = vmatpush2.msra.mxu0 0.0
      %3464 = vmatprep.subr.mxu0 0.0
      %3465 = vmatpush2.msra.mxu0 0.0
      %3466 = vmatprep.mubr.f32.mxu0 0.0
      %3467 = vmatmul.mubr.f32.gmra.mxu0 %v1711
      %v3468 = vpop.f32.mrf.mxu0
      %v3469 = vadd.f32 0.0, %v3468
      %v3470 = vpop.f32.mrf.mxu0
      %3471 = vmatprep.mubr.f32.mxu0 0.0
      %3472 = vmatmul.mubr.f32.gmra.mxu0 %v1714
      %v3473 = vpop.f32.mrf.mxu0
      %v3474 = vadd.f32 0.0, %v3473
      %v3475 = vpop.f32.mrf.mxu0
      %3476 = vdwg.mxu0
      %s3477 = scalar_lea.vmem %s10, 768
      %v3478 = vld [vmem:[%s3477] sm:$0xff]
      %v3479 = vld [vmem:[%s3477 + $0x8] sm:$0xff]
      %v3480 = vld [vmem:[%s3477 + $0x10] sm:$0xff]
      %v3481 = vld [vmem:[%s3477 + $0x18] sm:$0xff]
      %v3482 = vld [vmem:[%s3477 + $0x20] sm:$0xff]
      %v3483 = vld [vmem:[%s3477 + $0x28] sm:$0xff]
      %v3484 = vld [vmem:[%s3477 + $0x30] sm:$0xff]
      %v3485 = vld [vmem:[%s3477 + $0x38] sm:$0xff]
      %v3486 = vld [vmem:[%s3477 + $0x40] sm:$0xff]
      %v3487 = vld [vmem:[%s3477 + $0x48] sm:$0xff]
      %v3488 = vld [vmem:[%s3477 + $0x50] sm:$0xff]
      %v3489 = vld [vmem:[%s3477 + $0x58] sm:$0xff]
      %v3490 = vld [vmem:[%s3477 + $0x60] sm:$0xff]
      %v3491 = vld [vmem:[%s3477 + $0x68] sm:$0xff]
      %v3492 = vld [vmem:[%s3477 + $0x70] sm:$0xff]
      %v3493 = vld [vmem:[%s3477 + $0x78] sm:$0xff]
      %v3494 = vld [vmem:[%s3477 + $0x80] sm:$0xff]
      %v3495 = vld [vmem:[%s3477 + $0x88] sm:$0xff]
      %v3496 = vld [vmem:[%s3477 + $0x90] sm:$0xff]
      %v3497 = vld [vmem:[%s3477 + $0x98] sm:$0xff]
      %v3498 = vld [vmem:[%s3477 + $0xa0] sm:$0xff]
      %v3499 = vld [vmem:[%s3477 + $0xa8] sm:$0xff]
      %v3500 = vld [vmem:[%s3477 + $0xb0] sm:$0xff]
      %v3501 = vld [vmem:[%s3477 + $0xb8] sm:$0xff]
      %v3502 = vld [vmem:[%s3477 + $0xc0] sm:$0xff]
      %v3503 = vld [vmem:[%s3477 + $0xc8] sm:$0xff]
      %v3504 = vld [vmem:[%s3477 + $0xd0] sm:$0xff]
      %v3505 = vld [vmem:[%s3477 + $0xd8] sm:$0xff]
      %v3506 = vld [vmem:[%s3477 + $0xe0] sm:$0xff]
      %v3507 = vld [vmem:[%s3477 + $0xe8] sm:$0xff]
      %v3508 = vld [vmem:[%s3477 + $0xf0] sm:$0xff]
      %v3509 = vld [vmem:[%s3477 + $0xf8] sm:$0xff]
      %v3510 = vld [vmem:[%s3477 + $0x100] sm:$0xff]
      %v3511 = vld [vmem:[%s3477 + $0x108] sm:$0xff]
      %v3512 = vld [vmem:[%s3477 + $0x110] sm:$0xff]
      %v3513 = vld [vmem:[%s3477 + $0x118] sm:$0xff]
      %v3514 = vld [vmem:[%s3477 + $0x120] sm:$0xff]
      %v3515 = vld [vmem:[%s3477 + $0x128] sm:$0xff]
      %v3516 = vld [vmem:[%s3477 + $0x130] sm:$0xff]
      %v3517 = vld [vmem:[%s3477 + $0x138] sm:$0xff]
      %v3518 = vld [vmem:[%s3477 + $0x140] sm:$0xff]
      %v3519 = vld [vmem:[%s3477 + $0x148] sm:$0xff]
      %v3520 = vld [vmem:[%s3477 + $0x150] sm:$0xff]
      %v3521 = vld [vmem:[%s3477 + $0x158] sm:$0xff]
      %v3522 = vld [vmem:[%s3477 + $0x160] sm:$0xff]
      %v3523 = vld [vmem:[%s3477 + $0x168] sm:$0xff]
      %v3524 = vld [vmem:[%s3477 + $0x170] sm:$0xff]
      %v3525 = vld [vmem:[%s3477 + $0x178] sm:$0xff]
      %3526 = vmatprep.subr.mxu0 0.0
      %3527 = vmatpush1.msra.mxu0 %v3493
      %3528 = vmatprep.subr.mxu0 0.0
      %3529 = vmatpush1.msra.mxu0 %v3492
      %3530 = vmatprep.subr.mxu0 0.0
      %3531 = vmatpush1.msra.mxu0 %v3491
      %3532 = vmatprep.subr.mxu0 0.0
      %3533 = vmatpush1.msra.mxu0 %v3490
      %3534 = vmatprep.subr.mxu0 0.0
      %3535 = vmatpush1.msra.mxu0 %v3489
      %3536 = vmatprep.subr.mxu0 0.0
      %3537 = vmatpush1.msra.mxu0 %v3488
      %3538 = vmatprep.subr.mxu0 0.0
      %3539 = vmatpush1.msra.mxu0 %v3487
      %3540 = vmatprep.subr.mxu0 0.0
      %3541 = vmatpush1.msra.mxu0 %v3486
      %3542 = vmatprep.subr.mxu0 0.0
      %3543 = vmatpush1.msra.mxu0 %v3485
      %3544 = vmatprep.subr.mxu0 0.0
      %3545 = vmatpush1.msra.mxu0 %v3484
      %3546 = vmatprep.subr.mxu0 0.0
      %3547 = vmatpush1.msra.mxu0 %v3483
      %3548 = vmatprep.subr.mxu0 0.0
      %3549 = vmatpush1.msra.mxu0 %v3482
      %3550 = vmatprep.subr.mxu0 0.0
      %3551 = vmatpush1.msra.mxu0 %v3481
      %3552 = vmatprep.subr.mxu0 0.0
      %3553 = vmatpush1.msra.mxu0 %v3480
      %3554 = vmatprep.subr.mxu0 0.0
      %3555 = vmatpush1.msra.mxu0 %v3479
      %3556 = vmatprep.subr.mxu0 0.0
      %3557 = vmatpush1.msra.mxu0 %v3478
      %3558 = vmatprep.subr.mxu0 0.0
      %3559 = vmatpush2.msra.mxu0 %v3509
      %3560 = vmatprep.subr.mxu0 0.0
      %3561 = vmatpush2.msra.mxu0 %v3508
      %3562 = vmatprep.subr.mxu0 0.0
      %3563 = vmatpush2.msra.mxu0 %v3507
      %3564 = vmatprep.subr.mxu0 0.0
      %3565 = vmatpush2.msra.mxu0 %v3506
      %3566 = vmatprep.subr.mxu0 0.0
      %3567 = vmatpush2.msra.mxu0 %v3505
      %3568 = vmatprep.subr.mxu0 0.0
      %3569 = vmatpush2.msra.mxu0 %v3504
      %3570 = vmatprep.subr.mxu0 0.0
      %3571 = vmatpush2.msra.mxu0 %v3503
      %3572 = vmatprep.subr.mxu0 0.0
      %3573 = vmatpush2.msra.mxu0 %v3502
      %3574 = vmatprep.subr.mxu0 0.0
      %3575 = vmatpush2.msra.mxu0 %v3501
      %3576 = vmatprep.subr.mxu0 0.0
      %3577 = vmatpush2.msra.mxu0 %v3500
      %3578 = vmatprep.subr.mxu0 0.0
      %3579 = vmatpush2.msra.mxu0 %v3499
      %3580 = vmatprep.subr.mxu0 0.0
      %3581 = vmatpush2.msra.mxu0 %v3498
      %3582 = vmatprep.subr.mxu0 0.0
      %3583 = vmatpush2.msra.mxu0 %v3497
      %3584 = vmatprep.subr.mxu0 0.0
      %3585 = vmatpush2.msra.mxu0 %v3496
      %3586 = vmatprep.subr.mxu0 0.0
      %3587 = vmatpush2.msra.mxu0 %v3495
      %3588 = vmatprep.subr.mxu0 0.0
      %3589 = vmatpush2.msra.mxu0 %v3494
      %3590 = vmatprep.mubr.f32.mxu0 %v3394
      %3591 = vmatmul.mubr.f32.gmra.mxu0 %v3319
      %v3592 = vpop.f32.mrf.mxu0
      %v3593 = vadd.f32 0.0, %v3592
      %v3594 = vpop.f32.mrf.mxu0
      %3595 = vmatprep.mubr.f32.mxu0 %v3399
      %3596 = vmatmul.mubr.f32.gmra.mxu0 %v3324
      %v3597 = vpop.f32.mrf.mxu0
      %v3598 = vadd.f32 0.0, %v3597
      %v3599 = vpop.f32.mrf.mxu0
      %3600 = vdwg.mxu0
      %3601 = vmatprep.subr.mxu0 0.0
      %3602 = vmatpush1.msra.mxu0 %v3525
      %3603 = vmatprep.subr.mxu0 0.0
      %3604 = vmatpush1.msra.mxu0 %v3524
      %3605 = vmatprep.subr.mxu0 0.0
      %3606 = vmatpush1.msra.mxu0 %v3523
      %3607 = vmatprep.subr.mxu0 0.0
      %3608 = vmatpush1.msra.mxu0 %v3522
      %3609 = vmatprep.subr.mxu0 0.0
      %3610 = vmatpush1.msra.mxu0 %v3521
      %3611 = vmatprep.subr.mxu0 0.0
      %3612 = vmatpush1.msra.mxu0 %v3520
      %3613 = vmatprep.subr.mxu0 0.0
      %3614 = vmatpush1.msra.mxu0 %v3519
      %3615 = vmatprep.subr.mxu0 0.0
      %3616 = vmatpush1.msra.mxu0 %v3518
      %3617 = vmatprep.subr.mxu0 0.0
      %3618 = vmatpush1.msra.mxu0 %v3517
      %3619 = vmatprep.subr.mxu0 0.0
      %3620 = vmatpush1.msra.mxu0 %v3516
      %3621 = vmatprep.subr.mxu0 0.0
      %3622 = vmatpush1.msra.mxu0 %v3515
      %3623 = vmatprep.subr.mxu0 0.0
      %3624 = vmatpush1.msra.mxu0 %v3514
      %3625 = vmatprep.subr.mxu0 0.0
      %3626 = vmatpush1.msra.mxu0 %v3513
      %3627 = vmatprep.subr.mxu0 0.0
      %3628 = vmatpush1.msra.mxu0 %v3512
      %3629 = vmatprep.subr.mxu0 0.0
      %3630 = vmatpush1.msra.mxu0 %v3511
      %3631 = vmatprep.subr.mxu0 0.0
      %3632 = vmatpush1.msra.mxu0 %v3510
      %3633 = vmatprep.subr.mxu0 0.0
      %3634 = vmatpush2.msra.mxu0 0.0
      %3635 = vmatprep.subr.mxu0 0.0
      %3636 = vmatpush2.msra.mxu0 0.0
      %3637 = vmatprep.subr.mxu0 0.0
      %3638 = vmatpush2.msra.mxu0 0.0
      %3639 = vmatprep.subr.mxu0 0.0
      %3640 = vmatpush2.msra.mxu0 0.0
      %3641 = vmatprep.subr.mxu0 0.0
      %3642 = vmatpush2.msra.mxu0 0.0
      %3643 = vmatprep.subr.mxu0 0.0
      %3644 = vmatpush2.msra.mxu0 0.0
      %3645 = vmatprep.subr.mxu0 0.0
      %3646 = vmatpush2.msra.mxu0 0.0
      %3647 = vmatprep.subr.mxu0 0.0
      %3648 = vmatpush2.msra.mxu0 0.0
      %3649 = vmatprep.subr.mxu0 0.0
      %3650 = vmatpush2.msra.mxu0 0.0
      %3651 = vmatprep.subr.mxu0 0.0
      %3652 = vmatpush2.msra.mxu0 0.0
      %3653 = vmatprep.subr.mxu0 0.0
      %3654 = vmatpush2.msra.mxu0 0.0
      %3655 = vmatprep.subr.mxu0 0.0
      %3656 = vmatpush2.msra.mxu0 0.0
      %3657 = vmatprep.subr.mxu0 0.0
      %3658 = vmatpush2.msra.mxu0 0.0
      %3659 = vmatprep.subr.mxu0 0.0
      %3660 = vmatpush2.msra.mxu0 0.0
      %3661 = vmatprep.subr.mxu0 0.0
      %3662 = vmatpush2.msra.mxu0 0.0
      %3663 = vmatprep.subr.mxu0 0.0
      %3664 = vmatpush2.msra.mxu0 0.0
      %3665 = vmatprep.mubr.f32.mxu0 0.0
      %3666 = vmatmul.mubr.f32.gmra.mxu0 %v3469
      %v3667 = vpop.f32.mrf.mxu0
      %v3668 = vadd.f32 %v3593, %v3667
      %v3669 = vpop.f32.mrf.mxu0
      %3670 = vmatprep.mubr.f32.mxu0 0.0
      %3671 = vmatmul.mubr.f32.gmra.mxu0 %v3474
      %v3672 = vpop.f32.mrf.mxu0
      %v3673 = vadd.f32 %v3598, %v3672
      %v3674 = vpop.f32.mrf.mxu0
      %3675 = vdwg.mxu0
      %v3676 = vld [vmem:[%s11 + $0x8] sm:$0x1]
      %v3677 = vlaneseq
      %v3678 = vshrl.u32 %v3677, 7
      %v3679 = vsub.s32 0, %v3678
      %v3680 = vrot.slane %v3676, %v3679
      %v3681 = vmul.f32 %v3668, %v3680
      %v3682 = vmul.f32 %v3673, %v3680
      %v3683 = vld [vmem:[%s11 + $0x9] sm:$0x1]
      %v3684 = vlaneseq
      %v3685 = vshrl.u32 %v3684, 7
      %v3686 = vsub.s32 0, %v3685
      %v3687 = vrot.slane %v3683, %v3686
      %v3688 = vadd.f32 %v3681, %v3687
      %v3689 = vadd.f32 %v3682, %v3687
      %v3690 = vmax.f32 %v3688, 0.0
      %v3691 = vmax.f32 %v3689, 0.0
      %3692 = vst [vmem:[%s430] sm:$0xff] %v3690
      %3693 = vst [vmem:[%s430 + $0x8] sm:$0xff] %v3691
      %p3694 = scmp.lt.s32.totalorder %s23, 1
      %s3695 = scalar_select %p3694, %s23, 1
      %s3696 = smul.addr %s3695, 2
      %s3697 = smul.addr %s3696, 8
      %s3698 = scalar_lea.vmem %s12, %s3697
      // Predicated region
      $region69: #{structure_enhance.1} parent=67 // pred_check
        %p3699 = pneg %p303
      $region70: #{structure_enhance.1} parent=67 // pred_check_branch
        %3701 = sbr.rel (%p3699) target = $region72
      $region71: #{structure_enhance.1} parent=67 // pred_region
        _
      $region72: #{structure_enhance.1} parent=67 // pred_fallthru
        _
    $region68: #{structure_enhance.1} parent=5 // pred_fallthru
      _
    %p3702 = scmp.le.s32.totalorder 2, %s18
    // Predicated region
    $region73: #{structure_enhance.1} parent=5 // pred_check
      %p3703 = pneg %p3702
    $region74: #{structure_enhance.1} parent=5 // pred_check_branch
      %3705 = sbr.rel (%p3703) target = $region76
    $region75: #{structure_enhance.1} parent=5 // pred_region
      %s3706 = ssub.s32 %s18, 2
      // Predicated region
      $region77: #{structure_enhance.1} parent=75 // pred_check
        %p3707 = pneg %p309
      $region78: #{structure_enhance.1} parent=75 // pred_check_branch
        %3709 = sbr.rel (%p3707) target = $region80
      $region79: #{structure_enhance.1} parent=75 // pred_region
        %p3710 = scmp.lt.s32.totalorder %s24, 1
        %s3711 = scalar_select %p3710, %s24, 1
        %s3712 = smul.addr %s3711, 2
        %s3713 = smul.addr %s3712, 8
        %s3714 = scalar_lea.vmem %s12, %s3713
      $region80: #{structure_enhance.1} parent=75 // pred_fallthru
        _
    $region76: #{structure_enhance.1} parent=5 // pred_fallthru
      _
  $region6: #{structure_enhance.1} parent=0 // loop_footer
    %s22 = sadd.s32 1, %s18
  $region7: #{structure_enhance.1} parent=0 // loop_footer_branch
    %17 = sbr.rel target = $region3
  $region8: #{structure_enhance.1} parent=0 // loop_exit
    _

</llo_original>
